<compile_context>
chip_gen: v7x
topology: tpu7x:2x2x1
jax: 0.10.0
libtpu: 0.0.40
codegen_flags: <defaults>
</compile_context>

<pallas_src>
import functools

import jax
import jax.numpy as jnp
from jax import lax
from jax.experimental import pallas as pl
from jax.experimental.pallas import tpu as pltpu


# ----------------------------------------------------------------------------
# Small helpers
# ----------------------------------------------------------------------------
def _vmem_limit_bytes():
    """Generation-aware VMEM limit: ~3/4 of physical VMEM, capped at 100 MiB."""
    try:
        cap = pltpu.get_tpu_info().vmem_capacity_bytes
    except Exception:
        cap = 128 * 1024 * 1024
    return int(min(cap * 3 // 4, 100 * 1024 * 1024))


def _largest_divisor_leq(n, cap):
    cap = max(1, min(n, cap))
    for d in range(cap, 0, -1):
        if n % d == 0:
            return d
    return 1


def _auto_rows(n_rows, bytes_per_row, vmem_limit, cap=32):
    budget = max(vmem_limit // 3, 1)
    max_rows = max(1, budget // max(bytes_per_row, 1))
    return _largest_divisor_leq(n_rows, min(cap, max_rows))


# ----------------------------------------------------------------------------
# Kernel A: ConvTranspose2d(k=2, s=2, no bias), output already interleaved.
# ----------------------------------------------------------------------------
def _upsample_kernel(x_ref, w_ref, o_ref):
    _, t1, w1, cm = x_ref.shape
    x = x_ref[0].reshape(t1 * w1, cm)
    # w_ref[di]: (Cm, 2*Cm) with columns ordered (dj, co).
    z0 = jnp.dot(x, w_ref[0], preferred_element_type=jnp.float32)
    z1 = jnp.dot(x, w_ref[1], preferred_element_type=jnp.float32)
    z0 = z0.reshape(t1, 1, w1, 2 * cm)
    z1 = z1.reshape(t1, 1, w1, 2 * cm)
    out = jnp.concatenate([z0, z1], axis=1).reshape(2 * t1, w1, 2 * cm)
    o_ref[0] = out.astype(o_ref.dtype)


def upsample_conv_transpose(x1, up_w, vmem_limit):
    """x1: (B, H1, W1, Cm) bf16 -> (B, 2*H1, 2*W1, Cm) bf16 (interleaved)."""
    b, h1, w1, cm = x1.shape
    bytes_per_row = w1 * cm * 2 * 14  # in + interleaved out + f32 temps, ~2 bufs
    t1 = _auto_rows(h1, bytes_per_row, vmem_limit)
    y5 = pl.pallas_call(
        _upsample_kernel,
        out_shape=jax.ShapeDtypeStruct((b, 2 * h1, w1, 2 * cm), jnp.bfloat16),
        grid=(b, h1 // t1),
        in_specs=[
            pl.BlockSpec((1, t1, w1, cm), lambda i, r: (i, r, 0, 0)),
            pl.BlockSpec((2, cm, 2 * cm), lambda i, r: (0, 0, 0)),
        ],
        out_specs=pl.BlockSpec((1, 2 * t1, w1, 2 * cm),
                               lambda i, r: (i, r, 0, 0)),
        compiler_params=pltpu.CompilerParams(
            dimension_semantics=("parallel", "parallel"),
            vmem_limit_bytes=vmem_limit),
    )(x1, up_w)
    # Free (adjacent-dim) reshape: (B,2H1,W1,2,Cm) -> (B,2H1,2W1,Cm).
    return y5.reshape(b, 2 * h1, 2 * w1, cm)


# ----------------------------------------------------------------------------
# Kernel B: fused, concat-free ResNeXtBlock, grid = (batch, row_tiles).
# ----------------------------------------------------------------------------
def fused_resnext_block(x2, y, p, vmem_limit, row_tile=None):
    """x2, y: (B, H, W, Cm) bf16 (skip connection and interleaved upsample)."""
    b, h, w, cm = x2.shape
    n_super, _, csg = p["w1t"].shape
    c = p["w3"].shape[-1]
    has_proj = "wst" in p

    if row_tile is None:
        bytes_per_row = w * (8 * cm + 32 * c)
        th = _auto_rows(h, bytes_per_row, vmem_limit)
    else:
        assert h % row_tile == 0
        th = row_tile
    r2 = th * w                # interior flattened rows per tile
    r2p = (th + 2) * w         # halo-inclusive flattened rows per tile

    def kernel(*refs):
        if has_proj:
            (x2m_ref, x2t_ref, x2b_ref, ym_ref, yt_ref, yb_ref,
             w1t_ref, w1b_ref, b1_ref, w2_ref, b2_ref, w3_ref,
             wst_ref, wsb_ref, bias_ref, o_ref) = refs
        else:
            (x2m_ref, x2t_ref, x2b_ref, ym_ref, yt_ref, yb_ref,
             w1t_ref, w1b_ref, b1_ref, w2_ref, b2_ref, w3_ref,
             bias_ref, o_ref) = refs

        r = pl.program_id(1)
        nr = pl.num_programs(1)

        # --- assemble halo'd (th+2 rows) activations, flattened to 2-D ---
        x2f = x2m_ref[0].reshape(r2, cm)
        yf = ym_ref[0].reshape(r2, cm)
        xin = jnp.concatenate([x2t_ref[0, 0], x2f, x2b_ref[0, 0]], axis=0)
        yin = jnp.concatenate([yt_ref[0, 0], yf, yb_ref[0, 0]], axis=0)

        # flat-index / column-index maps (>=2-D iotas; no integer mod needed)
        flat_idx = lax.broadcasted_iota(jnp.int32, (r2p, 1), 0)
        col_idx = lax.broadcasted_iota(
            jnp.int32, (th + 2, w, 1), 1).reshape(r2p, 1)
        # h1 halo rows at the image boundary must be zeros (the 3x3 zero-pads
        # h1); interior tile boundaries get real h1 from the 1-row halo blocks.
        pad_row = ((flat_idx < w) & (r == 0)) | (
            (flat_idx >= (th + 1) * w) & (r == nr - 1))

        # --- shortcut / residual path into the output accumulator ---
        if has_proj:
            acc = jnp.dot(x2f, wst_ref[...], preferred_element_type=jnp.float32)
            acc = acc + jnp.dot(yf, wsb_ref[...],
                                preferred_element_type=jnp.float32)
        else:
            # identity shortcut: no matmul against an identity matrix
            acc = jnp.concatenate([x2f, yf], axis=1).astype(jnp.float32)
        acc = acc + bias_ref[...]          # folded BN3 bias (+ shortcut BN bias)

        # --- bottleneck, one super-group (<=128 lanes) at a time ---
        for s in range(n_super):
            # conv1 (1x1) + folded BN1 + ReLU, on the halo rows too
            h1 = jnp.dot(xin, w1t_ref[s], preferred_element_type=jnp.float32)
            h1 = h1 + jnp.dot(yin, w1b_ref[s],
                              preferred_element_type=jnp.float32)
            h1 = jnp.maximum(h1 + b1_ref[s], 0.0)
            h1 = jnp.where(pad_row, 0.0, h1)

            # grouped 3x3 conv as 9 roll-shifted matmuls against the packed
            # block-diagonal weights (XLU shifts + edge masks, no unaligned
            # VMEM window slices)
            acc2 = jnp.zeros((r2p, csg), jnp.float32)
            for kh in range(3):
                for kw in range(3):
                    dh, dw = kh - 1, kw - 1
                    shift = (-(dh * w + dw)) % r2p
                    tap = h1 if shift == 0 else pltpu.roll(
                        h1, shift=shift, axis=0)
                    if dw == 1:
                        tap = jnp.where(col_idx < w - 1, tap, 0.0)
                    elif dw == -1:
                        tap = jnp.where(col_idx >= 1, tap, 0.0)
                    acc2 = acc2 + jnp.dot(tap.astype(jnp.bfloat16),
                                          w2_ref[s, kh * 3 + kw],
                                          preferred_element_type=jnp.float32)

            # folded BN2 + ReLU on the interior rows, then conv3 row-block
            h2 = jnp.maximum(acc2[w:(th + 1) * w] + b2_ref[s], 0.0)
            acc = acc + jnp.dot(h2.astype(jnp.bfloat16), w3_ref[s],
                                preferred_element_type=jnp.float32)

        # --- final ReLU, single store of the whole output tile ---
        o_ref[0] = jnp.maximum(acc, 0.0).reshape(th, w, c).astype(o_ref.dtype)

    amap = lambda i, r: (i, r, 0, 0)
    top_map = lambda i, r: (i, jnp.maximum(r * th - 1, 0), 0, 0)
    bot_map = lambda i, r: (i, jnp.minimum((r + 1) * th, h - 1), 0, 0)
    wmap2 = lambda i, r: (0, 0)
    wmap3 = lambda i, r: (0, 0, 0)
    wmap4 = lambda i, r: (0, 0, 0, 0)

    in_specs = [
        pl.BlockSpec((1, th, w, cm), amap),           # x2 (current rows)
        pl.BlockSpec((1, 1, w, cm), top_map),         # x2 top halo row
        pl.BlockSpec((1, 1, w, cm), bot_map),         # x2 bottom halo row
        pl.BlockSpec((1, th, w, cm), amap),           # y  (current rows)
        pl.BlockSpec((1, 1, w, cm), top_map),         # y  top halo row
        pl.BlockSpec((1, 1, w, cm), bot_map),         # y  bottom halo row
        pl.BlockSpec((n_super, cm, csg), wmap3),      # conv1 (x2 half)
        pl.BlockSpec((n_super, cm, csg), wmap3),      # conv1 (y half)
        pl.BlockSpec((n_super, 1, csg), wmap3),       # bn1 bias
        pl.BlockSpec((n_super, 9, csg, csg), wmap4),  # conv2 block-diagonal
        pl.BlockSpec((n_super, 1, csg), wmap3),       # bn2 bias
        pl.BlockSpec((n_super, csg, c), wmap3),       # conv3 row blocks
    ]
    operands = [x2, x2, x2, y, y, y,
                p["w1t"], p["w1b"], p["b1"], p["w2"], p["b2"], p["w3"]]
    if has_proj:
        in_specs += [pl.BlockSpec((cm, c), wmap2),    # shortcut (x2 half)
                     pl.BlockSpec((cm, c), wmap2)]    # shortcut (y half)
        operands += [p["wst"], p["wsb"]]
    in_specs.append(pl.BlockSpec((1, c), wmap2))      # bn3 (+ shortcut bn) bias
    operands.append(p["bias"])

    return pl.pallas_call(
        kernel,
        out_shape=jax.ShapeDtypeStruct((b, h, w, c), jnp.float32),
        grid=(b, h // th),
        in_specs=in_specs,
        out_specs=pl.BlockSpec((1, th, w, c), amap),
        compiler_params=pltpu.CompilerParams(
            dimension_semantics=("parallel", "parallel"),
            vmem_limit_bytes=vmem_limit),
    )(*operands)


# ----------------------------------------------------------------------------
# Parameter setup: synthetic PyTorch-layout params, BN folded, group-packed.
# ----------------------------------------------------------------------------
def _bn_fold(gamma, beta, mean, var, eps=1e-5):
    scale = gamma / jnp.sqrt(var + eps)
    bias = beta - mean * scale
    return scale, bias


def _rand_bn(key, c):
    k1, k2, k3, k4 = jax.random.split(key, 4)
    gamma = 1.0 + 0.1 * jax.random.normal(k1, (c,), jnp.float32)
    beta = 0.1 * jax.random.normal(k2, (c,), jnp.float32)
    mean = 0.1 * jax.random.normal(k3, (c,), jnp.float32)
    var = jax.random.uniform(k4, (c,), jnp.float32, minval=0.5, maxval=1.5)
    return _bn_fold(gamma, beta, mean, var)


def init_params(key, in_ch, out_ch, cardinality):
    assert in_ch % 2 == 0 and out_ch % cardinality == 0
    cm = in_ch // 2
    cg = out_ch // cardinality
    # pack consecutive groups into super-groups of up to 128 lanes
    gps = _largest_divisor_leq(cardinality, max(1, 128 // cg)) if cg <= 128 else 1
    n_super = cardinality // gps
    csg = gps * cg

    ks = jax.random.split(key, 9)
    std = 0.1
    bf16 = jnp.bfloat16

    # ConvTranspose2d(cm, cm, 2, 2): weight (in, out, kh, kw) -> (di, cm, (dj,co))
    wt = std * jax.random.normal(ks[0], (cm, cm, 2, 2), jnp.float32)
    up_w = jnp.transpose(wt, (2, 0, 3, 1)).reshape(2, cm, 2 * cm)

    # conv1: 1x1 (out_ch, in_ch) + BN1 (scale folded into columns, halves split,
    # columns packed per super-group)
    w1 = std * jax.random.normal(ks[1], (out_ch, in_ch), jnp.float32)
    s1, b1 = _rand_bn(ks[2], out_ch)
    w1f = w1.T * s1[None, :]                                  # (in_ch, out_ch)
    w1t = w1f[:cm].reshape(cm, n_super, csg).transpose(1, 0, 2)
    w1b = w1f[cm:].reshape(cm, n_super, csg).transpose(1, 0, 2)

    # conv2: grouped 3x3 (out_ch, cg, 3, 3) + BN2 -> block-diag per super-group
    wg = std * jax.random.normal(ks[3], (out_ch, cg, 3, 3), jnp.float32)
    s2, b2 = _rand_bn(ks[4], out_ch)
    w2g = (wg.reshape(cardinality, cg, cg, 3, 3)   # (g, d_out, c_in, kh, kw)
             .transpose(0, 3, 4, 2, 1)             # (g, kh, kw, c_in, d_out)
             .reshape(cardinality, 9, cg, cg))
    w2g = w2g * s2.reshape(cardinality, 1, 1, cg)  # fold BN2 scale into d_out
    w2g = w2g.reshape(n_super, gps, 9, cg, cg)
    w2 = jnp.einsum("sgkab,gh->skgahb", w2g, jnp.eye(gps, dtype=jnp.float32))
    w2 = w2.reshape(n_super, 9, csg, csg)

    # conv3: 1x1 (out_ch, out_ch) + BN3, rows packed per input super-group
    w3 = std * jax.random.normal(ks[5], (out_ch, out_ch), jnp.float32)
    s3, b3 = _rand_bn(ks[6], out_ch)
    w3f = (w3.T * s3[None, :]).reshape(n_super, csg, out_ch)

    params = dict(
        up_w=up_w.astype(bf16),
        w1t=w1t.astype(bf16), w1b=w1b.astype(bf16),
        b1=b1.reshape(n_super, 1, csg),
        w2=w2.astype(bf16), b2=b2.reshape(n_super, 1, csg),
        w3=w3f.astype(bf16),
    )

    # shortcut: 1x1 + BN if in_ch != out_ch, else identity (no matmul emitted)
    if in_ch != out_ch:
        wsc = std * jax.random.normal(ks[7], (out_ch, in_ch), jnp.float32)
        ssc, bsc = _rand_bn(ks[8], out_ch)
        wscf = wsc.T * ssc[None, :]
        params["wst"] = wscf[:cm].astype(bf16)
        params["wsb"] = wscf[cm:].astype(bf16)
        params["bias"] = (b3 + bsc).reshape(1, out_ch)
    else:
        params["bias"] = b3.reshape(1, out_ch)
    return params


# ----------------------------------------------------------------------------
# Forward pass (wrapper glue around the two Pallas kernels)
# ----------------------------------------------------------------------------
def resnext_up_forward(params, x1_nchw, x2_nchw, row_tile=None):
    # NCHW (PyTorch) -> NHWC (kernel layout), bf16 for the MXU
    x1 = jnp.transpose(x1_nchw, (0, 2, 3, 1)).astype(jnp.bfloat16)
    x2 = jnp.transpose(x2_nchw, (0, 2, 3, 1)).astype(jnp.bfloat16)
    b, h1, w1, cm = x1.shape
    _, h2, w2, _ = x2.shape
    diff_x = h2 - 2 * h1
    diff_y = w2 - 2 * w1
    assert diff_x >= 0 and diff_y >= 0

    vmem_limit = _vmem_limit_bytes()

    # ConvTranspose2d(k=2, s=2, no bias): interleaved layout comes straight out
    # of the kernel; alignment pad only when the sizes actually differ.
    y = upsample_conv_transpose(x1, params["up_w"], vmem_limit)
    if diff_x or diff_y:
        y = jnp.pad(y, ((0, 0), (diff_x, 0), (diff_y, 0), (0, 0)))

    # Fused ResNeXtBlock: the [x2, y] channel concat is never materialized.
    out = fused_resnext_block(x2, y, params, vmem_limit, row_tile=row_tile)
    return jnp.transpose(out, (0, 3, 1, 2))           # back to NCHW, f32


if __name__ == "__main__":
    B, IN_CH, OUT_CH, CARD = 2, 32, 64, 4
    H2, W2 = 16, 16            # spatial of skip connection x2
    H1, W1 = H2 // 2, W2 // 2

    key = jax.random.PRNGKey(0)
    kp, k1, k2 = jax.random.split(key, 3)

    params = init_params(kp, IN_CH, OUT_CH, CARD)
    x1 = jax.random.normal(k1, (B, IN_CH // 2, H1, W1), jnp.float32)  # NCHW
    x2 = jax.random.normal(k2, (B, IN_CH // 2, H2, W2), jnp.float32)  # NCHW

    # row_tile=8 -> 2 row tiles per batch image, exercising the halo exchange.
    fwd = jax.jit(functools.partial(resnext_up_forward, row_tile=8))
    out = jax.block_until_ready(fwd(params, x1, x2))
    assert out.shape == (B, OUT_CH, H2, W2), out.shape
    assert bool(jnp.all(jnp.isfinite(out)))
    print("KERNEL_OK")
</pallas_src>

<mosaic_0001>
module attributes {stable_mosaic.version = 11 : i64} {
  func.func @_upsample_kernel(%arg0: i32, %arg1: i32, %arg2: memref<1x8x8x16xbf16, #tpu.memory_space<vmem>>, %arg3: memref<2x16x32xbf16, #tpu.memory_space<vmem>>, %arg4: memref<1x16x8x32xbf16, #tpu.memory_space<vmem>>) attributes {dimension_semantics = [#tpu.dimension_semantics<parallel>, #tpu.dimension_semantics<parallel>], iteration_bounds = array<i64: 2, 1>, scalar_prefetch = 0 : i64, scratch_operands = 0 : i64, tpu.core_type = #tpu.core_type<tc>, window_params = [{transform_indices = @transform_0, window_bounds = array<i64: 1, 8, 8, 16>}, {pipeline_mode = #tpu.pipeline_mode<synchronous>, transform_indices = @transform_1, window_bounds = array<i64: 2, 16, 32>}, {transform_indices = @transform_2, window_bounds = array<i64: 1, 16, 8, 32>}]} {
    %c0 = arith.constant 0 : index
    %c0_0 = arith.constant 0 : index
    %c0_1 = arith.constant 0 : index
    %c0_2 = arith.constant 0 : index
    %0 = vector.load %arg2[%c0, %c0_0, %c0_1, %c0_2] : memref<1x8x8x16xbf16, #tpu.memory_space<vmem>>, vector<1x8x8x16xbf16>
    %1 = vector.shape_cast %0 : vector<1x8x8x16xbf16> to vector<8x8x16xbf16>
    %2 = vector.shape_cast %1 : vector<8x8x16xbf16> to vector<64x16xbf16>
    %c0_3 = arith.constant 0 : index
    %c0_4 = arith.constant 0 : index
    %c0_5 = arith.constant 0 : index
    %3 = vector.load %arg3[%c0_3, %c0_4, %c0_5] : memref<2x16x32xbf16, #tpu.memory_space<vmem>>, vector<1x16x32xbf16>
    %4 = vector.shape_cast %3 : vector<1x16x32xbf16> to vector<16x32xbf16>
    %cst = arith.constant dense<0.000000e+00> : vector<64x32xf32>
    %5 = tpu.matmul %2, %4, %cst {dimension_numbers = #tpu.dot_dimension_numbers<[1], [0], [0], [1], [0, 0, 1, 1], [], []>} : vector<64x16xbf16>, vector<16x32xbf16>, vector<64x32xf32> -> vector<64x32xf32>
    %c1 = arith.constant 1 : index
    %c0_6 = arith.constant 0 : index
    %c0_7 = arith.constant 0 : index
    %6 = vector.load %arg3[%c1, %c0_6, %c0_7] : memref<2x16x32xbf16, #tpu.memory_space<vmem>>, vector<1x16x32xbf16>
    %7 = vector.shape_cast %6 : vector<1x16x32xbf16> to vector<16x32xbf16>
    %cst_8 = arith.constant dense<0.000000e+00> : vector<64x32xf32>
    %8 = tpu.matmul %2, %7, %cst_8 {dimension_numbers = #tpu.dot_dimension_numbers<[1], [0], [0], [1], [0, 0, 1, 1], [], []>} : vector<64x16xbf16>, vector<16x32xbf16>, vector<64x32xf32> -> vector<64x32xf32>
    %9 = vector.shape_cast %5 : vector<64x32xf32> to vector<8x1x8x32xf32>
    %10 = vector.shape_cast %8 : vector<64x32xf32> to vector<8x1x8x32xf32>
    %11 = tpu.concatenate %9, %10 in 1 : vector<8x1x8x32xf32>, vector<8x1x8x32xf32> -> vector<8x2x8x32xf32>
    %12 = vector.shape_cast %11 : vector<8x2x8x32xf32> to vector<16x8x32xf32>
    %13 = arith.truncf %12 : vector<16x8x32xf32> to vector<16x8x32xbf16>
    %c0_9 = arith.constant 0 : index
    %c0_10 = arith.constant 0 : index
    %c0_11 = arith.constant 0 : index
    %c0_12 = arith.constant 0 : index
    %14 = vector.load %arg4[%c0_9, %c0_10, %c0_11, %c0_12] : memref<1x16x8x32xbf16, #tpu.memory_space<vmem>>, vector<1x16x8x32xbf16>
    %15 = vector.shape_cast %14 : vector<1x16x8x32xbf16> to vector<16x8x32xbf16>
    %16 = vector.shape_cast %13 : vector<16x8x32xbf16> to vector<1x16x8x32xbf16>
    tpu.vector_store %arg4[%c0_9, %c0_10, %c0_11, %c0_12], %16 {strides = array<i32>} : memref<1x16x8x32xbf16, #tpu.memory_space<vmem>>, vector<1x16x8x32xbf16>,
    return
  }
  func.func @transform_0(%arg0: i32, %arg1: i32) -> (i32, i32, i32, i32) {
    %c0_i32 = arith.constant 0 : i32
    %c0_i32_0 = arith.constant 0 : i32
    %c0_i32_1 = arith.constant 0 : i32
    return %arg0, %arg1, %c0_i32, %c0_i32_0 : i32, i32, i32, i32
  }
  func.func @transform_1(%arg0: i32, %arg1: i32) -> (i32, i32, i32) {
    %c0_i32 = arith.constant 0 : i32
    %c0_i32_0 = arith.constant 0 : i32
    %c0_i32_1 = arith.constant 0 : i32
    %c0_i32_2 = arith.constant 0 : i32
    return %c0_i32, %c0_i32_0, %c0_i32_1 : i32, i32, i32
  }
  func.func @transform_2(%arg0: i32, %arg1: i32) -> (i32, i32, i32, i32) {
    %c0_i32 = arith.constant 0 : i32
    %c0_i32_0 = arith.constant 0 : i32
    %c0_i32_1 = arith.constant 0 : i32
    return %arg0, %arg1, %c0_i32, %c0_i32_0 : i32, i32, i32, i32
  }
}

module attributes {stable_mosaic.version = 11 : i64} {
  func.func @kernel(%arg0: i32, %arg1: i32, %arg2: memref<1x8x16x16xbf16, #tpu.memory_space<vmem>>, %arg3: memref<1x1x16x16xbf16, #tpu.memory_space<vmem>>, %arg4: memref<1x1x16x16xbf16, #tpu.memory_space<vmem>>, %arg5: memref<1x8x16x16xbf16, #tpu.memory_space<vmem>>, %arg6: memref<1x1x16x16xbf16, #tpu.memory_space<vmem>>, %arg7: memref<1x1x16x16xbf16, #tpu.memory_space<vmem>>, %arg8: memref<1x16x64xbf16, #tpu.memory_space<vmem>>, %arg9: memref<1x16x64xbf16, #tpu.memory_space<vmem>>, %arg10: memref<1x1x64xf32, #tpu.memory_space<vmem>>, %arg11: memref<1x9x64x64xbf16, #tpu.memory_space<vmem>>, %arg12: memref<1x1x64xf32, #tpu.memory_space<vmem>>, %arg13: memref<1x64x64xbf16, #tpu.memory_space<vmem>>, %arg14: memref<16x64xbf16, #tpu.memory_space<vmem>>, %arg15: memref<16x64xbf16, #tpu.memory_space<vmem>>, %arg16: memref<1x64xf32, #tpu.memory_space<vmem>>, %arg17: memref<1x8x16x64xf32, #tpu.memory_space<vmem>>) attributes {dimension_semantics = [#tpu.dimension_semantics<parallel>, #tpu.dimension_semantics<parallel>], iteration_bounds = array<i64: 2, 2>, scalar_prefetch = 0 : i64, scratch_operands = 0 : i64, tpu.core_type = #tpu.core_type<tc>, window_params = [{transform_indices = @transform_0, window_bounds = array<i64: 1, 8, 16, 16>}, {transform_indices = @transform_1, window_bounds = array<i64: 1, 1, 16, 16>}, {transform_indices = @transform_2, window_bounds = array<i64: 1, 1, 16, 16>}, {transform_indices = @transform_3, window_bounds = array<i64: 1, 8, 16, 16>}, {transform_indices = @transform_4, window_bounds = array<i64: 1, 1, 16, 16>}, {transform_indices = @transform_5, window_bounds = array<i64: 1, 1, 16, 16>}, {pipeline_mode = #tpu.pipeline_mode<synchronous>, transform_indices = @transform_6, window_bounds = array<i64: 1, 16, 64>}, {pipeline_mode = #tpu.pipeline_mode<synchronous>, transform_indices = @transform_7, window_bounds = array<i64: 1, 16, 64>}, {pipeline_mode = #tpu.pipeline_mode<synchronous>, transform_indices = @transform_8, window_bounds = array<i64: 1, 1, 64>}, {pipeline_mode = #tpu.pipeline_mode<synchronous>, transform_indices = @transform_9, window_bounds = array<i64: 1, 9, 64, 64>}, {pipeline_mode = #tpu.pipeline_mode<synchronous>, transform_indices = @transform_10, window_bounds = array<i64: 1, 1, 64>}, {pipeline_mode = #tpu.pipeline_mode<synchronous>, transform_indices = @transform_11, window_bounds = array<i64: 1, 64, 64>}, {pipeline_mode = #tpu.pipeline_mode<synchronous>, transform_indices = @transform_12, window_bounds = array<i64: 16, 64>}, {pipeline_mode = #tpu.pipeline_mode<synchronous>, transform_indices = @transform_13, window_bounds = array<i64: 16, 64>}, {pipeline_mode = #tpu.pipeline_mode<synchronous>, transform_indices = @transform_14, window_bounds = array<i64: 1, 64>}, {transform_indices = @transform_15, window_bounds = array<i64: 1, 8, 16, 64>}]} {
    %c0 = arith.constant 0 : index
    %c0_0 = arith.constant 0 : index
    %c0_1 = arith.constant 0 : index
    %c0_2 = arith.constant 0 : index
    %0 = vector.load %arg2[%c0, %c0_0, %c0_1, %c0_2] : memref<1x8x16x16xbf16, #tpu.memory_space<vmem>>, vector<1x8x16x16xbf16>
    %1 = vector.shape_cast %0 : vector<1x8x16x16xbf16> to vector<8x16x16xbf16>
    %2 = vector.shape_cast %1 : vector<8x16x16xbf16> to vector<128x16xbf16>
    %c0_3 = arith.constant 0 : index
    %c0_4 = arith.constant 0 : index
    %c0_5 = arith.constant 0 : index
    %c0_6 = arith.constant 0 : index
    %3 = vector.load %arg5[%c0_3, %c0_4, %c0_5, %c0_6] : memref<1x8x16x16xbf16, #tpu.memory_space<vmem>>, vector<1x8x16x16xbf16>
    %4 = vector.shape_cast %3 : vector<1x8x16x16xbf16> to vector<8x16x16xbf16>
    %5 = vector.shape_cast %4 : vector<8x16x16xbf16> to vector<128x16xbf16>
    %c0_7 = arith.constant 0 : index
    %c0_8 = arith.constant 0 : index
    %c0_9 = arith.constant 0 : index
    %c0_10 = arith.constant 0 : index
    %6 = vector.load %arg3[%c0_7, %c0_8, %c0_9, %c0_10] : memref<1x1x16x16xbf16, #tpu.memory_space<vmem>>, vector<1x1x16x16xbf16>
    %7 = vector.shape_cast %6 : vector<1x1x16x16xbf16> to vector<16x16xbf16>
    %c0_11 = arith.constant 0 : index
    %c0_12 = arith.constant 0 : index
    %c0_13 = arith.constant 0 : index
    %c0_14 = arith.constant 0 : index
    %8 = vector.load %arg4[%c0_11, %c0_12, %c0_13, %c0_14] : memref<1x1x16x16xbf16, #tpu.memory_space<vmem>>, vector<1x1x16x16xbf16>
    %9 = vector.shape_cast %8 : vector<1x1x16x16xbf16> to vector<16x16xbf16>
    %10 = tpu.concatenate %7, %2, %9 in 0 : vector<16x16xbf16>, vector<128x16xbf16>, vector<16x16xbf16> -> vector<160x16xbf16>
    %c0_15 = arith.constant 0 : index
    %c0_16 = arith.constant 0 : index
    %c0_17 = arith.constant 0 : index
    %c0_18 = arith.constant 0 : index
    %11 = vector.load %arg6[%c0_15, %c0_16, %c0_17, %c0_18] : memref<1x1x16x16xbf16, #tpu.memory_space<vmem>>, vector<1x1x16x16xbf16>
    %12 = vector.shape_cast %11 : vector<1x1x16x16xbf16> to vector<16x16xbf16>
    %c0_19 = arith.constant 0 : index
    %c0_20 = arith.constant 0 : index
    %c0_21 = arith.constant 0 : index
    %c0_22 = arith.constant 0 : index
    %13 = vector.load %arg7[%c0_19, %c0_20, %c0_21, %c0_22] : memref<1x1x16x16xbf16, #tpu.memory_space<vmem>>, vector<1x1x16x16xbf16>
    %14 = vector.shape_cast %13 : vector<1x1x16x16xbf16> to vector<16x16xbf16>
    %15 = tpu.concatenate %12, %5, %14 in 0 : vector<16x16xbf16>, vector<128x16xbf16>, vector<16x16xbf16> -> vector<160x16xbf16>
    %16 = tpu.iota {dimensions = array<i32: 0>} : vector<160x1xi32>
    %17 = tpu.iota {dimensions = array<i32: 1>} : vector<10x16x1xi32>
    %18 = vector.shape_cast %17 : vector<10x16x1xi32> to vector<160x1xi32>
    %c16_i32 = arith.constant 16 : i32
    %19 = vector.broadcast %c16_i32 : i32 to vector<160x1xi32>
    %20 = arith.cmpi slt, %16, %19 : vector<160x1xi32>
    %c0_i32 = arith.constant 0 : i32
    %21 = arith.cmpi eq, %arg1, %c0_i32 : i32
    %22 = vector.broadcast %21 : i1 to vector<160x1xi1>
    %23 = arith.andi %20, %22 : vector<160x1xi1>
    %c144_i32 = arith.constant 144 : i32
    %24 = vector.broadcast %c144_i32 : i32 to vector<160x1xi32>
    %25 = arith.cmpi sge, %16, %24 : vector<160x1xi32>
    %c1_i32 = arith.constant 1 : i32
    %26 = arith.cmpi eq, %arg1, %c1_i32 : i32
    %27 = vector.broadcast %26 : i1 to vector<160x1xi1>
    %28 = arith.andi %25, %27 : vector<160x1xi1>
    %29 = arith.ori %23, %28 : vector<160x1xi1>
    %c0_23 = arith.constant 0 : index
    %c0_24 = arith.constant 0 : index
    %30 = vector.load %arg14[%c0_23, %c0_24] : memref<16x64xbf16, #tpu.memory_space<vmem>>, vector<16x64xbf16>
    %cst = arith.constant dense<0.000000e+00> : vector<128x64xf32>
    %31 = tpu.matmul %2, %30, %cst {dimension_numbers = #tpu.dot_dimension_numbers<[1], [0], [0], [1], [0, 0, 1, 1], [], []>} : vector<128x16xbf16>, vector<16x64xbf16>, vector<128x64xf32> -> vector<128x64xf32>
    %c0_25 = arith.constant 0 : index
    %c0_26 = arith.constant 0 : index
    %32 = vector.load %arg15[%c0_25, %c0_26] : memref<16x64xbf16, #tpu.memory_space<vmem>>, vector<16x64xbf16>
    %cst_27 = arith.constant dense<0.000000e+00> : vector<128x64xf32>
    %33 = tpu.matmul %5, %32, %cst_27 {dimension_numbers = #tpu.dot_dimension_numbers<[1], [0], [0], [1], [0, 0, 1, 1], [], []>} : vector<128x16xbf16>, vector<16x64xbf16>, vector<128x64xf32> -> vector<128x64xf32>
    %34 = arith.addf %31, %33 : vector<128x64xf32>
    %c0_28 = arith.constant 0 : index
    %c0_29 = arith.constant 0 : index
    %35 = vector.load %arg16[%c0_28, %c0_29] : memref<1x64xf32, #tpu.memory_space<vmem>>, vector<1x64xf32>
    %36 = vector.broadcast %35 : vector<1x64xf32> to vector<128x64xf32>
    %37 = arith.addf %34, %36 : vector<128x64xf32>
    %c0_30 = arith.constant 0 : index
    %c0_31 = arith.constant 0 : index
    %c0_32 = arith.constant 0 : index
    %38 = vector.load %arg8[%c0_30, %c0_31, %c0_32] : memref<1x16x64xbf16, #tpu.memory_space<vmem>>, vector<1x16x64xbf16>
    %39 = vector.shape_cast %38 : vector<1x16x64xbf16> to vector<16x64xbf16>
    %cst_33 = arith.constant dense<0.000000e+00> : vector<160x64xf32>
    %40 = tpu.matmul %10, %39, %cst_33 {dimension_numbers = #tpu.dot_dimension_numbers<[1], [0], [0], [1], [0, 0, 1, 1], [], []>} : vector<160x16xbf16>, vector<16x64xbf16>, vector<160x64xf32> -> vector<160x64xf32>
    %c0_34 = arith.constant 0 : index
    %c0_35 = arith.constant 0 : index
    %c0_36 = arith.constant 0 : index
    %41 = vector.load %arg9[%c0_34, %c0_35, %c0_36] : memref<1x16x64xbf16, #tpu.memory_space<vmem>>, vector<1x16x64xbf16>
    %42 = vector.shape_cast %41 : vector<1x16x64xbf16> to vector<16x64xbf16>
    %cst_37 = arith.constant dense<0.000000e+00> : vector<160x64xf32>
    %43 = tpu.matmul %15, %42, %cst_37 {dimension_numbers = #tpu.dot_dimension_numbers<[1], [0], [0], [1], [0, 0, 1, 1], [], []>} : vector<160x16xbf16>, vector<16x64xbf16>, vector<160x64xf32> -> vector<160x64xf32>
    %44 = arith.addf %40, %43 : vector<160x64xf32>
    %c0_38 = arith.constant 0 : index
    %c0_39 = arith.constant 0 : index
    %c0_40 = arith.constant 0 : index
    %45 = vector.load %arg10[%c0_38, %c0_39, %c0_40] : memref<1x1x64xf32, #tpu.memory_space<vmem>>, vector<1x1x64xf32>
    %46 = vector.shape_cast %45 : vector<1x1x64xf32> to vector<1x64xf32>
    %47 = vector.broadcast %46 : vector<1x64xf32> to vector<160x64xf32>
    %48 = arith.addf %44, %47 : vector<160x64xf32>
    %cst_41 = arith.constant 0.000000e+00 : f32
    %49 = vector.broadcast %cst_41 : f32 to vector<160x64xf32>
    %50 = arith.maximumf %48, %49 : vector<160x64xf32>
    %cst_42 = arith.constant 0.000000e+00 : f32
    %51 = vector.shape_cast %29 : vector<160x1xi1> to vector<160x1xi1>
    %52 = vector.broadcast %51 : vector<160x1xi1> to vector<160x64xi1>
    %53 = vector.broadcast %cst_42 : f32 to vector<160x64xf32>
    %54 = arith.select %52, %53, %50 : vector<160x64xi1>, vector<160x64xf32>
    %cst_43 = arith.constant 0.000000e+00 : f32
    %55 = vector.broadcast %cst_43 : f32 to vector<160x64xf32>
    %c17_i32 = arith.constant 17 : i32
    %56 = tpu.dynamic_rotate %54 by %c17_i32 dim 0 : vector<160x64xf32>, i32 -> vector<160x64xf32>
    %c1_i32_44 = arith.constant 1 : i32
    %57 = vector.broadcast %c1_i32_44 : i32 to vector<160x1xi32>
    %58 = arith.cmpi sge, %18, %57 : vector<160x1xi32>
    %cst_45 = arith.constant 0.000000e+00 : f32
    %59 = vector.shape_cast %58 : vector<160x1xi1> to vector<160x1xi1>
    %60 = vector.broadcast %59 : vector<160x1xi1> to vector<160x64xi1>
    %61 = vector.broadcast %cst_45 : f32 to vector<160x64xf32>
    %62 = arith.select %60, %56, %61 : vector<160x64xi1>, vector<160x64xf32>
    %63 = arith.truncf %62 : vector<160x64xf32> to vector<160x64xbf16>
    %c0_46 = arith.constant 0 : index
    %c0_47 = arith.constant 0 : index
    %c0_48 = arith.constant 0 : index
    %c0_49 = arith.constant 0 : index
    %64 = vector.load %arg11[%c0_46, %c0_47, %c0_48, %c0_49] : memref<1x9x64x64xbf16, #tpu.memory_space<vmem>>, vector<1x1x64x64xbf16>
    %65 = vector.shape_cast %64 : vector<1x1x64x64xbf16> to vector<64x64xbf16>
    %cst_50 = arith.constant dense<0.000000e+00> : vector<160x64xf32>
    %66 = tpu.matmul %63, %65, %cst_50 {dimension_numbers = #tpu.dot_dimension_numbers<[1], [0], [0], [1], [0, 0, 1, 1], [], []>} : vector<160x64xbf16>, vector<64x64xbf16>, vector<160x64xf32> -> vector<160x64xf32>
    %67 = arith.addf %55, %66 : vector<160x64xf32>
    %c16_i32_51 = arith.constant 16 : i32
    %68 = tpu.dynamic_rotate %54 by %c16_i32_51 dim 0 : vector<160x64xf32>, i32 -> vector<160x64xf32>
    %69 = arith.truncf %68 : vector<160x64xf32> to vector<160x64xbf16>
    %c0_52 = arith.constant 0 : index
    %c1 = arith.constant 1 : index
    %c0_53 = arith.constant 0 : index
    %c0_54 = arith.constant 0 : index
    %70 = vector.load %arg11[%c0_52, %c1, %c0_53, %c0_54] : memref<1x9x64x64xbf16, #tpu.memory_space<vmem>>, vector<1x1x64x64xbf16>
    %71 = vector.shape_cast %70 : vector<1x1x64x64xbf16> to vector<64x64xbf16>
    %cst_55 = arith.constant dense<0.000000e+00> : vector<160x64xf32>
    %72 = tpu.matmul %69, %71, %cst_55 {dimension_numbers = #tpu.dot_dimension_numbers<[1], [0], [0], [1], [0, 0, 1, 1], [], []>} : vector<160x64xbf16>, vector<64x64xbf16>, vector<160x64xf32> -> vector<160x64xf32>
    %73 = arith.addf %67, %72 : vector<160x64xf32>
    %c15_i32 = arith.constant 15 : i32
    %74 = tpu.dynamic_rotate %54 by %c15_i32 dim 0 : vector<160x64xf32>, i32 -> vector<160x64xf32>
    %c15_i32_56 = arith.constant 15 : i32
    %75 = vector.broadcast %c15_i32_56 : i32 to vector<160x1xi32>
    %76 = arith.cmpi slt, %18, %75 : vector<160x1xi32>
    %cst_57 = arith.constant 0.000000e+00 : f32
    %77 = vector.shape_cast %76 : vector<160x1xi1> to vector<160x1xi1>
    %78 = vector.broadcast %77 : vector<160x1xi1> to vector<160x64xi1>
    %79 = vector.broadcast %cst_57 : f32 to vector<160x64xf32>
    %80 = arith.select %78, %74, %79 : vector<160x64xi1>, vector<160x64xf32>
    %81 = arith.truncf %80 : vector<160x64xf32> to vector<160x64xbf16>
    %c0_58 = arith.constant 0 : index
    %c2 = arith.constant 2 : index
    %c0_59 = arith.constant 0 : index
    %c0_60 = arith.constant 0 : index
    %82 = vector.load %arg11[%c0_58, %c2, %c0_59, %c0_60] : memref<1x9x64x64xbf16, #tpu.memory_space<vmem>>, vector<1x1x64x64xbf16>
    %83 = vector.shape_cast %82 : vector<1x1x64x64xbf16> to vector<64x64xbf16>
    %cst_61 = arith.constant dense<0.000000e+00> : vector<160x64xf32>
    %84 = tpu.matmul %81, %83, %cst_61 {dimension_numbers = #tpu.dot_dimension_numbers<[1], [0], [0], [1], [0, 0, 1, 1], [], []>} : vector<160x64xbf16>, vector<64x64xbf16>, vector<160x64xf32> -> vector<160x64xf32>
    %85 = arith.addf %73, %84 : vector<160x64xf32>
    %c1_i32_62 = arith.constant 1 : i32
    %86 = tpu.dynamic_rotate %54 by %c1_i32_62 dim 0 : vector<160x64xf32>, i32 -> vector<160x64xf32>
    %c1_i32_63 = arith.constant 1 : i32
    %87 = vector.broadcast %c1_i32_63 : i32 to vector<160x1xi32>
    %88 = arith.cmpi sge, %18, %87 : vector<160x1xi32>
    %cst_64 = arith.constant 0.000000e+00 : f32
    %89 = vector.shape_cast %88 : vector<160x1xi1> to vector<160x1xi1>
    %90 = vector.broadcast %89 : vector<160x1xi1> to vector<160x64xi1>
    %91 = vector.broadcast %cst_64 : f32 to vector<160x64xf32>
    %92 = arith.select %90, %86, %91 : vector<160x64xi1>, vector<160x64xf32>
    %93 = arith.truncf %92 : vector<160x64xf32> to vector<160x64xbf16>
    %c0_65 = arith.constant 0 : index
    %c3 = arith.constant 3 : index
    %c0_66 = arith.constant 0 : index
    %c0_67 = arith.constant 0 : index
    %94 = vector.load %arg11[%c0_65, %c3, %c0_66, %c0_67] : memref<1x9x64x64xbf16, #tpu.memory_space<vmem>>, vector<1x1x64x64xbf16>
    %95 = vector.shape_cast %94 : vector<1x1x64x64xbf16> to vector<64x64xbf16>
    %cst_68 = arith.constant dense<0.000000e+00> : vector<160x64xf32>
    %96 = tpu.matmul %93, %95, %cst_68 {dimension_numbers = #tpu.dot_dimension_numbers<[1], [0], [0], [1], [0, 0, 1, 1], [], []>} : vector<160x64xbf16>, vector<64x64xbf16>, vector<160x64xf32> -> vector<160x64xf32>
    %97 = arith.addf %85, %96 : vector<160x64xf32>
    %98 = arith.truncf %54 : vector<160x64xf32> to vector<160x64xbf16>
    %c0_69 = arith.constant 0 : index
    %c4 = arith.constant 4 : index
    %c0_70 = arith.constant 0 : index
    %c0_71 = arith.constant 0 : index
    %99 = vector.load %arg11[%c0_69, %c4, %c0_70, %c0_71] : memref<1x9x64x64xbf16, #tpu.memory_space<vmem>>, vector<1x1x64x64xbf16>
    %100 = vector.shape_cast %99 : vector<1x1x64x64xbf16> to vector<64x64xbf16>
    %cst_72 = arith.constant dense<0.000000e+00> : vector<160x64xf32>
    %101 = tpu.matmul %98, %100, %cst_72 {dimension_numbers = #tpu.dot_dimension_numbers<[1], [0], [0], [1], [0, 0, 1, 1], [], []>} : vector<160x64xbf16>, vector<64x64xbf16>, vector<160x64xf32> -> vector<160x64xf32>
    %102 = arith.addf %97, %101 : vector<160x64xf32>
    %c159_i32 = arith.constant 159 : i32
    %103 = tpu.dynamic_rotate %54 by %c159_i32 dim 0 : vector<160x64xf32>, i32 -> vector<160x64xf32>
    %c15_i32_73 = arith.constant 15 : i32
    %104 = vector.broadcast %c15_i32_73 : i32 to vector<160x1xi32>
    %105 = arith.cmpi slt, %18, %104 : vector<160x1xi32>
    %cst_74 = arith.constant 0.000000e+00 : f32
    %106 = vector.shape_cast %105 : vector<160x1xi1> to vector<160x1xi1>
    %107 = vector.broadcast %106 : vector<160x1xi1> to vector<160x64xi1>
    %108 = vector.broadcast %cst_74 : f32 to vector<160x64xf32>
    %109 = arith.select %107, %103, %108 : vector<160x64xi1>, vector<160x64xf32>
    %110 = arith.truncf %109 : vector<160x64xf32> to vector<160x64xbf16>
    %c0_75 = arith.constant 0 : index
    %c5 = arith.constant 5 : index
    %c0_76 = arith.constant 0 : index
    %c0_77 = arith.constant 0 : index
    %111 = vector.load %arg11[%c0_75, %c5, %c0_76, %c0_77] : memref<1x9x64x64xbf16, #tpu.memory_space<vmem>>, vector<1x1x64x64xbf16>
    %112 = vector.shape_cast %111 : vector<1x1x64x64xbf16> to vector<64x64xbf16>
    %cst_78 = arith.constant dense<0.000000e+00> : vector<160x64xf32>
    %113 = tpu.matmul %110, %112, %cst_78 {dimension_numbers = #tpu.dot_dimension_numbers<[1], [0], [0], [1], [0, 0, 1, 1], [], []>} : vector<160x64xbf16>, vector<64x64xbf16>, vector<160x64xf32> -> vector<160x64xf32>
    %114 = arith.addf %102, %113 : vector<160x64xf32>
    %c145_i32 = arith.constant 145 : i32
    %115 = tpu.dynamic_rotate %54 by %c145_i32 dim 0 : vector<160x64xf32>, i32 -> vector<160x64xf32>
    %c1_i32_79 = arith.constant 1 : i32
    %116 = vector.broadcast %c1_i32_79 : i32 to vector<160x1xi32>
    %117 = arith.cmpi sge, %18, %116 : vector<160x1xi32>
    %cst_80 = arith.constant 0.000000e+00 : f32
    %118 = vector.shape_cast %117 : vector<160x1xi1> to vector<160x1xi1>
    %119 = vector.broadcast %118 : vector<160x1xi1> to vector<160x64xi1>
    %120 = vector.broadcast %cst_80 : f32 to vector<160x64xf32>
    %121 = arith.select %119, %115, %120 : vector<160x64xi1>, vector<160x64xf32>
    %122 = arith.truncf %121 : vector<160x64xf32> to vector<160x64xbf16>
    %c0_81 = arith.constant 0 : index
    %c6 = arith.constant 6 : index
    %c0_82 = arith.constant 0 : index
    %c0_83 = arith.constant 0 : index
    %123 = vector.load %arg11[%c0_81, %c6, %c0_82, %c0_83] : memref<1x9x64x64xbf16, #tpu.memory_space<vmem>>, vector<1x1x64x64xbf16>
    %124 = vector.shape_cast %123 : vector<1x1x64x64xbf16> to vector<64x64xbf16>
    %cst_84 = arith.constant dense<0.000000e+00> : vector<160x64xf32>
    %125 = tpu.matmul %122, %124, %cst_84 {dimension_numbers = #tpu.dot_dimension_numbers<[1], [0], [0], [1], [0, 0, 1, 1], [], []>} : vector<160x64xbf16>, vector<64x64xbf16>, vector<160x64xf32> -> vector<160x64xf32>
    %126 = arith.addf %114, %125 : vector<160x64xf32>
    %c144_i32_85 = arith.constant 144 : i32
    %127 = tpu.dynamic_rotate %54 by %c144_i32_85 dim 0 : vector<160x64xf32>, i32 -> vector<160x64xf32>
    %128 = arith.truncf %127 : vector<160x64xf32> to vector<160x64xbf16>
    %c0_86 = arith.constant 0 : index
    %c7 = arith.constant 7 : index
    %c0_87 = arith.constant 0 : index
    %c0_88 = arith.constant 0 : index
    %129 = vector.load %arg11[%c0_86, %c7, %c0_87, %c0_88] : memref<1x9x64x64xbf16, #tpu.memory_space<vmem>>, vector<1x1x64x64xbf16>
    %130 = vector.shape_cast %129 : vector<1x1x64x64xbf16> to vector<64x64xbf16>
    %cst_89 = arith.constant dense<0.000000e+00> : vector<160x64xf32>
    %131 = tpu.matmul %128, %130, %cst_89 {dimension_numbers = #tpu.dot_dimension_numbers<[1], [0], [0], [1], [0, 0, 1, 1], [], []>} : vector<160x64xbf16>, vector<64x64xbf16>, vector<160x64xf32> -> vector<160x64xf32>
    %132 = arith.addf %126, %131 : vector<160x64xf32>
    %c143_i32 = arith.constant 143 : i32
    %133 = tpu.dynamic_rotate %54 by %c143_i32 dim 0 : vector<160x64xf32>, i32 -> vector<160x64xf32>
    %c15_i32_90 = arith.constant 15 : i32
    %134 = vector.broadcast %c15_i32_90 : i32 to vector<160x1xi32>
    %135 = arith.cmpi slt, %18, %134 : vector<160x1xi32>
    %cst_91 = arith.constant 0.000000e+00 : f32
    %136 = vector.shape_cast %135 : vector<160x1xi1> to vector<160x1xi1>
    %137 = vector.broadcast %136 : vector<160x1xi1> to vector<160x64xi1>
    %138 = vector.broadcast %cst_91 : f32 to vector<160x64xf32>
    %139 = arith.select %137, %133, %138 : vector<160x64xi1>, vector<160x64xf32>
    %140 = arith.truncf %139 : vector<160x64xf32> to vector<160x64xbf16>
    %c0_92 = arith.constant 0 : index
    %c8 = arith.constant 8 : index
    %c0_93 = arith.constant 0 : index
    %c0_94 = arith.constant 0 : index
    %141 = vector.load %arg11[%c0_92, %c8, %c0_93, %c0_94] : memref<1x9x64x64xbf16, #tpu.memory_space<vmem>>, vector<1x1x64x64xbf16>
    %142 = vector.shape_cast %141 : vector<1x1x64x64xbf16> to vector<64x64xbf16>
    %cst_95 = arith.constant dense<0.000000e+00> : vector<160x64xf32>
    %143 = tpu.matmul %140, %142, %cst_95 {dimension_numbers = #tpu.dot_dimension_numbers<[1], [0], [0], [1], [0, 0, 1, 1], [], []>} : vector<160x64xbf16>, vector<64x64xbf16>, vector<160x64xf32> -> vector<160x64xf32>
    %144 = arith.addf %132, %143 : vector<160x64xf32>
    %145 = vector.extract_strided_slice %144 {offsets = [16, 0], sizes = [128, 64], strides = [1, 1]} : vector<160x64xf32> to vector<128x64xf32>
    %c0_96 = arith.constant 0 : index
    %c0_97 = arith.constant 0 : index
    %c0_98 = arith.constant 0 : index
    %146 = vector.load %arg12[%c0_96, %c0_97, %c0_98] : memref<1x1x64xf32, #tpu.memory_space<vmem>>, vector<1x1x64xf32>
    %147 = vector.shape_cast %146 : vector<1x1x64xf32> to vector<1x64xf32>
    %148 = vector.broadcast %147 : vector<1x64xf32> to vector<128x64xf32>
    %149 = arith.addf %145, %148 : vector<128x64xf32>
    %cst_99 = arith.constant 0.000000e+00 : f32
    %150 = vector.broadcast %cst_99 : f32 to vector<128x64xf32>
    %151 = arith.maximumf %149, %150 : vector<128x64xf32>
    %152 = arith.truncf %151 : vector<128x64xf32> to vector<128x64xbf16>
    %c0_100 = arith.constant 0 : index
    %c0_101 = arith.constant 0 : index
    %c0_102 = arith.constant 0 : index
    %153 = vector.load %arg13[%c0_100, %c0_101, %c0_102] : memref<1x64x64xbf16, #tpu.memory_space<vmem>>, vector<1x64x64xbf16>
    %154 = vector.shape_cast %153 : vector<1x64x64xbf16> to vector<64x64xbf16>
    %cst_103 = arith.constant dense<0.000000e+00> : vector<128x64xf32>
    %155 = tpu.matmul %152, %154, %cst_103 {dimension_numbers = #tpu.dot_dimension_numbers<[1], [0], [0], [1], [0, 0, 1, 1], [], []>} : vector<128x64xbf16>, vector<64x64xbf16>, vector<128x64xf32> -> vector<128x64xf32>
    %156 = arith.addf %37, %155 : vector<128x64xf32>
    %cst_104 = arith.constant 0.000000e+00 : f32
    %157 = vector.broadcast %cst_104 : f32 to vector<128x64xf32>
    %158 = arith.maximumf %156, %157 : vector<128x64xf32>
    %159 = vector.shape_cast %158 : vector<128x64xf32> to vector<8x16x64xf32>
    %c0_105 = arith.constant 0 : index
    %c0_106 = arith.constant 0 : index
    %c0_107 = arith.constant 0 : index
    %c0_108 = arith.constant 0 : index
    %160 = vector.load %arg17[%c0_105, %c0_106, %c0_107, %c0_108] : memref<1x8x16x64xf32, #tpu.memory_space<vmem>>, vector<1x8x16x64xf32>
    %161 = vector.shape_cast %160 : vector<1x8x16x64xf32> to vector<8x16x64xf32>
    %162 = vector.shape_cast %159 : vector<8x16x64xf32> to vector<1x8x16x64xf32>
    tpu.vector_store %arg17[%c0_105, %c0_106, %c0_107, %c0_108], %162 {strides = array<i32>} : memref<1x8x16x64xf32, #tpu.memory_space<vmem>>, vector<1x8x16x64xf32>,
    return
  }
  func.func @transform_0(%arg0: i32, %arg1: i32) -> (i32, i32, i32, i32) {
    %c0_i32 = arith.constant 0 : i32
    %c0_i32_0 = arith.constant 0 : i32
    %c0_i32_1 = arith.constant 0 : i32
    return %arg0, %arg1, %c0_i32, %c0_i32_0 : i32, i32, i32, i32
  }
  func.func @transform_1(%arg0: i32, %arg1: i32) -> (i32, i32, i32, i32) {
    %c8_i32 = arith.constant 8 : i32
    %0 = arith.muli %arg1, %c8_i32 : i32
    %c1_i32 = arith.constant 1 : i32
    %1 = arith.subi %0, %c1_i32 : i32
    %c0_i32 = arith.constant 0 : i32
    %2 = arith.maxsi %1, %c0_i32 : i32
    %c0_i32_0 = arith.constant 0 : i32
    %c0_i32_1 = arith.constant 0 : i32
    %c0_i32_2 = arith.constant 0 : i32
    return %arg0, %2, %c0_i32_0, %c0_i32_1 : i32, i32, i32, i32
  }
  func.func @transform_2(%arg0: i32, %arg1: i32) -> (i32, i32, i32, i32) {
    %c1_i32 = arith.constant 1 : i32
    %0 = arith.addi %arg1, %c1_i32 : i32
    %c8_i32 = arith.constant 8 : i32
    %1 = arith.muli %0, %c8_i32 : i32
    %c15_i32 = arith.constant 15 : i32
    %2 = arith.minsi %1, %c15_i32 : i32
    %c0_i32 = arith.constant 0 : i32
    %c0_i32_0 = arith.constant 0 : i32
    %c0_i32_1 = arith.constant 0 : i32
    return %arg0, %2, %c0_i32, %c0_i32_0 : i32, i32, i32, i32
  }
  func.func @transform_3(%arg0: i32, %arg1: i32) -> (i32, i32, i32, i32) {
    %c0_i32 = arith.constant 0 : i32
    %c0_i32_0 = arith.constant 0 : i32
    %c0_i32_1 = arith.constant 0 : i32
    return %arg0, %arg1, %c0_i32, %c0_i32_0 : i32, i32, i32, i32
  }
  func.func @transform_4(%arg0: i32, %arg1: i32) -> (i32, i32, i32, i32) {
    %c8_i32 = arith.constant 8 : i32
    %0 = arith.muli %arg1, %c8_i32 : i32
    %c1_i32 = arith.constant 1 : i32
    %1 = arith.subi %0, %c1_i32 : i32
    %c0_i32 = arith.constant 0 : i32
    %2 = arith.maxsi %1, %c0_i32 : i32
    %c0_i32_0 = arith.constant 0 : i32
    %c0_i32_1 = arith.constant 0 : i32
    %c0_i32_2 = arith.constant 0 : i32
    return %arg0, %2, %c0_i32_0, %c0_i32_1 : i32, i32, i32, i32
  }
  func.func @transform_5(%arg0: i32, %arg1: i32) -> (i32, i32, i32, i32) {
    %c1_i32 = arith.constant 1 : i32
    %0 = arith.addi %arg1, %c1_i32 : i32
    %c8_i32 = arith.constant 8 : i32
    %1 = arith.muli %0, %c8_i32 : i32
    %c15_i32 = arith.constant 15 : i32
    %2 = arith.minsi %1, %c15_i32 : i32
    %c0_i32 = arith.constant 0 : i32
    %c0_i32_0 = arith.constant 0 : i32
    %c0_i32_1 = arith.constant 0 : i32
    return %arg0, %2, %c0_i32, %c0_i32_0 : i32, i32, i32, i32
  }
  func.func @transform_6(%arg0: i32, %arg1: i32) -> (i32, i32, i32) {
    %c0_i32 = arith.constant 0 : i32
    %c0_i32_0 = arith.constant 0 : i32
    %c0_i32_1 = arith.constant 0 : i32
    %c0_i32_2 = arith.constant 0 : i32
    return %c0_i32, %c0_i32_0, %c0_i32_1 : i32, i32, i32
  }
  func.func @transform_7(%arg0: i32, %arg1: i32) -> (i32, i32, i32) {
    %c0_i32 = arith.constant 0 : i32
    %c0_i32_0 = arith.constant 0 : i32
    %c0_i32_1 = arith.constant 0 : i32
    %c0_i32_2 = arith.constant 0 : i32
    return %c0_i32, %c0_i32_0, %c0_i32_1 : i32, i32, i32
  }
  func.func @transform_8(%arg0: i32, %arg1: i32) -> (i32, i32, i32) {
    %c0_i32 = arith.constant 0 : i32
    %c0_i32_0 = arith.constant 0 : i32
    %c0_i32_1 = arith.constant 0 : i32
    %c0_i32_2 = arith.constant 0 : i32
    return %c0_i32, %c0_i32_0, %c0_i32_1 : i32, i32, i32
  }
  func.func @transform_9(%arg0: i32, %arg1: i32) -> (i32, i32, i32, i32) {
    %c0_i32 = arith.constant 0 : i32
    %c0_i32_0 = arith.constant 0 : i32
    %c0_i32_1 = arith.constant 0 : i32
    %c0_i32_2 = arith.constant 0 : i32
    %c0_i32_3 = arith.constant 0 : i32
    return %c0_i32, %c0_i32_0, %c0_i32_1, %c0_i32_2 : i32, i32, i32, i32
  }
  func.func @transform_10(%arg0: i32, %arg1: i32) -> (i32, i32, i32) {
    %c0_i32 = arith.constant 0 : i32
    %c0_i32_0 = arith.constant 0 : i32
    %c0_i32_1 = arith.constant 0 : i32
    %c0_i32_2 = arith.constant 0 : i32
    return %c0_i32, %c0_i32_0, %c0_i32_1 : i32, i32, i32
  }
  func.func @transform_11(%arg0: i32, %arg1: i32) -> (i32, i32, i32) {
    %c0_i32 = arith.constant 0 : i32
    %c0_i32_0 = arith.constant 0 : i32
    %c0_i32_1 = arith.constant 0 : i32
    %c0_i32_2 = arith.constant 0 : i32
    return %c0_i32, %c0_i32_0, %c0_i32_1 : i32, i32, i32
  }
  func.func @transform_12(%arg0: i32, %arg1: i32) -> (i32, i32) {
    %c0_i32 = arith.constant 0 : i32
    %c0_i32_0 = arith.constant 0 : i32
    %c0_i32_1 = arith.constant 0 : i32
    return %c0_i32, %c0_i32_0 : i32, i32
  }
  func.func @transform_13(%arg0: i32, %arg1: i32) -> (i32, i32) {
    %c0_i32 = arith.constant 0 : i32
    %c0_i32_0 = arith.constant 0 : i32
    %c0_i32_1 = arith.constant 0 : i32
    return %c0_i32, %c0_i32_0 : i32, i32
  }
  func.func @transform_14(%arg0: i32, %arg1: i32) -> (i32, i32) {
    %c0_i32 = arith.constant 0 : i32
    %c0_i32_0 = arith.constant 0 : i32
    %c0_i32_1 = arith.constant 0 : i32
    return %c0_i32, %c0_i32_0 : i32, i32
  }
  func.func @transform_15(%arg0: i32, %arg1: i32) -> (i32, i32, i32, i32) {
    %c0_i32 = arith.constant 0 : i32
    %c0_i32_0 = arith.constant 0 : i32
    %c0_i32_1 = arith.constant 0 : i32
    return %arg0, %arg1, %c0_i32, %c0_i32_0 : i32, i32, i32, i32
  }
}

</mosaic_0001>

<llo_original>
// kernel: resnext_up_forward.2
$region0: #{resnext_up_forward.2}
  #allocation0 [shape = 'u32[]', space=smem, size = 0x4, offset = 0x4, fixed_abs, tag = 'smem constant byte address 0x4 - core index']
  #allocation1 [shape = 'u32[144,128]{1,0:T(1,128)}', space=vmem, size = 0x12000, scoped, tag = 'internal scratch']
  %s0 = inlined_call_operand.hbm [shape: bf16[2,8,8,16], index: 0, kind: input, shape index: {}]
  %s1 = inlined_call_operand.hbm [shape: bf16[2,16,32], index: 1, kind: input, shape index: {}]
  %s2 = inlined_call_operand.hbm [shape: bf16[2,16,8,32], index: 2, kind: output, shape index: {}]
  %s3 = sld [smem:[#allocation0]]
  $region49: #{resnext_up_forward.2} parent=0
    _
  %s5 = ssub.s32 1, %s3
  %s6 = scalar_select 0, %s5, %s3
  $region1: #{resnext_up_forward.2} parent=0
    #allocation2 [shape = 'u8[32768]{0}', space=vmem, size = 0x8000, scoped, tag = 'input window, operand 0']
    #allocation3 [shape = 's32[2]{0}', space=sflag, size = 0x8, scoped, tag = 'scoped memory for resnext_up_forward.2']
    #allocation4 [shape = 's32[2]{0}', space=sflag, size = 0x8, scoped, tag = 'scoped memory for resnext_up_forward.2']
    #allocation5 [shape = 'u8[8192]{0}', space=vmem, size = 0x2000, scoped, tag = 'input window, operand 1, single buffered']
    #allocation6 [shape = 's32[1]{0}', space=sflag, size = 0x4, scoped, tag = 'scoped memory for resnext_up_forward.2']
    #allocation7 [shape = 'u8[65536]{0}', space=vmem, size = 0x10000, scoped, tag = 'output window, operand 0']
    %7 = vsyncpa [#allocation3], 0
    %s8 = scalar_lea.sflag [#allocation3], 1
    %9 = vsyncpa %s8, 0
    %10 = vsyncpa [#allocation6], 0
    %11 = vsyncpa [#allocation4], 0
    %s12 = scalar_lea.sflag [#allocation4], 1
    %13 = vsyncpa %s12, 0
    loop: start=0, step=1, limit=4
    $region2: #{resnext_up_forward.2} parent=1 // loop_pre_header
      _
    $region3: #{resnext_up_forward.2} parent=1 // loop_header
      %s15 = sphi 0, %s19
      %p16 = scmp.ge.s32.totalorder %s15, 4
      %s22 = sphi 0, %s34
      %s23 = sphi 0, %s30
      %s24 = sphi 0, %s22
      %s25 = sphi 0, %s23
      %s26 = sphi 0, %s24
      %s27 = sphi 0, %s25
      %s39 = sphi 0, %s41
      %s42 = sphi 0, %s39
      %s43 = sphi 0, %s42
      %s59 = sphi 0, %s43
      %s63 = sphi 0, %s63
      %s65 = sphi 0, %s63
      %s66 = sphi 0, %s65
      %s80 = sphi 0, %s66
      %s88 = sphi 0, %s90
      %s91 = sphi 0, %s88
      %s92 = sphi 0, %s91
      %s108 = sphi 0, %s92
    $region4: #{resnext_up_forward.2} parent=1 // loop_header_branch
      %18 = sbr.rel (%p16) target = $region8
    $region5: #{resnext_up_forward.2} parent=1 // loop_body
      %s20 = ssub.s32 %s15, 1
      %s21 = ssub.s32 %s15, 2
      %s28 = sadd.s32 1, %s23
      %p29 = scmp.ge.s32.totalorder %s28, 1
      %s30 = scalar_select %p29, 0, %s28
      %s31 = sadd.s32 1, %s22
      %s32 = scalar_select %p29, %s31, %s22
      %p33 = scmp.ge.s32.totalorder %s32, 2
      %s34 = scalar_select %p33, 0, %s32
      %s35 = ssub.s32 %s22, %s34
      %s36 = ssub.s32 %s23, %s30
      %s37 = sor.u32 %s35, %s36
      %p38 = scmp.eq.s32.totalorder %s37, 0
      %s40 = sadd.s32 %s39, 1
      %s41 = scalar_select %p38, %s39, %s40
      %p44 = pneg %p38
      %p45 = scmp.eq.s32.totalorder %s15, 1
      %p46 = por %p44, %p45
      %p47 = scmp.ne.s32.totalorder %s39, %s42
      %p48 = scmp.eq.s32.totalorder %s15, 0
      %p49 = por %p47, %p48
      %p50 = scmp.ne.s32.totalorder %s39, %s42
      %p51 = scmp.eq.s32.totalorder %s20, 1
      %p52 = por %p50, %p51
      %p53 = scmp.ne.s32.totalorder %s42, %s43
      %p54 = scmp.eq.s32.totalorder %s20, 0
      %p55 = por %p53, %p54
      %p56 = scmp.ne.s32.totalorder %s42, %s43
      %p57 = scmp.eq.s32.totalorder %s21, 1
      %p58 = por %p56, %p57
      %p60 = scmp.ne.s32.totalorder %s43, %s59
      %p61 = scmp.eq.s32.totalorder %s21, 0
      %p62 = por %p60, %p61
      %s64 = sadd.s32 %s63, 1
      %p67 = scmp.eq.s32.totalorder %s15, 1
      %p68 = scmp.ne.s32.totalorder %s63, %s65
      %p69 = scmp.eq.s32.totalorder %s15, 0
      %p70 = por %p68, %p69
      %p71 = scmp.ne.s32.totalorder %s63, %s65
      %p72 = scmp.eq.s32.totalorder %s20, 1
      %p73 = por %p71, %p72
      %p74 = scmp.ne.s32.totalorder %s65, %s66
      %p75 = scmp.eq.s32.totalorder %s20, 0
      %p76 = por %p74, %p75
      %p77 = scmp.ne.s32.totalorder %s65, %s66
      %p78 = scmp.eq.s32.totalorder %s21, 1
      %p79 = por %p77, %p78
      %p81 = scmp.ne.s32.totalorder %s66, %s80
      %p82 = scmp.eq.s32.totalorder %s21, 0
      %p83 = por %p81, %p82
      %s84 = ssub.s32 %s22, %s34
      %s85 = ssub.s32 %s23, %s30
      %s86 = sor.u32 %s84, %s85
      %p87 = scmp.eq.s32.totalorder %s86, 0
      %s89 = sadd.s32 %s88, 1
      %s90 = scalar_select %p87, %s88, %s89
      %p93 = pneg %p87
      %p94 = scmp.eq.s32.totalorder %s15, 1
      %p95 = por %p93, %p94
      %p96 = scmp.ne.s32.totalorder %s88, %s91
      %p97 = scmp.eq.s32.totalorder %s15, 0
      %p98 = por %p96, %p97
      %p99 = scmp.ne.s32.totalorder %s88, %s91
      %p100 = scmp.eq.s32.totalorder %s20, 1
      %p101 = por %p99, %p100
      %p102 = scmp.ne.s32.totalorder %s91, %s92
      %p103 = scmp.eq.s32.totalorder %s20, 0
      %p104 = por %p102, %p103
      %p105 = scmp.ne.s32.totalorder %s91, %s92
      %p106 = scmp.eq.s32.totalorder %s21, 1
      %p107 = por %p105, %p106
      %p109 = scmp.ne.s32.totalorder %s92, %s108
      %p110 = scmp.eq.s32.totalorder %s21, 0
      %p111 = por %p109, %p110
      %p112 = scmp.le.s32.totalorder 1, %s15
      %p113 = scmp.lt.s32.totalorder %s15, 3
      %p114 = pnand %p112, %p113
      %p115 = pneg %p114
      // Predicated region
      $region9: #{resnext_up_forward.2} parent=5 // pred_check
        _
      $region10: #{resnext_up_forward.2} parent=5 // pred_check_branch
        %117 = sbr.rel (%p114) target = $region12
      $region11: #{resnext_up_forward.2} parent=5 // pred_region
        %s118 = ssub.s32 %s15, 1
        // Predicated region
        $region13: #{resnext_up_forward.2} parent=11 // pred_check
          %p119 = pneg %p76
        $region14: #{resnext_up_forward.2} parent=11 // pred_check_branch
          %121 = sbr.rel (%p119) target = $region16
        $region15: #{resnext_up_forward.2} parent=11 // pred_region
          %s123 = ssub.s32 256, 256
          %124 = vsyncadd [#allocation6], %s123
          %s125 = sshll.u32 [#allocation5], 4
          %s126 = int_to_ptr.vmem [resolvable:$true] %s125
          %131 = dma.hbm_to_vmem [thread:$0]  %s1, 256, %s126, [#allocation6], 64, 64, 4
        $region16: #{resnext_up_forward.2} parent=11 // pred_fallthru
          _
      $region12: #{resnext_up_forward.2} parent=5 // pred_fallthru
        _
      %p132 = scmp.lt.s32.totalorder %s15, 2
      // Predicated region
      $region17: #{resnext_up_forward.2} parent=5 // pred_check
        %p133 = pneg %p132
      $region18: #{resnext_up_forward.2} parent=5 // pred_check_branch
        %135 = sbr.rel (%p133) target = $region20
      $region19: #{resnext_up_forward.2} parent=5 // pred_region
        // Predicated region
        $region21: #{resnext_up_forward.2} parent=19 // pred_check
          %p136 = pneg %p49
        $region22: #{resnext_up_forward.2} parent=19 // pred_check_branch
          %138 = sbr.rel (%p136) target = $region24
        $region23: #{resnext_up_forward.2} parent=19 // pred_region
          %s139 = sand.u32 %s39, 1
          %s140 = scalar_lea.sflag [#allocation3], %s139
          %s141 = sand.u32 %s39, 1
          %s142 = smul.addr %s141, 32
          %s143 = scalar_lea.vmem [#allocation2], %s142
          %s144 = smul.u32 8, %s23
          %s146 = ssub.s32 512, 512
          %147 = vsyncadd %s140, %s146
          %s148 = smul.addr %s22, 8
          %s149 = sadd.s32 %s144, %s148
          %s150 = smul.addr %s149, 64
          %s151 = scalar_lea.hbm %s0, %s150
          %s152 = sshll.u32 %s143, 4
          %s153 = int_to_ptr.vmem [resolvable:$true] %s152
          %158 = dma.hbm_to_vmem [thread:$0]  %s151, 512, %s153, %s140, 64, 64, 4
        $region24: #{resnext_up_forward.2} parent=19 // pred_fallthru
          _
      $region20: #{resnext_up_forward.2} parent=5 // pred_fallthru
        _
      %p159 = scmp.le.s32.totalorder 1, %s15
      %p160 = scmp.lt.s32.totalorder %s15, 3
      %p161 = pnand %p159, %p160
      %p162 = pneg %p161
      // Predicated region
      $region25: #{resnext_up_forward.2} parent=5 // pred_check
        _
      $region26: #{resnext_up_forward.2} parent=5 // pred_check_branch
        %164 = sbr.rel (%p161) target = $region28
      $region27: #{resnext_up_forward.2} parent=5 // pred_region
        %s165 = ssub.s32 %s15, 1
        %s166 = sand.u32 %s42, 1
        %s167 = scalar_lea.sflag [#allocation3], %s166
        %s168 = sand.u32 %s42, 1
        %s169 = smul.addr %s168, 32
        %s170 = scalar_lea.vmem [#allocation2], %s169
        // Predicated region
        $region29: #{resnext_up_forward.2} parent=27 // pred_check
          %p171 = pneg %p55
        $region30: #{resnext_up_forward.2} parent=27 // pred_check_branch
          %173 = sbr.rel (%p171) target = $region32
        $region31: #{resnext_up_forward.2} parent=27 // pred_region
          %174 = dma.done %s167, 512
        $region32: #{resnext_up_forward.2} parent=27 // pred_fallthru
          _
        // Predicated region
        $region33: #{resnext_up_forward.2} parent=27 // pred_check
          %p175 = pneg %p76
        $region34: #{resnext_up_forward.2} parent=27 // pred_check_branch
          %177 = sbr.rel (%p175) target = $region36
        $region35: #{resnext_up_forward.2} parent=27 // pred_region
          %178 = dma.done [#allocation6], 256
        $region36: #{resnext_up_forward.2} parent=27 // pred_fallthru
          _
        %s179 = sand.u32 %s42, 1
        %s180 = scalar_lea.sflag [#allocation3], %s179
        %s181 = sand.u32 %s42, 1
        %s182 = smul.addr %s181, 32
        %s183 = scalar_lea.vmem [#allocation2], %s182
        %p184 = pneg %p55
        %p185 = pneg %p52
        %p186 = pneg %p76
        %p187 = pneg %p73
        %p188 = pneg %p104
        %p189 = pneg %p101
        %s190 = sand.u32 %s91, 1
        %s191 = scalar_lea.sflag [#allocation4], %s190
        %s192 = sand.u32 %s91, 1
        %s193 = smul.addr %s192, 64
        %s194 = scalar_lea.vmem [#allocation7], %s193
        %s195 = smul.u32 8, %s25
        %s196 = smul.u32 16, %s25
        %v198 = vld [vmem:[%s170] sm:$0xf]
        %v199 = vld [vmem:[%s170 + $0x4] sm:$0xf]
        %v200 = vld [vmem:[%s170 + $0x8] sm:$0xf]
        %v201 = vld [vmem:[%s170 + $0xc] sm:$0xf]
        %v202 = vld [vmem:[%s170 + $0x10] sm:$0xf]
        %v203 = vld [vmem:[%s170 + $0x14] sm:$0xf]
        %v204 = vld [vmem:[%s170 + $0x18] sm:$0xf]
        %v205 = vld [vmem:[%s170 + $0x1c] sm:$0xf]
        %v206 = vld [vmem:[#allocation5] sm:$0xf]
        %v207 = vld [vmem:[#allocation5 + $0x4] sm:$0xf]
        %v216 = vunpack.c.l.b16 %v198
        %v217 = vunpack.c.l.b16 %v199
        %v218 = vunpack.c.l.b16 %v200
        %v219 = vunpack.c.l.b16 %v201
        %v220 = vunpack.c.l.b16 %v202
        %v221 = vunpack.c.l.b16 %v203
        %v222 = vunpack.c.l.b16 %v204
        %v223 = vunpack.c.l.b16 %v205
        %v224 = vpack.c.b16 %v217, %v216
        %v225 = vpack.c.b16 %v219, %v218
        %v226 = vpack.c.b16 %v221, %v220
        %v227 = vpack.c.b16 %v223, %v222
        %v230 = vunpack.c.l.b16 %v206
        %v231 = vunpack.c.l.b16 %v207
        %v232 = vpack.c.b16 %v231, %v230
        %vm234 = vcmask 130048
        %v236 = vsel %vm234, %v224, 0
        %v239 = vsel %vm234, %v225, 0
        %v242 = vsel %vm234, %v226, 0
        %v245 = vsel %vm234, %v227, 0
        %247 = vmatprep.subr.bf16.mxu0 0
        %248 = vmatpush1.bf16.msra.mxu0 %v232
        %249 = vmatprep.subr.bf16.mxu0 0
        %250 = vmatpush1.bf16.msra.mxu0 0
        %251 = vmatprep.subr.bf16.mxu0 0
        %252 = vmatpush1.bf16.msra.mxu0 0
        %253 = vmatprep.subr.bf16.mxu0 0
        %254 = vmatpush1.bf16.msra.mxu0 0
        %255 = vmatprep.subr.bf16.mxu0 0
        %256 = vmatpush1.bf16.msra.mxu0 0
        %257 = vmatprep.subr.bf16.mxu0 0
        %258 = vmatpush1.bf16.msra.mxu0 0
        %259 = vmatprep.subr.bf16.mxu0 0
        %260 = vmatpush1.bf16.msra.mxu0 0
        %261 = vmatprep.subr.bf16.mxu0 0
        %262 = vmatpush1.bf16.msra.mxu0 0
        %263 = vmatprep.subr.bf16.mxu0 0
        %264 = vmatpush1.bf16.msra.mxu0 0
        %265 = vmatprep.subr.bf16.mxu0 0
        %266 = vmatpush1.bf16.msra.mxu0 0
        %267 = vmatprep.subr.bf16.mxu0 0
        %268 = vmatpush1.bf16.msra.mxu0 0
        %269 = vmatprep.subr.bf16.mxu0 0
        %270 = vmatpush1.bf16.msra.mxu0 0
        %271 = vmatprep.subr.bf16.mxu0 0
        %272 = vmatpush1.bf16.msra.mxu0 0
        %273 = vmatprep.subr.bf16.mxu0 0
        %274 = vmatpush1.bf16.msra.mxu0 0
        %275 = vmatprep.subr.bf16.mxu0 0
        %276 = vmatpush1.bf16.msra.mxu0 0
        %277 = vmatprep.subr.bf16.mxu0 0
        %278 = vmatpush1.bf16.msra.mxu0 0
        %279 = vmatprep.mubr.bf16.mxu0 0
        %280 = vmatmul.mubr.bf16.gmra.mrb[0].mxu0 %v236
        %v281 = vpop.f32.mrb[0].mxu0
        %v282 = vadd.f32 0.0, %v281
        %v283 = vpop.f32.mrb[0].mxu0
        %v284 = vpop.f32.mrb[0].mxu0
        %v285 = vadd.f32 0.0, %v284
        %v286 = vpop.f32.mrb[0].mxu0
        %287 = vmatprep.mubr.bf16.mxu0 0
        %288 = vmatmul.mubr.bf16.gmra.mrb[0].mxu0 %v239
        %v289 = vpop.f32.mrb[0].mxu0
        %v290 = vadd.f32 0.0, %v289
        %v291 = vpop.f32.mrb[0].mxu0
        %v292 = vpop.f32.mrb[0].mxu0
        %v293 = vadd.f32 0.0, %v292
        %v294 = vpop.f32.mrb[0].mxu0
        %295 = vmatprep.mubr.bf16.mxu0 0
        %296 = vmatmul.mubr.bf16.gmra.mrb[0].mxu0 %v242
        %v297 = vpop.f32.mrb[0].mxu0
        %v298 = vadd.f32 0.0, %v297
        %v299 = vpop.f32.mrb[0].mxu0
        %v300 = vpop.f32.mrb[0].mxu0
        %v301 = vadd.f32 0.0, %v300
        %v302 = vpop.f32.mrb[0].mxu0
        %303 = vmatprep.mubr.bf16.mxu0 0
        %304 = vmatmul.mubr.bf16.gmra.mrb[0].mxu0 %v245
        %v305 = vpop.f32.mrb[0].mxu0
        %v306 = vadd.f32 0.0, %v305
        %v307 = vpop.f32.mrb[0].mxu0
        %v308 = vpop.f32.mrb[0].mxu0
        %v309 = vadd.f32 0.0, %v308
        %v310 = vpop.f32.mrb[0].mxu0
        %311 = vdwg.mxu0
        %s312 = scalar_lea.vmem [#allocation5], 8
        %v313 = vld [vmem:[%s312] sm:$0xf]
        %v314 = vld [vmem:[%s312 + $0x4] sm:$0xf]
        %v317 = vunpack.c.l.b16 %v313
        %v318 = vunpack.c.l.b16 %v314
        %v319 = vpack.c.b16 %v318, %v317
        %321 = vmatprep.subr.bf16.mxu0 0
        %322 = vmatpush1.bf16.msra.mxu0 %v319
        %323 = vmatprep.subr.bf16.mxu0 0
        %324 = vmatpush1.bf16.msra.mxu0 0
        %325 = vmatprep.subr.bf16.mxu0 0
        %326 = vmatpush1.bf16.msra.mxu0 0
        %327 = vmatprep.subr.bf16.mxu0 0
        %328 = vmatpush1.bf16.msra.mxu0 0
        %329 = vmatprep.subr.bf16.mxu0 0
        %330 = vmatpush1.bf16.msra.mxu0 0
        %331 = vmatprep.subr.bf16.mxu0 0
        %332 = vmatpush1.bf16.msra.mxu0 0
        %333 = vmatprep.subr.bf16.mxu0 0
        %334 = vmatpush1.bf16.msra.mxu0 0
        %335 = vmatprep.subr.bf16.mxu0 0
        %336 = vmatpush1.bf16.msra.mxu0 0
        %337 = vmatprep.subr.bf16.mxu0 0
        %338 = vmatpush1.bf16.msra.mxu0 0
        %339 = vmatprep.subr.bf16.mxu0 0
        %340 = vmatpush1.bf16.msra.mxu0 0
        %341 = vmatprep.subr.bf16.mxu0 0
        %342 = vmatpush1.bf16.msra.mxu0 0
        %343 = vmatprep.subr.bf16.mxu0 0
        %344 = vmatpush1.bf16.msra.mxu0 0
        %345 = vmatprep.subr.bf16.mxu0 0
        %346 = vmatpush1.bf16.msra.mxu0 0
        %347 = vmatprep.subr.bf16.mxu0 0
        %348 = vmatpush1.bf16.msra.mxu0 0
        %349 = vmatprep.subr.bf16.mxu0 0
        %350 = vmatpush1.bf16.msra.mxu0 0
        %351 = vmatprep.subr.bf16.mxu0 0
        %352 = vmatpush1.bf16.msra.mxu0 0
        %353 = vmatprep.mubr.bf16.mxu0 0
        %354 = vmatmul.mubr.bf16.gmra.mrb[0].mxu0 %v236
        %v355 = vpop.f32.mrb[0].mxu0
        %v356 = vadd.f32 0.0, %v355
        %v357 = vpop.f32.mrb[0].mxu0
        %v358 = vpop.f32.mrb[0].mxu0
        %v359 = vadd.f32 0.0, %v358
        %v360 = vpop.f32.mrb[0].mxu0
        %361 = vmatprep.mubr.bf16.mxu0 0
        %362 = vmatmul.mubr.bf16.gmra.mrb[0].mxu0 %v239
        %v363 = vpop.f32.mrb[0].mxu0
        %v364 = vadd.f32 0.0, %v363
        %v365 = vpop.f32.mrb[0].mxu0
        %v366 = vpop.f32.mrb[0].mxu0
        %v367 = vadd.f32 0.0, %v366
        %v368 = vpop.f32.mrb[0].mxu0
        %369 = vmatprep.mubr.bf16.mxu0 0
        %370 = vmatmul.mubr.bf16.gmra.mrb[0].mxu0 %v242
        %v371 = vpop.f32.mrb[0].mxu0
        %v372 = vadd.f32 0.0, %v371
        %v373 = vpop.f32.mrb[0].mxu0
        %v374 = vpop.f32.mrb[0].mxu0
        %v375 = vadd.f32 0.0, %v374
        %v376 = vpop.f32.mrb[0].mxu0
        %377 = vmatprep.mubr.bf16.mxu0 0
        %378 = vmatmul.mubr.bf16.gmra.mrb[0].mxu0 %v245
        %v379 = vpop.f32.mrb[0].mxu0
        %v380 = vadd.f32 0.0, %v379
        %v381 = vpop.f32.mrb[0].mxu0
        %v382 = vpop.f32.mrb[0].mxu0
        %v383 = vadd.f32 0.0, %v382
        %v384 = vpop.f32.mrb[0].mxu0
        %385 = vdwg.mxu0
        %v386 = vpack.c.bf16 %v282, %v282
        %v387 = vpack.c.bf16 %v356, %v356
        %v388 = vpack.c.bf16 %v285, %v285
        %v389 = vpack.c.bf16 %v359, %v359
        %v390 = vpack.c.bf16 %v290, %v290
        %v391 = vpack.c.bf16 %v364, %v364
        %v392 = vpack.c.bf16 %v293, %v293
        %v393 = vpack.c.bf16 %v367, %v367
        %v394 = vpack.c.bf16 %v298, %v298
        %v395 = vpack.c.bf16 %v372, %v372
        %v396 = vpack.c.bf16 %v301, %v301
        %v397 = vpack.c.bf16 %v375, %v375
        %v398 = vpack.c.bf16 %v306, %v306
        %v399 = vpack.c.bf16 %v380, %v380
        %v400 = vpack.c.bf16 %v309, %v309
        %v401 = vpack.c.bf16 %v383, %v383
        %vm402 = vcmask 257024
        %403 = vst.msk [vmem:[%s194] sm:$0xf] %vm402, %v386
        %404 = vst.msk [vmem:[%s194 + $0x4] sm:$0xf] %vm402, %v387
        %405 = vst.msk [vmem:[%s194 + $0x8] sm:$0xf] %vm402, %v388
        %406 = vst.msk [vmem:[%s194 + $0xc] sm:$0xf] %vm402, %v389
        %407 = vst.msk [vmem:[%s194 + $0x10] sm:$0xf] %vm402, %v390
        %408 = vst.msk [vmem:[%s194 + $0x14] sm:$0xf] %vm402, %v391
        %409 = vst.msk [vmem:[%s194 + $0x18] sm:$0xf] %vm402, %v392
        %410 = vst.msk [vmem:[%s194 + $0x1c] sm:$0xf] %vm402, %v393
        %411 = vst.msk [vmem:[%s194 + $0x20] sm:$0xf] %vm402, %v394
        %412 = vst.msk [vmem:[%s194 + $0x24] sm:$0xf] %vm402, %v395
        %413 = vst.msk [vmem:[%s194 + $0x28] sm:$0xf] %vm402, %v396
        %414 = vst.msk [vmem:[%s194 + $0x2c] sm:$0xf] %vm402, %v397
        %415 = vst.msk [vmem:[%s194 + $0x30] sm:$0xf] %vm402, %v398
        %416 = vst.msk [vmem:[%s194 + $0x34] sm:$0xf] %vm402, %v399
        %417 = vst.msk [vmem:[%s194 + $0x38] sm:$0xf] %vm402, %v400
        %418 = vst.msk [vmem:[%s194 + $0x3c] sm:$0xf] %vm402, %v401
        %s419 = sand.u32 %s91, 1
        %s420 = scalar_lea.sflag [#allocation4], %s419
        %s421 = sand.u32 %s91, 1
        %s422 = smul.addr %s421, 64
        %s423 = scalar_lea.vmem [#allocation7], %s422
        // Predicated region
        $region37: #{resnext_up_forward.2} parent=27 // pred_check
          %p424 = pneg %p101
        $region38: #{resnext_up_forward.2} parent=27 // pred_check_branch
          %426 = sbr.rel (%p424) target = $region40
        $region39: #{resnext_up_forward.2} parent=27 // pred_region
          %s427 = smul.u32 16, %s25
          %s429 = ssub.s32 1024, 1024
          %430 = vsyncadd %s420, %s429
          %s431 = smul.addr %s24, 16
          %s432 = sadd.s32 %s427, %s431
          %s433 = smul.addr %s432, 64
          %s434 = scalar_lea.hbm %s2, %s433
          %s435 = sshll.u32 %s423, 4
          %s436 = int_to_ptr.vmem [resolvable:$true] %s435
          %441 = dma.vmem_to_hbm [thread:$0]  %s436, 1024, %s434, %s420, 64, 64, 4
        $region40: #{resnext_up_forward.2} parent=27 // pred_fallthru
          _
      $region28: #{resnext_up_forward.2} parent=5 // pred_fallthru
        _
      %p442 = scmp.le.s32.totalorder 2, %s15
      // Predicated region
      $region41: #{resnext_up_forward.2} parent=5 // pred_check
        %p443 = pneg %p442
      $region42: #{resnext_up_forward.2} parent=5 // pred_check_branch
        %445 = sbr.rel (%p443) target = $region44
      $region43: #{resnext_up_forward.2} parent=5 // pred_region
        %s446 = ssub.s32 %s15, 2
        // Predicated region
        $region45: #{resnext_up_forward.2} parent=43 // pred_check
          %p447 = pneg %p107
        $region46: #{resnext_up_forward.2} parent=43 // pred_check_branch
          %449 = sbr.rel (%p447) target = $region48
        $region47: #{resnext_up_forward.2} parent=43 // pred_region
          %s450 = sand.u32 %s92, 1
          %s451 = scalar_lea.sflag [#allocation4], %s450
          %s452 = sand.u32 %s92, 1
          %s453 = smul.addr %s452, 64
          %s454 = scalar_lea.vmem [#allocation7], %s453
          %455 = dma.done %s451, 1024
        $region48: #{resnext_up_forward.2} parent=43 // pred_fallthru
          _
      $region44: #{resnext_up_forward.2} parent=5 // pred_fallthru
        _
    $region6: #{resnext_up_forward.2} parent=1 // loop_footer
      %s19 = sadd.s32 1, %s15
    $region7: #{resnext_up_forward.2} parent=1 // loop_footer_branch
      %14 = sbr.rel target = $region3
    $region8: #{resnext_up_forward.2} parent=1 // loop_exit
      _
    %456 = vsyncpa [#allocation3], 1
    %s457 = scalar_lea.sflag [#allocation3], 1
    %458 = vsyncpa %s457, 1
    %459 = vsyncpa [#allocation6], 1
    %460 = vsyncpa [#allocation4], 1
    %s461 = scalar_lea.sflag [#allocation4], 1
    %462 = vsyncpa %s461, 1

// kernel: resnext_up_forward.3
$region0: #{resnext_up_forward.3}
  #allocation0 [shape = 'u32[]', space=smem, size = 0x4, offset = 0x4, fixed_abs, tag = 'smem constant byte address 0x4 - core index']
  #allocation1 [shape = 'u32[144,128]{1,0:T(1,128)}', space=vmem, size = 0x12000, scoped, tag = 'internal scratch']
  %s0 = inlined_call_operand.hbm [shape: bf16[2,16,16,16], index: 0, kind: input, shape index: {}, may-alias: {0,1,2}]
  %s1 = inlined_call_operand.hbm [shape: bf16[2,16,16,16], index: 1, kind: input, shape index: {}, may-alias: {0,1,2}]
  %s2 = inlined_call_operand.hbm [shape: bf16[2,16,16,16], index: 2, kind: input, shape index: {}, may-alias: {0,1,2}]
  %s3 = inlined_call_operand.hbm [shape: bf16[2,16,16,16], index: 3, kind: input, shape index: {}, may-alias: {3,4,5}]
  %s4 = inlined_call_operand.hbm [shape: bf16[2,16,16,16], index: 4, kind: input, shape index: {}, may-alias: {3,4,5}]
  %s5 = inlined_call_operand.hbm [shape: bf16[2,16,16,16], index: 5, kind: input, shape index: {}, may-alias: {3,4,5}]
  %s6 = inlined_call_operand.hbm [shape: bf16[1,16,64], index: 6, kind: input, shape index: {}]
  %s7 = inlined_call_operand.hbm [shape: bf16[1,16,64], index: 7, kind: input, shape index: {}]
  %s8 = inlined_call_operand.hbm [shape: f32[1,1,64], index: 8, kind: input, shape index: {}]
  %s9 = inlined_call_operand.hbm [shape: bf16[1,9,64,64], index: 9, kind: input, shape index: {}]
  %s10 = inlined_call_operand.hbm [shape: f32[1,1,64], index: 10, kind: input, shape index: {}]
  %s11 = inlined_call_operand.hbm [shape: bf16[1,64,64], index: 11, kind: input, shape index: {}]
  %s12 = inlined_call_operand.hbm [shape: bf16[16,64], index: 12, kind: input, shape index: {}]
  %s13 = inlined_call_operand.hbm [shape: bf16[16,64], index: 13, kind: input, shape index: {}]
  %s14 = inlined_call_operand.hbm [shape: f32[1,64], index: 14, kind: input, shape index: {}]
  %s15 = inlined_call_operand.hbm [shape: f32[2,16,16,64], index: 15, kind: output, shape index: {}]
  %s16 = sld [smem:[#allocation0]]
  $region153: #{resnext_up_forward.3} parent=0
    _
  %s18 = ssub.s32 1, %s16
  %s19 = scalar_select 0, %s18, %s16
  $region1: #{resnext_up_forward.3} parent=0
    #allocation2 [shape = 'u8[65536]{0}', space=vmem, size = 0x10000, scoped, tag = 'input window, operand 0']
    #allocation3 [shape = 's32[2]{0}', space=sflag, size = 0x8, scoped, tag = 'scoped memory for resnext_up_forward.3']
    #allocation4 [shape = 's32[2]{0}', space=sflag, size = 0x8, scoped, tag = 'scoped memory for resnext_up_forward.3']
    #allocation5 [shape = 'u8[8192]{0}', space=vmem, size = 0x2000, scoped, tag = 'input window, operand 1']
    #allocation6 [shape = 's32[2]{0}', space=sflag, size = 0x8, scoped, tag = 'scoped memory for resnext_up_forward.3']
    #allocation7 [shape = 'u8[8192]{0}', space=vmem, size = 0x2000, scoped, tag = 'input window, operand 2']
    #allocation8 [shape = 'u8[65536]{0}', space=vmem, size = 0x10000, scoped, tag = 'input window, operand 3']
    #allocation9 [shape = 's32[2]{0}', space=sflag, size = 0x8, scoped, tag = 'scoped memory for resnext_up_forward.3']
    #allocation10 [shape = 'u8[8192]{0}', space=vmem, size = 0x2000, scoped, tag = 'input window, operand 4']
    #allocation11 [shape = 'u8[8192]{0}', space=vmem, size = 0x2000, scoped, tag = 'input window, operand 5']
    #allocation12 [shape = 's32[2]{0}', space=sflag, size = 0x8, scoped, tag = 'scoped memory for resnext_up_forward.3']
    #allocation13 [shape = 'u8[4096]{0}', space=vmem, size = 0x1000, scoped, tag = 'input window, operand 6, single buffered']
    #allocation14 [shape = 'u8[4096]{0}', space=vmem, size = 0x1000, scoped, tag = 'input window, operand 7, single buffered']
    #allocation15 [shape = 's32[1]{0}', space=sflag, size = 0x4, scoped, tag = 'scoped memory for resnext_up_forward.3']
    #allocation16 [shape = 'u8[512]{0}', space=vmem, size = 0x400, scoped, tag = 'input window, operand 8, single buffered']
    #allocation17 [shape = 'u8[147456]{0}', space=vmem, size = 0x24000, scoped, tag = 'input window, operand 9, single buffered']
    #allocation18 [shape = 's32[1]{0}', space=sflag, size = 0x4, scoped, tag = 'scoped memory for resnext_up_forward.3']
    #allocation19 [shape = 'u8[512]{0}', space=vmem, size = 0x400, scoped, tag = 'input window, operand 10, single buffered']
    #allocation20 [shape = 'u8[16384]{0}', space=vmem, size = 0x4000, scoped, tag = 'input window, operand 11, single buffered']
    #allocation21 [shape = 's32[1]{0}', space=sflag, size = 0x4, scoped, tag = 'scoped memory for resnext_up_forward.3']
    #allocation22 [shape = 'u8[4096]{0}', space=vmem, size = 0x1000, scoped, tag = 'input window, operand 12, single buffered']
    #allocation23 [shape = 'u8[4096]{0}', space=vmem, size = 0x1000, scoped, tag = 'input window, operand 13, single buffered']
    #allocation24 [shape = 's32[1]{0}', space=sflag, size = 0x4, scoped, tag = 'scoped memory for resnext_up_forward.3']
    #allocation25 [shape = 'u8[512]{0}', space=vmem, size = 0x400, scoped, tag = 'input window, operand 14, single buffered']
    #allocation26 [shape = 'u8[131072]{0}', space=vmem, size = 0x20000, scoped, tag = 'output window, operand 0']
    %20 = vsyncpa [#allocation3], 0
    %s21 = scalar_lea.sflag [#allocation3], 1
    %22 = vsyncpa %s21, 0
    %23 = vsyncpa [#allocation6], 0
    %s24 = scalar_lea.sflag [#allocation6], 1
    %25 = vsyncpa %s24, 0
    %26 = vsyncpa [#allocation9], 0
    %s27 = scalar_lea.sflag [#allocation9], 1
    %28 = vsyncpa %s27, 0
    %29 = vsyncpa [#allocation12], 0
    %s30 = scalar_lea.sflag [#allocation12], 1
    %31 = vsyncpa %s30, 0
    %32 = vsyncpa [#allocation15], 0
    %33 = vsyncpa [#allocation18], 0
    %34 = vsyncpa [#allocation21], 0
    %35 = vsyncpa [#allocation24], 0
    %36 = vsyncpa [#allocation4], 0
    %s37 = scalar_lea.sflag [#allocation4], 1
    %38 = vsyncpa %s37, 0
    loop: start=0, step=1, limit=6
    $region2: #{resnext_up_forward.3} parent=1 // loop_pre_header
      _
    $region3: #{resnext_up_forward.3} parent=1 // loop_header
      %s40 = sphi 0, %s44
      %p41 = scmp.ge.s32.totalorder %s40, 6
      %s47 = sphi 0, %s59
      %s48 = sphi 0, %s55
      %s49 = sphi 0, %s47
      %s50 = sphi 0, %s48
      %s51 = sphi 0, %s49
      %s52 = sphi 0, %s50
      %s64 = sphi 0, %s66
      %s67 = sphi 0, %s64
      %s68 = sphi 0, %s67
      %s84 = sphi 0, %s68
      %s100 = sphi 0, %s102
      %s103 = sphi 0, %s100
      %s104 = sphi 0, %s103
      %s120 = sphi 0, %s104
      %s136 = sphi 0, %s138
      %s139 = sphi 0, %s136
      %s140 = sphi 0, %s139
      %s156 = sphi 0, %s140
      %s164 = sphi 0, %s166
      %s167 = sphi 0, %s164
      %s168 = sphi 0, %s167
      %s184 = sphi 0, %s168
      %s200 = sphi 0, %s202
      %s203 = sphi 0, %s200
      %s204 = sphi 0, %s203
      %s220 = sphi 0, %s204
      %s236 = sphi 0, %s238
      %s239 = sphi 0, %s236
      %s240 = sphi 0, %s239
      %s256 = sphi 0, %s240
      %s260 = sphi 0, %s260
      %s262 = sphi 0, %s260
      %s263 = sphi 0, %s262
      %s277 = sphi 0, %s263
      %s281 = sphi 0, %s281
      %s283 = sphi 0, %s281
      %s284 = sphi 0, %s283
      %s298 = sphi 0, %s284
      %s302 = sphi 0, %s302
      %s304 = sphi 0, %s302
      %s305 = sphi 0, %s304
      %s319 = sphi 0, %s305
      %s323 = sphi 0, %s323
      %s325 = sphi 0, %s323
      %s326 = sphi 0, %s325
      %s340 = sphi 0, %s326
      %s344 = sphi 0, %s344
      %s346 = sphi 0, %s344
      %s347 = sphi 0, %s346
      %s361 = sphi 0, %s347
      %s365 = sphi 0, %s365
      %s367 = sphi 0, %s365
      %s368 = sphi 0, %s367
      %s382 = sphi 0, %s368
      %s386 = sphi 0, %s386
      %s388 = sphi 0, %s386
      %s389 = sphi 0, %s388
      %s403 = sphi 0, %s389
      %s407 = sphi 0, %s407
      %s409 = sphi 0, %s407
      %s410 = sphi 0, %s409
      %s424 = sphi 0, %s410
      %s428 = sphi 0, %s428
      %s430 = sphi 0, %s428
      %s431 = sphi 0, %s430
      %s445 = sphi 0, %s431
      %s453 = sphi 0, %s455
      %s456 = sphi 0, %s453
      %s457 = sphi 0, %s456
      %s473 = sphi 0, %s457
    $region4: #{resnext_up_forward.3} parent=1 // loop_header_branch
      %43 = sbr.rel (%p41) target = $region8
    $region5: #{resnext_up_forward.3} parent=1 // loop_body
      %s45 = ssub.s32 %s40, 1
      %s46 = ssub.s32 %s40, 2
      %s53 = sadd.s32 1, %s48
      %p54 = scmp.ge.s32.totalorder %s53, 2
      %s55 = scalar_select %p54, 0, %s53
      %s56 = sadd.s32 1, %s47
      %s57 = scalar_select %p54, %s56, %s47
      %p58 = scmp.ge.s32.totalorder %s57, 2
      %s59 = scalar_select %p58, 0, %s57
      %s60 = ssub.s32 %s47, %s59
      %s61 = ssub.s32 %s48, %s55
      %s62 = sor.u32 %s60, %s61
      %p63 = scmp.eq.s32.totalorder %s62, 0
      %s65 = sadd.s32 %s64, 1
      %s66 = scalar_select %p63, %s64, %s65
      %p69 = pneg %p63
      %p70 = scmp.eq.s32.totalorder %s40, 3
      %p71 = por %p69, %p70
      %p72 = scmp.ne.s32.totalorder %s64, %s67
      %p73 = scmp.eq.s32.totalorder %s40, 0
      %p74 = por %p72, %p73
      %p75 = scmp.ne.s32.totalorder %s64, %s67
      %p76 = scmp.eq.s32.totalorder %s45, 3
      %p77 = por %p75, %p76
      %p78 = scmp.ne.s32.totalorder %s67, %s68
      %p79 = scmp.eq.s32.totalorder %s45, 0
      %p80 = por %p78, %p79
      %p81 = scmp.ne.s32.totalorder %s67, %s68
      %p82 = scmp.eq.s32.totalorder %s46, 3
      %p83 = por %p81, %p82
      %p85 = scmp.ne.s32.totalorder %s68, %s84
      %p86 = scmp.eq.s32.totalorder %s46, 0
      %p87 = por %p85, %p86
      %s88 = smul.u32 %s48, 8
      %s89 = ssub.s32 %s88, 1
      %p90 = scmp.gt.s32.totalorder %s89, 0
      %s91 = scalar_select %p90, %s89, 0
      %s92 = smul.u32 %s55, 8
      %s93 = ssub.s32 %s92, 1
      %p94 = scmp.gt.s32.totalorder %s93, 0
      %s95 = scalar_select %p94, %s93, 0
      %s96 = ssub.s32 %s47, %s59
      %s97 = ssub.s32 %s91, %s95
      %s98 = sor.u32 %s96, %s97
      %p99 = scmp.eq.s32.totalorder %s98, 0
      %s101 = sadd.s32 %s100, 1
      %s102 = scalar_select %p99, %s100, %s101
      %p105 = pneg %p99
      %p106 = scmp.eq.s32.totalorder %s40, 3
      %p107 = por %p105, %p106
      %p108 = scmp.ne.s32.totalorder %s100, %s103
      %p109 = scmp.eq.s32.totalorder %s40, 0
      %p110 = por %p108, %p109
      %p111 = scmp.ne.s32.totalorder %s100, %s103
      %p112 = scmp.eq.s32.totalorder %s45, 3
      %p113 = por %p111, %p112
      %p114 = scmp.ne.s32.totalorder %s103, %s104
      %p115 = scmp.eq.s32.totalorder %s45, 0
      %p116 = por %p114, %p115
      %p117 = scmp.ne.s32.totalorder %s103, %s104
      %p118 = scmp.eq.s32.totalorder %s46, 3
      %p119 = por %p117, %p118
      %p121 = scmp.ne.s32.totalorder %s104, %s120
      %p122 = scmp.eq.s32.totalorder %s46, 0
      %p123 = por %p121, %p122
      %s124 = sadd.s32 %s48, 1
      %s125 = smul.u32 %s124, 8
      %p126 = scmp.lt.s32.totalorder %s125, 15
      %s127 = scalar_select %p126, %s125, 15
      %s128 = sadd.s32 %s55, 1
      %s129 = smul.u32 %s128, 8
      %p130 = scmp.lt.s32.totalorder %s129, 15
      %s131 = scalar_select %p130, %s129, 15
      %s132 = ssub.s32 %s47, %s59
      %s133 = ssub.s32 %s127, %s131
      %s134 = sor.u32 %s132, %s133
      %p135 = scmp.eq.s32.totalorder %s134, 0
      %s137 = sadd.s32 %s136, 1
      %s138 = scalar_select %p135, %s136, %s137
      %p141 = pneg %p135
      %p142 = scmp.eq.s32.totalorder %s40, 3
      %p143 = por %p141, %p142
      %p144 = scmp.ne.s32.totalorder %s136, %s139
      %p145 = scmp.eq.s32.totalorder %s40, 0
      %p146 = por %p144, %p145
      %p147 = scmp.ne.s32.totalorder %s136, %s139
      %p148 = scmp.eq.s32.totalorder %s45, 3
      %p149 = por %p147, %p148
      %p150 = scmp.ne.s32.totalorder %s139, %s140
      %p151 = scmp.eq.s32.totalorder %s45, 0
      %p152 = por %p150, %p151
      %p153 = scmp.ne.s32.totalorder %s139, %s140
      %p154 = scmp.eq.s32.totalorder %s46, 3
      %p155 = por %p153, %p154
      %p157 = scmp.ne.s32.totalorder %s140, %s156
      %p158 = scmp.eq.s32.totalorder %s46, 0
      %p159 = por %p157, %p158
      %s160 = ssub.s32 %s47, %s59
      %s161 = ssub.s32 %s48, %s55
      %s162 = sor.u32 %s160, %s161
      %p163 = scmp.eq.s32.totalorder %s162, 0
      %s165 = sadd.s32 %s164, 1
      %s166 = scalar_select %p163, %s164, %s165
      %p169 = pneg %p163
      %p170 = scmp.eq.s32.totalorder %s40, 3
      %p171 = por %p169, %p170
      %p172 = scmp.ne.s32.totalorder %s164, %s167
      %p173 = scmp.eq.s32.totalorder %s40, 0
      %p174 = por %p172, %p173
      %p175 = scmp.ne.s32.totalorder %s164, %s167
      %p176 = scmp.eq.s32.totalorder %s45, 3
      %p177 = por %p175, %p176
      %p178 = scmp.ne.s32.totalorder %s167, %s168
      %p179 = scmp.eq.s32.totalorder %s45, 0
      %p180 = por %p178, %p179
      %p181 = scmp.ne.s32.totalorder %s167, %s168
      %p182 = scmp.eq.s32.totalorder %s46, 3
      %p183 = por %p181, %p182
      %p185 = scmp.ne.s32.totalorder %s168, %s184
      %p186 = scmp.eq.s32.totalorder %s46, 0
      %p187 = por %p185, %p186
      %s188 = smul.u32 %s48, 8
      %s189 = ssub.s32 %s188, 1
      %p190 = scmp.gt.s32.totalorder %s189, 0
      %s191 = scalar_select %p190, %s189, 0
      %s192 = smul.u32 %s55, 8
      %s193 = ssub.s32 %s192, 1
      %p194 = scmp.gt.s32.totalorder %s193, 0
      %s195 = scalar_select %p194, %s193, 0
      %s196 = ssub.s32 %s47, %s59
      %s197 = ssub.s32 %s191, %s195
      %s198 = sor.u32 %s196, %s197
      %p199 = scmp.eq.s32.totalorder %s198, 0
      %s201 = sadd.s32 %s200, 1
      %s202 = scalar_select %p199, %s200, %s201
      %p205 = pneg %p199
      %p206 = scmp.eq.s32.totalorder %s40, 3
      %p207 = por %p205, %p206
      %p208 = scmp.ne.s32.totalorder %s200, %s203
      %p209 = scmp.eq.s32.totalorder %s40, 0
      %p210 = por %p208, %p209
      %p211 = scmp.ne.s32.totalorder %s200, %s203
      %p212 = scmp.eq.s32.totalorder %s45, 3
      %p213 = por %p211, %p212
      %p214 = scmp.ne.s32.totalorder %s203, %s204
      %p215 = scmp.eq.s32.totalorder %s45, 0
      %p216 = por %p214, %p215
      %p217 = scmp.ne.s32.totalorder %s203, %s204
      %p218 = scmp.eq.s32.totalorder %s46, 3
      %p219 = por %p217, %p218
      %p221 = scmp.ne.s32.totalorder %s204, %s220
      %p222 = scmp.eq.s32.totalorder %s46, 0
      %p223 = por %p221, %p222
      %s224 = sadd.s32 %s48, 1
      %s225 = smul.u32 %s224, 8
      %p226 = scmp.lt.s32.totalorder %s225, 15
      %s227 = scalar_select %p226, %s225, 15
      %s228 = sadd.s32 %s55, 1
      %s229 = smul.u32 %s228, 8
      %p230 = scmp.lt.s32.totalorder %s229, 15
      %s231 = scalar_select %p230, %s229, 15
      %s232 = ssub.s32 %s47, %s59
      %s233 = ssub.s32 %s227, %s231
      %s234 = sor.u32 %s232, %s233
      %p235 = scmp.eq.s32.totalorder %s234, 0
      %s237 = sadd.s32 %s236, 1
      %s238 = scalar_select %p235, %s236, %s237
      %p241 = pneg %p235
      %p242 = scmp.eq.s32.totalorder %s40, 3
      %p243 = por %p241, %p242
      %p244 = scmp.ne.s32.totalorder %s236, %s239
      %p245 = scmp.eq.s32.totalorder %s40, 0
      %p246 = por %p244, %p245
      %p247 = scmp.ne.s32.totalorder %s236, %s239
      %p248 = scmp.eq.s32.totalorder %s45, 3
      %p249 = por %p247, %p248
      %p250 = scmp.ne.s32.totalorder %s239, %s240
      %p251 = scmp.eq.s32.totalorder %s45, 0
      %p252 = por %p250, %p251
      %p253 = scmp.ne.s32.totalorder %s239, %s240
      %p254 = scmp.eq.s32.totalorder %s46, 3
      %p255 = por %p253, %p254
      %p257 = scmp.ne.s32.totalorder %s240, %s256
      %p258 = scmp.eq.s32.totalorder %s46, 0
      %p259 = por %p257, %p258
      %s261 = sadd.s32 %s260, 1
      %p264 = scmp.eq.s32.totalorder %s40, 3
      %p265 = scmp.ne.s32.totalorder %s260, %s262
      %p266 = scmp.eq.s32.totalorder %s40, 0
      %p267 = por %p265, %p266
      %p268 = scmp.ne.s32.totalorder %s260, %s262
      %p269 = scmp.eq.s32.totalorder %s45, 3
      %p270 = por %p268, %p269
      %p271 = scmp.ne.s32.totalorder %s262, %s263
      %p272 = scmp.eq.s32.totalorder %s45, 0
      %p273 = por %p271, %p272
      %p274 = scmp.ne.s32.totalorder %s262, %s263
      %p275 = scmp.eq.s32.totalorder %s46, 3
      %p276 = por %p274, %p275
      %p278 = scmp.ne.s32.totalorder %s263, %s277
      %p279 = scmp.eq.s32.totalorder %s46, 0
      %p280 = por %p278, %p279
      %s282 = sadd.s32 %s281, 1
      %p285 = scmp.eq.s32.totalorder %s40, 3
      %p286 = scmp.ne.s32.totalorder %s281, %s283
      %p287 = scmp.eq.s32.totalorder %s40, 0
      %p288 = por %p286, %p287
      %p289 = scmp.ne.s32.totalorder %s281, %s283
      %p290 = scmp.eq.s32.totalorder %s45, 3
      %p291 = por %p289, %p290
      %p292 = scmp.ne.s32.totalorder %s283, %s284
      %p293 = scmp.eq.s32.totalorder %s45, 0
      %p294 = por %p292, %p293
      %p295 = scmp.ne.s32.totalorder %s283, %s284
      %p296 = scmp.eq.s32.totalorder %s46, 3
      %p297 = por %p295, %p296
      %p299 = scmp.ne.s32.totalorder %s284, %s298
      %p300 = scmp.eq.s32.totalorder %s46, 0
      %p301 = por %p299, %p300
      %s303 = sadd.s32 %s302, 1
      %p306 = scmp.eq.s32.totalorder %s40, 3
      %p307 = scmp.ne.s32.totalorder %s302, %s304
      %p308 = scmp.eq.s32.totalorder %s40, 0
      %p309 = por %p307, %p308
      %p310 = scmp.ne.s32.totalorder %s302, %s304
      %p311 = scmp.eq.s32.totalorder %s45, 3
      %p312 = por %p310, %p311
      %p313 = scmp.ne.s32.totalorder %s304, %s305
      %p314 = scmp.eq.s32.totalorder %s45, 0
      %p315 = por %p313, %p314
      %p316 = scmp.ne.s32.totalorder %s304, %s305
      %p317 = scmp.eq.s32.totalorder %s46, 3
      %p318 = por %p316, %p317
      %p320 = scmp.ne.s32.totalorder %s305, %s319
      %p321 = scmp.eq.s32.totalorder %s46, 0
      %p322 = por %p320, %p321
      %s324 = sadd.s32 %s323, 1
      %p327 = scmp.eq.s32.totalorder %s40, 3
      %p328 = scmp.ne.s32.totalorder %s323, %s325
      %p329 = scmp.eq.s32.totalorder %s40, 0
      %p330 = por %p328, %p329
      %p331 = scmp.ne.s32.totalorder %s323, %s325
      %p332 = scmp.eq.s32.totalorder %s45, 3
      %p333 = por %p331, %p332
      %p334 = scmp.ne.s32.totalorder %s325, %s326
      %p335 = scmp.eq.s32.totalorder %s45, 0
      %p336 = por %p334, %p335
      %p337 = scmp.ne.s32.totalorder %s325, %s326
      %p338 = scmp.eq.s32.totalorder %s46, 3
      %p339 = por %p337, %p338
      %p341 = scmp.ne.s32.totalorder %s326, %s340
      %p342 = scmp.eq.s32.totalorder %s46, 0
      %p343 = por %p341, %p342
      %s345 = sadd.s32 %s344, 1
      %p348 = scmp.eq.s32.totalorder %s40, 3
      %p349 = scmp.ne.s32.totalorder %s344, %s346
      %p350 = scmp.eq.s32.totalorder %s40, 0
      %p351 = por %p349, %p350
      %p352 = scmp.ne.s32.totalorder %s344, %s346
      %p353 = scmp.eq.s32.totalorder %s45, 3
      %p354 = por %p352, %p353
      %p355 = scmp.ne.s32.totalorder %s346, %s347
      %p356 = scmp.eq.s32.totalorder %s45, 0
      %p357 = por %p355, %p356
      %p358 = scmp.ne.s32.totalorder %s346, %s347
      %p359 = scmp.eq.s32.totalorder %s46, 3
      %p360 = por %p358, %p359
      %p362 = scmp.ne.s32.totalorder %s347, %s361
      %p363 = scmp.eq.s32.totalorder %s46, 0
      %p364 = por %p362, %p363
      %s366 = sadd.s32 %s365, 1
      %p369 = scmp.eq.s32.totalorder %s40, 3
      %p370 = scmp.ne.s32.totalorder %s365, %s367
      %p371 = scmp.eq.s32.totalorder %s40, 0
      %p372 = por %p370, %p371
      %p373 = scmp.ne.s32.totalorder %s365, %s367
      %p374 = scmp.eq.s32.totalorder %s45, 3
      %p375 = por %p373, %p374
      %p376 = scmp.ne.s32.totalorder %s367, %s368
      %p377 = scmp.eq.s32.totalorder %s45, 0
      %p378 = por %p376, %p377
      %p379 = scmp.ne.s32.totalorder %s367, %s368
      %p380 = scmp.eq.s32.totalorder %s46, 3
      %p381 = por %p379, %p380
      %p383 = scmp.ne.s32.totalorder %s368, %s382
      %p384 = scmp.eq.s32.totalorder %s46, 0
      %p385 = por %p383, %p384
      %s387 = sadd.s32 %s386, 1
      %p390 = scmp.eq.s32.totalorder %s40, 3
      %p391 = scmp.ne.s32.totalorder %s386, %s388
      %p392 = scmp.eq.s32.totalorder %s40, 0
      %p393 = por %p391, %p392
      %p394 = scmp.ne.s32.totalorder %s386, %s388
      %p395 = scmp.eq.s32.totalorder %s45, 3
      %p396 = por %p394, %p395
      %p397 = scmp.ne.s32.totalorder %s388, %s389
      %p398 = scmp.eq.s32.totalorder %s45, 0
      %p399 = por %p397, %p398
      %p400 = scmp.ne.s32.totalorder %s388, %s389
      %p401 = scmp.eq.s32.totalorder %s46, 3
      %p402 = por %p400, %p401
      %p404 = scmp.ne.s32.totalorder %s389, %s403
      %p405 = scmp.eq.s32.totalorder %s46, 0
      %p406 = por %p404, %p405
      %s408 = sadd.s32 %s407, 1
      %p411 = scmp.eq.s32.totalorder %s40, 3
      %p412 = scmp.ne.s32.totalorder %s407, %s409
      %p413 = scmp.eq.s32.totalorder %s40, 0
      %p414 = por %p412, %p413
      %p415 = scmp.ne.s32.totalorder %s407, %s409
      %p416 = scmp.eq.s32.totalorder %s45, 3
      %p417 = por %p415, %p416
      %p418 = scmp.ne.s32.totalorder %s409, %s410
      %p419 = scmp.eq.s32.totalorder %s45, 0
      %p420 = por %p418, %p419
      %p421 = scmp.ne.s32.totalorder %s409, %s410
      %p422 = scmp.eq.s32.totalorder %s46, 3
      %p423 = por %p421, %p422
      %p425 = scmp.ne.s32.totalorder %s410, %s424
      %p426 = scmp.eq.s32.totalorder %s46, 0
      %p427 = por %p425, %p426
      %s429 = sadd.s32 %s428, 1
      %p432 = scmp.eq.s32.totalorder %s40, 3
      %p433 = scmp.ne.s32.totalorder %s428, %s430
      %p434 = scmp.eq.s32.totalorder %s40, 0
      %p435 = por %p433, %p434
      %p436 = scmp.ne.s32.totalorder %s428, %s430
      %p437 = scmp.eq.s32.totalorder %s45, 3
      %p438 = por %p436, %p437
      %p439 = scmp.ne.s32.totalorder %s430, %s431
      %p440 = scmp.eq.s32.totalorder %s45, 0
      %p441 = por %p439, %p440
      %p442 = scmp.ne.s32.totalorder %s430, %s431
      %p443 = scmp.eq.s32.totalorder %s46, 3
      %p444 = por %p442, %p443
      %p446 = scmp.ne.s32.totalorder %s431, %s445
      %p447 = scmp.eq.s32.totalorder %s46, 0
      %p448 = por %p446, %p447
      %s449 = ssub.s32 %s47, %s59
      %s450 = ssub.s32 %s48, %s55
      %s451 = sor.u32 %s449, %s450
      %p452 = scmp.eq.s32.totalorder %s451, 0
      %s454 = sadd.s32 %s453, 1
      %s455 = scalar_select %p452, %s453, %s454
      %p458 = pneg %p452
      %p459 = scmp.eq.s32.totalorder %s40, 3
      %p460 = por %p458, %p459
      %p461 = scmp.ne.s32.totalorder %s453, %s456
      %p462 = scmp.eq.s32.totalorder %s40, 0
      %p463 = por %p461, %p462
      %p464 = scmp.ne.s32.totalorder %s453, %s456
      %p465 = scmp.eq.s32.totalorder %s45, 3
      %p466 = por %p464, %p465
      %p467 = scmp.ne.s32.totalorder %s456, %s457
      %p468 = scmp.eq.s32.totalorder %s45, 0
      %p469 = por %p467, %p468
      %p470 = scmp.ne.s32.totalorder %s456, %s457
      %p471 = scmp.eq.s32.totalorder %s46, 3
      %p472 = por %p470, %p471
      %p474 = scmp.ne.s32.totalorder %s457, %s473
      %p475 = scmp.eq.s32.totalorder %s46, 0
      %p476 = por %p474, %p475
      %p477 = scmp.le.s32.totalorder 1, %s40
      %p478 = scmp.lt.s32.totalorder %s40, 5
      %p479 = pnand %p477, %p478
      %p480 = pneg %p479
      // Predicated region
      $region9: #{resnext_up_forward.3} parent=5 // pred_check
        _
      $region10: #{resnext_up_forward.3} parent=5 // pred_check_branch
        %482 = sbr.rel (%p479) target = $region12
      $region11: #{resnext_up_forward.3} parent=5 // pred_region
        %s483 = ssub.s32 %s40, 1
        // Predicated region
        $region13: #{resnext_up_forward.3} parent=11 // pred_check
          %p484 = pneg %p273
        $region14: #{resnext_up_forward.3} parent=11 // pred_check_branch
          %486 = sbr.rel (%p484) target = $region16
        $region15: #{resnext_up_forward.3} parent=11 // pred_region
          %s488 = ssub.s32 128, 128
          %489 = vsyncadd [#allocation12], %s488
          %s490 = sshll.u32 [#allocation13], 4
          %s491 = int_to_ptr.vmem [resolvable:$true] %s490
          %496 = dma.hbm_to_vmem [thread:$0]  %s6, 128, %s491, [#allocation12], 64, 64, 4
        $region16: #{resnext_up_forward.3} parent=11 // pred_fallthru
          _
        // Predicated region
        $region17: #{resnext_up_forward.3} parent=11 // pred_check
          %p497 = pneg %p294
        $region18: #{resnext_up_forward.3} parent=11 // pred_check_branch
          %499 = sbr.rel (%p497) target = $region20
        $region19: #{resnext_up_forward.3} parent=11 // pred_region
          %s501 = ssub.s32 128, 128
          %502 = vsyncadd [#allocation15], %s501
          %s503 = sshll.u32 [#allocation14], 4
          %s504 = int_to_ptr.vmem [resolvable:$true] %s503
          %509 = dma.hbm_to_vmem [thread:$0]  %s7, 128, %s504, [#allocation15], 64, 64, 4
        $region20: #{resnext_up_forward.3} parent=11 // pred_fallthru
          _
        // Predicated region
        $region21: #{resnext_up_forward.3} parent=11 // pred_check
          %p510 = pneg %p315
        $region22: #{resnext_up_forward.3} parent=11 // pred_check_branch
          %512 = sbr.rel (%p510) target = $region24
        $region23: #{resnext_up_forward.3} parent=11 // pred_region
          %s514 = ssub.s32 16, 16
          %515 = vsyncadd [#allocation15], %s514
          %s517 = sshll.u32 [#allocation16], 4
          %s518 = int_to_ptr.vmem [resolvable:$true] %s517
          %520 = dma.hbm_to_vmem [thread:$0]  %s8, 16, %s518, [#allocation15]
        $region24: #{resnext_up_forward.3} parent=11 // pred_fallthru
          _
        // Predicated region
        $region25: #{resnext_up_forward.3} parent=11 // pred_check
          %p521 = pneg %p336
        $region26: #{resnext_up_forward.3} parent=11 // pred_check_branch
          %523 = sbr.rel (%p521) target = $region28
        $region27: #{resnext_up_forward.3} parent=11 // pred_region
          %s525 = ssub.s32 4608, 4608
          %526 = vsyncadd [#allocation18], %s525
          %s527 = sshll.u32 [#allocation17], 4
          %s528 = int_to_ptr.vmem [resolvable:$true] %s527
          %533 = dma.hbm_to_vmem [thread:$0]  %s9, 4608, %s528, [#allocation18], 64, 64, 4
        $region28: #{resnext_up_forward.3} parent=11 // pred_fallthru
          _
        // Predicated region
        $region29: #{resnext_up_forward.3} parent=11 // pred_check
          %p534 = pneg %p357
        $region30: #{resnext_up_forward.3} parent=11 // pred_check_branch
          %536 = sbr.rel (%p534) target = $region32
        $region31: #{resnext_up_forward.3} parent=11 // pred_region
          %s538 = ssub.s32 16, 16
          %539 = vsyncadd [#allocation18], %s538
          %s541 = sshll.u32 [#allocation19], 4
          %s542 = int_to_ptr.vmem [resolvable:$true] %s541
          %544 = dma.hbm_to_vmem [thread:$0]  %s10, 16, %s542, [#allocation18]
        $region32: #{resnext_up_forward.3} parent=11 // pred_fallthru
          _
        // Predicated region
        $region33: #{resnext_up_forward.3} parent=11 // pred_check
          %p545 = pneg %p378
        $region34: #{resnext_up_forward.3} parent=11 // pred_check_branch
          %547 = sbr.rel (%p545) target = $region36
        $region35: #{resnext_up_forward.3} parent=11 // pred_region
          %s549 = ssub.s32 512, 512
          %550 = vsyncadd [#allocation21], %s549
          %s551 = sshll.u32 [#allocation20], 4
          %s552 = int_to_ptr.vmem [resolvable:$true] %s551
          %557 = dma.hbm_to_vmem [thread:$0]  %s11, 512, %s552, [#allocation21], 64, 64, 4
        $region36: #{resnext_up_forward.3} parent=11 // pred_fallthru
          _
        // Predicated region
        $region37: #{resnext_up_forward.3} parent=11 // pred_check
          %p558 = pneg %p399
        $region38: #{resnext_up_forward.3} parent=11 // pred_check_branch
          %560 = sbr.rel (%p558) target = $region40
        $region39: #{resnext_up_forward.3} parent=11 // pred_region
          %s562 = ssub.s32 128, 128
          %563 = vsyncadd [#allocation21], %s562
          %s564 = sshll.u32 [#allocation22], 4
          %s565 = int_to_ptr.vmem [resolvable:$true] %s564
          %570 = dma.hbm_to_vmem [thread:$0]  %s12, 128, %s565, [#allocation21], 64, 64, 4
        $region40: #{resnext_up_forward.3} parent=11 // pred_fallthru
          _
        // Predicated region
        $region41: #{resnext_up_forward.3} parent=11 // pred_check
          %p571 = pneg %p420
        $region42: #{resnext_up_forward.3} parent=11 // pred_check_branch
          %573 = sbr.rel (%p571) target = $region44
        $region43: #{resnext_up_forward.3} parent=11 // pred_region
          %s575 = ssub.s32 128, 128
          %576 = vsyncadd [#allocation24], %s575
          %s577 = sshll.u32 [#allocation23], 4
          %s578 = int_to_ptr.vmem [resolvable:$true] %s577
          %583 = dma.hbm_to_vmem [thread:$0]  %s13, 128, %s578, [#allocation24], 64, 64, 4
        $region44: #{resnext_up_forward.3} parent=11 // pred_fallthru
          _
        // Predicated region
        $region45: #{resnext_up_forward.3} parent=11 // pred_check
          %p584 = pneg %p441
        $region46: #{resnext_up_forward.3} parent=11 // pred_check_branch
          %586 = sbr.rel (%p584) target = $region48
        $region47: #{resnext_up_forward.3} parent=11 // pred_region
          %s588 = ssub.s32 16, 16
          %589 = vsyncadd [#allocation24], %s588
          %s591 = sshll.u32 [#allocation25], 4
          %s592 = int_to_ptr.vmem [resolvable:$true] %s591
          %594 = dma.hbm_to_vmem [thread:$0]  %s14, 16, %s592, [#allocation24]
        $region48: #{resnext_up_forward.3} parent=11 // pred_fallthru
          _
      $region12: #{resnext_up_forward.3} parent=5 // pred_fallthru
        _
      %p595 = scmp.lt.s32.totalorder %s40, 4
      // Predicated region
      $region49: #{resnext_up_forward.3} parent=5 // pred_check
        %p596 = pneg %p595
      $region50: #{resnext_up_forward.3} parent=5 // pred_check_branch
        %598 = sbr.rel (%p596) target = $region52
      $region51: #{resnext_up_forward.3} parent=5 // pred_region
        // Predicated region
        $region53: #{resnext_up_forward.3} parent=51 // pred_check
          %p599 = pneg %p74
        $region54: #{resnext_up_forward.3} parent=51 // pred_check_branch
          %601 = sbr.rel (%p599) target = $region56
        $region55: #{resnext_up_forward.3} parent=51 // pred_region
          %s602 = sand.u32 %s64, 1
          %s603 = scalar_lea.sflag [#allocation3], %s602
          %s604 = sand.u32 %s64, 1
          %s605 = smul.addr %s604, 64
          %s606 = scalar_lea.vmem [#allocation2], %s605
          %s607 = smul.u32 8, %s48
          %s609 = ssub.s32 1024, 1024
          %610 = vsyncadd %s603, %s609
          %s611 = smul.addr %s607, 2
          %s612 = smul.addr %s47, 32
          %s613 = sadd.s32 %s611, %s612
          %s614 = smul.addr %s613, 64
          %s615 = scalar_lea.hbm %s0, %s614
          %s616 = sshll.u32 %s606, 4
          %s617 = int_to_ptr.vmem [resolvable:$true] %s616
          %622 = dma.hbm_to_vmem [thread:$0]  %s615, 1024, %s617, %s603, 64, 64, 4
        $region56: #{resnext_up_forward.3} parent=51 // pred_fallthru
          _
        // Predicated region
        $region57: #{resnext_up_forward.3} parent=51 // pred_check
          %p623 = pneg %p110
        $region58: #{resnext_up_forward.3} parent=51 // pred_check_branch
          %625 = sbr.rel (%p623) target = $region60
        $region59: #{resnext_up_forward.3} parent=51 // pred_region
          %s626 = sand.u32 %s40, 1
          %s627 = scalar_lea.sflag [#allocation6], %s626
          %s628 = sand.u32 %s100, 1
          %s629 = smul.addr %s628, 8
          %s630 = scalar_lea.vmem [#allocation5], %s629
          %s631 = smul.u32 %s48, 8
          %s632 = ssub.s32 %s631, 1
          %p633 = scmp.gt.s32.totalorder %s632, 0
          %s634 = scalar_select %p633, %s632, 0
          %s636 = ssub.s32 128, 128
          %637 = vsyncadd %s627, %s636
          %s638 = smul.addr %s634, 2
          %s639 = smul.addr %s47, 32
          %s640 = sadd.s32 %s638, %s639
          %s641 = smul.addr %s640, 64
          %s642 = scalar_lea.hbm %s1, %s641
          %s643 = sshll.u32 %s630, 4
          %s644 = int_to_ptr.vmem [resolvable:$true] %s643
          %649 = dma.hbm_to_vmem [thread:$0]  %s642, 128, %s644, %s627, 64, 64, 4
        $region60: #{resnext_up_forward.3} parent=51 // pred_fallthru
          _
        // Predicated region
        $region61: #{resnext_up_forward.3} parent=51 // pred_check
          %p650 = pneg %p146
        $region62: #{resnext_up_forward.3} parent=51 // pred_check_branch
          %652 = sbr.rel (%p650) target = $region64
        $region63: #{resnext_up_forward.3} parent=51 // pred_region
          %s653 = sand.u32 %s40, 1
          %s654 = scalar_lea.sflag [#allocation6], %s653
          %s655 = sand.u32 %s136, 1
          %s656 = smul.addr %s655, 8
          %s657 = scalar_lea.vmem [#allocation7], %s656
          %s658 = sadd.s32 %s48, 1
          %s659 = smul.u32 %s658, 8
          %p660 = scmp.lt.s32.totalorder %s659, 15
          %s661 = scalar_select %p660, %s659, 15
          %s663 = ssub.s32 128, 128
          %664 = vsyncadd %s654, %s663
          %s665 = smul.addr %s661, 2
          %s666 = smul.addr %s47, 32
          %s667 = sadd.s32 %s665, %s666
          %s668 = smul.addr %s667, 64
          %s669 = scalar_lea.hbm %s2, %s668
          %s670 = sshll.u32 %s657, 4
          %s671 = int_to_ptr.vmem [resolvable:$true] %s670
          %676 = dma.hbm_to_vmem [thread:$0]  %s669, 128, %s671, %s654, 64, 64, 4
        $region64: #{resnext_up_forward.3} parent=51 // pred_fallthru
          _
        // Predicated region
        $region65: #{resnext_up_forward.3} parent=51 // pred_check
          %p677 = pneg %p174
        $region66: #{resnext_up_forward.3} parent=51 // pred_check_branch
          %679 = sbr.rel (%p677) target = $region68
        $region67: #{resnext_up_forward.3} parent=51 // pred_region
          %s680 = sand.u32 %s40, 1
          %s681 = scalar_lea.sflag [#allocation9], %s680
          %s682 = sand.u32 %s164, 1
          %s683 = smul.addr %s682, 64
          %s684 = scalar_lea.vmem [#allocation8], %s683
          %s685 = smul.u32 8, %s48
          %s687 = ssub.s32 1024, 1024
          %688 = vsyncadd %s681, %s687
          %s689 = smul.addr %s685, 2
          %s690 = smul.addr %s47, 32
          %s691 = sadd.s32 %s689, %s690
          %s692 = smul.addr %s691, 64
          %s693 = scalar_lea.hbm %s3, %s692
          %s694 = sshll.u32 %s684, 4
          %s695 = int_to_ptr.vmem [resolvable:$true] %s694
          %700 = dma.hbm_to_vmem [thread:$0]  %s693, 1024, %s695, %s681, 64, 64, 4
        $region68: #{resnext_up_forward.3} parent=51 // pred_fallthru
          _
        // Predicated region
        $region69: #{resnext_up_forward.3} parent=51 // pred_check
          %p701 = pneg %p210
        $region70: #{resnext_up_forward.3} parent=51 // pred_check_branch
          %703 = sbr.rel (%p701) target = $region72
        $region71: #{resnext_up_forward.3} parent=51 // pred_region
          %s704 = sand.u32 %s40, 1
          %s705 = scalar_lea.sflag [#allocation9], %s704
          %s706 = sand.u32 %s200, 1
          %s707 = smul.addr %s706, 8
          %s708 = scalar_lea.vmem [#allocation10], %s707
          %s709 = smul.u32 %s48, 8
          %s710 = ssub.s32 %s709, 1
          %p711 = scmp.gt.s32.totalorder %s710, 0
          %s712 = scalar_select %p711, %s710, 0
          %s714 = ssub.s32 128, 128
          %715 = vsyncadd %s705, %s714
          %s716 = smul.addr %s712, 2
          %s717 = smul.addr %s47, 32
          %s718 = sadd.s32 %s716, %s717
          %s719 = smul.addr %s718, 64
          %s720 = scalar_lea.hbm %s4, %s719
          %s721 = sshll.u32 %s708, 4
          %s722 = int_to_ptr.vmem [resolvable:$true] %s721
          %727 = dma.hbm_to_vmem [thread:$0]  %s720, 128, %s722, %s705, 64, 64, 4
        $region72: #{resnext_up_forward.3} parent=51 // pred_fallthru
          _
        // Predicated region
        $region73: #{resnext_up_forward.3} parent=51 // pred_check
          %p728 = pneg %p246
        $region74: #{resnext_up_forward.3} parent=51 // pred_check_branch
          %730 = sbr.rel (%p728) target = $region76
        $region75: #{resnext_up_forward.3} parent=51 // pred_region
          %s731 = sand.u32 %s40, 1
          %s732 = scalar_lea.sflag [#allocation12], %s731
          %s733 = sand.u32 %s236, 1
          %s734 = smul.addr %s733, 8
          %s735 = scalar_lea.vmem [#allocation11], %s734
          %s736 = sadd.s32 %s48, 1
          %s737 = smul.u32 %s736, 8
          %p738 = scmp.lt.s32.totalorder %s737, 15
          %s739 = scalar_select %p738, %s737, 15
          %s741 = ssub.s32 128, 128
          %742 = vsyncadd %s732, %s741
          %s743 = smul.addr %s739, 2
          %s744 = smul.addr %s47, 32
          %s745 = sadd.s32 %s743, %s744
          %s746 = smul.addr %s745, 64
          %s747 = scalar_lea.hbm %s5, %s746
          %s748 = sshll.u32 %s735, 4
          %s749 = int_to_ptr.vmem [resolvable:$true] %s748
          %754 = dma.hbm_to_vmem [thread:$0]  %s747, 128, %s749, %s732, 64, 64, 4
        $region76: #{resnext_up_forward.3} parent=51 // pred_fallthru
          _
      $region52: #{resnext_up_forward.3} parent=5 // pred_fallthru
        _
      %p755 = scmp.le.s32.totalorder 1, %s40
      %p756 = scmp.lt.s32.totalorder %s40, 5
      %p757 = pnand %p755, %p756
      %p758 = pneg %p757
      // Predicated region
      $region77: #{resnext_up_forward.3} parent=5 // pred_check
        _
      $region78: #{resnext_up_forward.3} parent=5 // pred_check_branch
        %760 = sbr.rel (%p757) target = $region80
      $region79: #{resnext_up_forward.3} parent=5 // pred_region
        %s761 = ssub.s32 %s40, 1
        %s762 = sand.u32 %s67, 1
        %s763 = scalar_lea.sflag [#allocation3], %s762
        %s764 = sand.u32 %s67, 1
        %s765 = smul.addr %s764, 64
        %s766 = scalar_lea.vmem [#allocation2], %s765
        // Predicated region
        $region81: #{resnext_up_forward.3} parent=79 // pred_check
          %p767 = pneg %p80
        $region82: #{resnext_up_forward.3} parent=79 // pred_check_branch
          %769 = sbr.rel (%p767) target = $region84
        $region83: #{resnext_up_forward.3} parent=79 // pred_region
          %770 = dma.done %s763, 1024
        $region84: #{resnext_up_forward.3} parent=79 // pred_fallthru
          _
        %s771 = sand.u32 %s45, 1
        %s772 = scalar_lea.sflag [#allocation6], %s771
        %s773 = sand.u32 %s103, 1
        %s774 = smul.addr %s773, 8
        %s775 = scalar_lea.vmem [#allocation5], %s774
        // Predicated region
        $region85: #{resnext_up_forward.3} parent=79 // pred_check
          %p776 = pneg %p116
        $region86: #{resnext_up_forward.3} parent=79 // pred_check_branch
          %778 = sbr.rel (%p776) target = $region88
        $region87: #{resnext_up_forward.3} parent=79 // pred_region
          %779 = dma.done %s772, 128
        $region88: #{resnext_up_forward.3} parent=79 // pred_fallthru
          _
        %s780 = sand.u32 %s45, 1
        %s781 = scalar_lea.sflag [#allocation6], %s780
        %s782 = sand.u32 %s139, 1
        %s783 = smul.addr %s782, 8
        %s784 = scalar_lea.vmem [#allocation7], %s783
        // Predicated region
        $region89: #{resnext_up_forward.3} parent=79 // pred_check
          %p785 = pneg %p152
        $region90: #{resnext_up_forward.3} parent=79 // pred_check_branch
          %787 = sbr.rel (%p785) target = $region92
        $region91: #{resnext_up_forward.3} parent=79 // pred_region
          %788 = dma.done %s781, 128
        $region92: #{resnext_up_forward.3} parent=79 // pred_fallthru
          _
        %s789 = sand.u32 %s45, 1
        %s790 = scalar_lea.sflag [#allocation9], %s789
        %s791 = sand.u32 %s167, 1
        %s792 = smul.addr %s791, 64
        %s793 = scalar_lea.vmem [#allocation8], %s792
        // Predicated region
        $region93: #{resnext_up_forward.3} parent=79 // pred_check
          %p794 = pneg %p180
        $region94: #{resnext_up_forward.3} parent=79 // pred_check_branch
          %796 = sbr.rel (%p794) target = $region96
        $region95: #{resnext_up_forward.3} parent=79 // pred_region
          %797 = dma.done %s790, 1024
        $region96: #{resnext_up_forward.3} parent=79 // pred_fallthru
          _
        %s798 = sand.u32 %s45, 1
        %s799 = scalar_lea.sflag [#allocation9], %s798
        %s800 = sand.u32 %s203, 1
        %s801 = smul.addr %s800, 8
        %s802 = scalar_lea.vmem [#allocation10], %s801
        // Predicated region
        $region97: #{resnext_up_forward.3} parent=79 // pred_check
          %p803 = pneg %p216
        $region98: #{resnext_up_forward.3} parent=79 // pred_check_branch
          %805 = sbr.rel (%p803) target = $region100
        $region99: #{resnext_up_forward.3} parent=79 // pred_region
          %806 = dma.done %s799, 128
        $region100: #{resnext_up_forward.3} parent=79 // pred_fallthru
          _
        %s807 = sand.u32 %s45, 1
        %s808 = scalar_lea.sflag [#allocation12], %s807
        %s809 = sand.u32 %s239, 1
        %s810 = smul.addr %s809, 8
        %s811 = scalar_lea.vmem [#allocation11], %s810
        // Predicated region
        $region101: #{resnext_up_forward.3} parent=79 // pred_check
          %p812 = pneg %p252
        $region102: #{resnext_up_forward.3} parent=79 // pred_check_branch
          %814 = sbr.rel (%p812) target = $region104
        $region103: #{resnext_up_forward.3} parent=79 // pred_region
          %815 = dma.done %s808, 128
        $region104: #{resnext_up_forward.3} parent=79 // pred_fallthru
          _
        // Predicated region
        $region105: #{resnext_up_forward.3} parent=79 // pred_check
          %p816 = pneg %p273
        $region106: #{resnext_up_forward.3} parent=79 // pred_check_branch
          %818 = sbr.rel (%p816) target = $region108
        $region107: #{resnext_up_forward.3} parent=79 // pred_region
          %819 = dma.done [#allocation12], 128
        $region108: #{resnext_up_forward.3} parent=79 // pred_fallthru
          _
        // Predicated region
        $region109: #{resnext_up_forward.3} parent=79 // pred_check
          %p820 = pneg %p294
        $region110: #{resnext_up_forward.3} parent=79 // pred_check_branch
          %822 = sbr.rel (%p820) target = $region112
        $region111: #{resnext_up_forward.3} parent=79 // pred_region
          %823 = dma.done [#allocation15], 128
        $region112: #{resnext_up_forward.3} parent=79 // pred_fallthru
          _
        // Predicated region
        $region113: #{resnext_up_forward.3} parent=79 // pred_check
          %p824 = pneg %p315
        $region114: #{resnext_up_forward.3} parent=79 // pred_check_branch
          %826 = sbr.rel (%p824) target = $region116
        $region115: #{resnext_up_forward.3} parent=79 // pred_region
          %827 = dma.done [#allocation15], 16
        $region116: #{resnext_up_forward.3} parent=79 // pred_fallthru
          _
        // Predicated region
        $region117: #{resnext_up_forward.3} parent=79 // pred_check
          %p828 = pneg %p336
        $region118: #{resnext_up_forward.3} parent=79 // pred_check_branch
          %830 = sbr.rel (%p828) target = $region120
        $region119: #{resnext_up_forward.3} parent=79 // pred_region
          %831 = dma.done [#allocation18], 4608
        $region120: #{resnext_up_forward.3} parent=79 // pred_fallthru
          _
        // Predicated region
        $region121: #{resnext_up_forward.3} parent=79 // pred_check
          %p832 = pneg %p357
        $region122: #{resnext_up_forward.3} parent=79 // pred_check_branch
          %834 = sbr.rel (%p832) target = $region124
        $region123: #{resnext_up_forward.3} parent=79 // pred_region
          %835 = dma.done [#allocation18], 16
        $region124: #{resnext_up_forward.3} parent=79 // pred_fallthru
          _
        // Predicated region
        $region125: #{resnext_up_forward.3} parent=79 // pred_check
          %p836 = pneg %p378
        $region126: #{resnext_up_forward.3} parent=79 // pred_check_branch
          %838 = sbr.rel (%p836) target = $region128
        $region127: #{resnext_up_forward.3} parent=79 // pred_region
          %839 = dma.done [#allocation21], 512
        $region128: #{resnext_up_forward.3} parent=79 // pred_fallthru
          _
        // Predicated region
        $region129: #{resnext_up_forward.3} parent=79 // pred_check
          %p840 = pneg %p399
        $region130: #{resnext_up_forward.3} parent=79 // pred_check_branch
          %842 = sbr.rel (%p840) target = $region132
        $region131: #{resnext_up_forward.3} parent=79 // pred_region
          %843 = dma.done [#allocation21], 128
        $region132: #{resnext_up_forward.3} parent=79 // pred_fallthru
          _
        // Predicated region
        $region133: #{resnext_up_forward.3} parent=79 // pred_check
          %p844 = pneg %p420
        $region134: #{resnext_up_forward.3} parent=79 // pred_check_branch
          %846 = sbr.rel (%p844) target = $region136
        $region135: #{resnext_up_forward.3} parent=79 // pred_region
          %847 = dma.done [#allocation24], 128
        $region136: #{resnext_up_forward.3} parent=79 // pred_fallthru
          _
        // Predicated region
        $region137: #{resnext_up_forward.3} parent=79 // pred_check
          %p848 = pneg %p441
        $region138: #{resnext_up_forward.3} parent=79 // pred_check_branch
          %850 = sbr.rel (%p848) target = $region140
        $region139: #{resnext_up_forward.3} parent=79 // pred_region
          %851 = dma.done [#allocation24], 16
        $region140: #{resnext_up_forward.3} parent=79 // pred_fallthru
          _
        %s852 = sand.u32 %s67, 1
        %s853 = scalar_lea.sflag [#allocation3], %s852
        %s854 = sand.u32 %s67, 1
        %s855 = smul.addr %s854, 64
        %s856 = scalar_lea.vmem [#allocation2], %s855
        %p857 = pneg %p80
        %p858 = pneg %p77
        %s859 = sand.u32 %s45, 1
        %s860 = scalar_lea.sflag [#allocation6], %s859
        %s861 = sand.u32 %s103, 1
        %s862 = smul.addr %s861, 8
        %s863 = scalar_lea.vmem [#allocation5], %s862
        %p864 = pneg %p116
        %p865 = pneg %p113
        %s866 = sand.u32 %s45, 1
        %s867 = scalar_lea.sflag [#allocation6], %s866
        %s868 = sand.u32 %s139, 1
        %s869 = smul.addr %s868, 8
        %s870 = scalar_lea.vmem [#allocation7], %s869
        %p871 = pneg %p152
        %p872 = pneg %p149
        %s873 = sand.u32 %s45, 1
        %s874 = scalar_lea.sflag [#allocation9], %s873
        %s875 = sand.u32 %s167, 1
        %s876 = smul.addr %s875, 64
        %s877 = scalar_lea.vmem [#allocation8], %s876
        %p878 = pneg %p180
        %p879 = pneg %p177
        %s880 = sand.u32 %s45, 1
        %s881 = scalar_lea.sflag [#allocation9], %s880
        %s882 = sand.u32 %s203, 1
        %s883 = smul.addr %s882, 8
        %s884 = scalar_lea.vmem [#allocation10], %s883
        %p885 = pneg %p216
        %p886 = pneg %p213
        %s887 = sand.u32 %s45, 1
        %s888 = scalar_lea.sflag [#allocation12], %s887
        %s889 = sand.u32 %s239, 1
        %s890 = smul.addr %s889, 8
        %s891 = scalar_lea.vmem [#allocation11], %s890
        %p892 = pneg %p252
        %p893 = pneg %p249
        %p894 = pneg %p273
        %p895 = pneg %p270
        %p896 = pneg %p294
        %p897 = pneg %p291
        %p898 = pneg %p315
        %p899 = pneg %p312
        %p900 = pneg %p336
        %p901 = pneg %p333
        %p902 = pneg %p357
        %p903 = pneg %p354
        %p904 = pneg %p378
        %p905 = pneg %p375
        %p906 = pneg %p399
        %p907 = pneg %p396
        %p908 = pneg %p420
        %p909 = pneg %p417
        %p910 = pneg %p441
        %p911 = pneg %p438
        %p912 = pneg %p469
        %p913 = pneg %p466
        %s914 = sand.u32 %s456, 1
        %s915 = scalar_lea.sflag [#allocation4], %s914
        %s916 = sand.u32 %s456, 1
        %s917 = smul.addr %s916, 128
        %s918 = scalar_lea.vmem [#allocation26], %s917
        %s919 = smul.u32 8, %s50
        %s920 = smul.u32 %s50, 8
        %s921 = ssub.s32 %s920, 1
        %p922 = scmp.gt.s32.totalorder %s921, 0
        %s923 = scalar_select %p922, %s921, 0
        %s924 = sadd.s32 %s50, 1
        %s925 = smul.u32 %s924, 8
        %p926 = scmp.lt.s32.totalorder %s925, 15
        %s927 = scalar_select %p926, %s925, 15
        %s928 = smul.u32 8, %s50
        %s929 = smul.u32 %s50, 8
        %s930 = ssub.s32 %s929, 1
        %p931 = scmp.gt.s32.totalorder %s930, 0
        %s932 = scalar_select %p931, %s930, 0
        %s933 = sadd.s32 %s50, 1
        %s934 = smul.u32 %s933, 8
        %p935 = scmp.lt.s32.totalorder %s934, 15
        %s936 = scalar_select %p935, %s934, 15
        %s937 = smul.u32 8, %s50
        %v939 = vld [vmem:[%s766] sm:$0xf]
        %v940 = vld [vmem:[%s766 + $0x4] sm:$0xf]
        %v941 = vld [vmem:[%s766 + $0x8] sm:$0xf]
        %v942 = vld [vmem:[%s766 + $0xc] sm:$0xf]
        %v943 = vld [vmem:[%s766 + $0x10] sm:$0xf]
        %v944 = vld [vmem:[%s766 + $0x14] sm:$0xf]
        %v945 = vld [vmem:[%s766 + $0x18] sm:$0xf]
        %v946 = vld [vmem:[%s766 + $0x1c] sm:$0xf]
        %v947 = vld [vmem:[%s766 + $0x20] sm:$0xf]
        %v948 = vld [vmem:[%s766 + $0x24] sm:$0xf]
        %v949 = vld [vmem:[%s766 + $0x28] sm:$0xf]
        %v950 = vld [vmem:[%s766 + $0x2c] sm:$0xf]
        %v951 = vld [vmem:[%s766 + $0x30] sm:$0xf]
        %v952 = vld [vmem:[%s766 + $0x34] sm:$0xf]
        %v953 = vld [vmem:[%s766 + $0x38] sm:$0xf]
        %v954 = vld [vmem:[%s766 + $0x3c] sm:$0xf]
        %v955 = vld [vmem:[%s793] sm:$0xf]
        %v956 = vld [vmem:[%s793 + $0x4] sm:$0xf]
        %v957 = vld [vmem:[%s793 + $0x8] sm:$0xf]
        %v958 = vld [vmem:[%s793 + $0xc] sm:$0xf]
        %v959 = vld [vmem:[%s793 + $0x10] sm:$0xf]
        %v960 = vld [vmem:[%s793 + $0x14] sm:$0xf]
        %v961 = vld [vmem:[%s793 + $0x18] sm:$0xf]
        %v962 = vld [vmem:[%s793 + $0x1c] sm:$0xf]
        %v963 = vld [vmem:[%s793 + $0x20] sm:$0xf]
        %v964 = vld [vmem:[%s793 + $0x24] sm:$0xf]
        %v965 = vld [vmem:[%s793 + $0x28] sm:$0xf]
        %v966 = vld [vmem:[%s793 + $0x2c] sm:$0xf]
        %v967 = vld [vmem:[%s793 + $0x30] sm:$0xf]
        %v968 = vld [vmem:[%s793 + $0x34] sm:$0xf]
        %v969 = vld [vmem:[%s793 + $0x38] sm:$0xf]
        %v970 = vld [vmem:[%s793 + $0x3c] sm:$0xf]
        %v971 = vld [vmem:[%s775] sm:$0xf]
        %v972 = vld [vmem:[%s775 + $0x4] sm:$0xf]
        %v973 = vld [vmem:[%s784] sm:$0xf]
        %v974 = vld [vmem:[%s784 + $0x4] sm:$0xf]
        %v977 = vunpack.c.l.b16 %v971
        %v978 = vunpack.c.l.b16 %v972
        %v979 = vpack.c.b16 %v978, %v977
        %v996 = vunpack.c.l.b16 %v939
        %v997 = vunpack.c.l.b16 %v940
        %v998 = vunpack.c.l.b16 %v941
        %v999 = vunpack.c.l.b16 %v942
        %v1000 = vunpack.c.l.b16 %v943
        %v1001 = vunpack.c.l.b16 %v944
        %v1002 = vunpack.c.l.b16 %v945
        %v1003 = vunpack.c.l.b16 %v946
        %v1004 = vunpack.c.l.b16 %v947
        %v1005 = vunpack.c.l.b16 %v948
        %v1006 = vunpack.c.l.b16 %v949
        %v1007 = vunpack.c.l.b16 %v950
        %v1008 = vunpack.c.l.b16 %v951
        %v1009 = vunpack.c.l.b16 %v952
        %v1010 = vunpack.c.l.b16 %v953
        %v1011 = vunpack.c.l.b16 %v954
        %v1012 = vpack.c.b16 %v997, %v996
        %v1013 = vpack.c.b16 %v999, %v998
        %v1014 = vpack.c.b16 %v1001, %v1000
        %v1015 = vpack.c.b16 %v1003, %v1002
        %v1016 = vpack.c.b16 %v1005, %v1004
        %v1017 = vpack.c.b16 %v1007, %v1006
        %v1018 = vpack.c.b16 %v1009, %v1008
        %v1019 = vpack.c.b16 %v1011, %v1010
        %v1022 = vunpack.c.l.b16 %v973
        %v1023 = vunpack.c.l.b16 %v974
        %v1024 = vpack.c.b16 %v1023, %v1022
        %v1025 = vld [vmem:[%s802] sm:$0xf]
        %v1026 = vld [vmem:[%s802 + $0x4] sm:$0xf]
        %v1027 = vld [vmem:[%s811] sm:$0xf]
        %v1028 = vld [vmem:[%s811 + $0x4] sm:$0xf]
        %v1031 = vunpack.c.l.b16 %v1025
        %v1032 = vunpack.c.l.b16 %v1026
        %v1033 = vpack.c.b16 %v1032, %v1031
        %v1050 = vunpack.c.l.b16 %v955
        %v1051 = vunpack.c.l.b16 %v956
        %v1052 = vunpack.c.l.b16 %v957
        %v1053 = vunpack.c.l.b16 %v958
        %v1054 = vunpack.c.l.b16 %v959
        %v1055 = vunpack.c.l.b16 %v960
        %v1056 = vunpack.c.l.b16 %v961
        %v1057 = vunpack.c.l.b16 %v962
        %v1058 = vunpack.c.l.b16 %v963
        %v1059 = vunpack.c.l.b16 %v964
        %v1060 = vunpack.c.l.b16 %v965
        %v1061 = vunpack.c.l.b16 %v966
        %v1062 = vunpack.c.l.b16 %v967
        %v1063 = vunpack.c.l.b16 %v968
        %v1064 = vunpack.c.l.b16 %v969
        %v1065 = vunpack.c.l.b16 %v970
        %v1066 = vpack.c.b16 %v1051, %v1050
        %v1067 = vpack.c.b16 %v1053, %v1052
        %v1068 = vpack.c.b16 %v1055, %v1054
        %v1069 = vpack.c.b16 %v1057, %v1056
        %v1070 = vpack.c.b16 %v1059, %v1058
        %v1071 = vpack.c.b16 %v1061, %v1060
        %v1072 = vpack.c.b16 %v1063, %v1062
        %v1073 = vpack.c.b16 %v1065, %v1064
        %v1076 = vunpack.c.l.b16 %v1027
        %v1077 = vunpack.c.l.b16 %v1028
        %v1078 = vpack.c.b16 %v1077, %v1076
        %v1079 = vlaneseq
        %v1080 = vshrl.u32 %v1079, 7
        %v1081 = vadd.s32 %v1080, 8
        %v1082 = vadd.s32 %v1080, 16
        %v1083 = vadd.s32 %v1080, 24
        %v1084 = vadd.s32 %v1080, 32
        %v1085 = vadd.s32 %v1080, 40
        %v1086 = vadd.s32 %v1080, 48
        %v1087 = vadd.s32 %v1080, 56
        %v1088 = vadd.s32 %v1080, 64
        %v1089 = vadd.s32 %v1080, 72
        %v1090 = vadd.s32 %v1080, 80
        %v1091 = vadd.s32 %v1080, 88
        %v1092 = vadd.s32 %v1080, 96
        %v1093 = vadd.s32 %v1080, 104
        %v1094 = vadd.s32 %v1080, 112
        %v1095 = vadd.s32 %v1080, 120
        %v1096 = vadd.s32 %v1080, 128
        %v1097 = vadd.s32 %v1080, 136
        %v1098 = vadd.s32 %v1080, 144
        %v1099 = vadd.s32 %v1080, 152
        %vm1100 = vcmp.lt.s32.totalorder %v1080, 16
        %vm1101 = vcmp.lt.s32.totalorder %v1081, 16
        %vm1102 = vcmp.lt.s32.totalorder %v1082, 16
        %vm1103 = vcmp.lt.s32.totalorder %v1083, 16
        %vm1104 = vcmp.lt.s32.totalorder %v1084, 16
        %vm1105 = vcmp.lt.s32.totalorder %v1085, 16
        %vm1106 = vcmp.lt.s32.totalorder %v1086, 16
        %vm1107 = vcmp.lt.s32.totalorder %v1087, 16
        %vm1108 = vcmp.lt.s32.totalorder %v1088, 16
        %vm1109 = vcmp.lt.s32.totalorder %v1089, 16
        %vm1110 = vcmp.lt.s32.totalorder %v1090, 16
        %vm1111 = vcmp.lt.s32.totalorder %v1091, 16
        %vm1112 = vcmp.lt.s32.totalorder %v1092, 16
        %vm1113 = vcmp.lt.s32.totalorder %v1093, 16
        %vm1114 = vcmp.lt.s32.totalorder %v1094, 16
        %vm1115 = vcmp.lt.s32.totalorder %v1095, 16
        %vm1116 = vcmp.lt.s32.totalorder %v1096, 16
        %vm1117 = vcmp.lt.s32.totalorder %v1097, 16
        %vm1118 = vcmp.lt.s32.totalorder %v1098, 16
        %vm1119 = vcmp.lt.s32.totalorder %v1099, 16
        %p1120 = scmp.eq.s32.totalorder %s50, 0
        %s1121 = scalar_select %p1120, 1, 0
        %v1122 = vstv %s1121
        %vm1123 = vcmp.eq.s32.totalorder %v1122, 1
        %vm1124 = vmand %vm1100, %vm1123
        %vm1125 = vmand %vm1101, %vm1123
        %vm1126 = vmand %vm1102, %vm1123
        %vm1127 = vmand %vm1103, %vm1123
        %vm1128 = vmand %vm1104, %vm1123
        %vm1129 = vmand %vm1105, %vm1123
        %vm1130 = vmand %vm1106, %vm1123
        %vm1131 = vmand %vm1107, %vm1123
        %vm1132 = vmand %vm1108, %vm1123
        %vm1133 = vmand %vm1109, %vm1123
        %vm1134 = vmand %vm1110, %vm1123
        %vm1135 = vmand %vm1111, %vm1123
        %vm1136 = vmand %vm1112, %vm1123
        %vm1137 = vmand %vm1113, %vm1123
        %vm1138 = vmand %vm1114, %vm1123
        %vm1139 = vmand %vm1115, %vm1123
        %vm1140 = vmand %vm1116, %vm1123
        %vm1141 = vmand %vm1117, %vm1123
        %vm1142 = vmand %vm1118, %vm1123
        %vm1143 = vmand %vm1119, %vm1123
        %vm1144 = vcmp.ge.s32.totalorder %v1080, 144
        %vm1145 = vcmp.ge.s32.totalorder %v1081, 144
        %vm1146 = vcmp.ge.s32.totalorder %v1082, 144
        %vm1147 = vcmp.ge.s32.totalorder %v1083, 144
        %vm1148 = vcmp.ge.s32.totalorder %v1084, 144
        %vm1149 = vcmp.ge.s32.totalorder %v1085, 144
        %vm1150 = vcmp.ge.s32.totalorder %v1086, 144
        %vm1151 = vcmp.ge.s32.totalorder %v1087, 144
        %vm1152 = vcmp.ge.s32.totalorder %v1088, 144
        %vm1153 = vcmp.ge.s32.totalorder %v1089, 144
        %vm1154 = vcmp.ge.s32.totalorder %v1090, 144
        %vm1155 = vcmp.ge.s32.totalorder %v1091, 144
        %vm1156 = vcmp.ge.s32.totalorder %v1092, 144
        %vm1157 = vcmp.ge.s32.totalorder %v1093, 144
        %vm1158 = vcmp.ge.s32.totalorder %v1094, 144
        %vm1159 = vcmp.ge.s32.totalorder %v1095, 144
        %vm1160 = vcmp.ge.s32.totalorder %v1096, 144
        %vm1161 = vcmp.ge.s32.totalorder %v1097, 144
        %vm1162 = vcmp.ge.s32.totalorder %v1098, 144
        %vm1163 = vcmp.ge.s32.totalorder %v1099, 144
        %p1164 = scmp.eq.s32.totalorder %s50, 1
        %s1165 = scalar_select %p1164, 1, 0
        %v1166 = vstv %s1165
        %vm1167 = vcmp.eq.s32.totalorder %v1166, 1
        %vm1168 = vmand %vm1144, %vm1167
        %vm1169 = vmand %vm1145, %vm1167
        %vm1170 = vmand %vm1146, %vm1167
        %vm1171 = vmand %vm1147, %vm1167
        %vm1172 = vmand %vm1148, %vm1167
        %vm1173 = vmand %vm1149, %vm1167
        %vm1174 = vmand %vm1150, %vm1167
        %vm1175 = vmand %vm1151, %vm1167
        %vm1176 = vmand %vm1152, %vm1167
        %vm1177 = vmand %vm1153, %vm1167
        %vm1178 = vmand %vm1154, %vm1167
        %vm1179 = vmand %vm1155, %vm1167
        %vm1180 = vmand %vm1156, %vm1167
        %vm1181 = vmand %vm1157, %vm1167
        %vm1182 = vmand %vm1158, %vm1167
        %vm1183 = vmand %vm1159, %vm1167
        %vm1184 = vmand %vm1160, %vm1167
        %vm1185 = vmand %vm1161, %vm1167
        %vm1186 = vmand %vm1162, %vm1167
        %vm1187 = vmand %vm1163, %vm1167
        %vm1188 = vmor %vm1124, %vm1168
        %vm1189 = vmor %vm1125, %vm1169
        %vm1190 = vmor %vm1126, %vm1170
        %vm1191 = vmor %vm1127, %vm1171
        %vm1192 = vmor %vm1128, %vm1172
        %vm1193 = vmor %vm1129, %vm1173
        %vm1194 = vmor %vm1130, %vm1174
        %vm1195 = vmor %vm1131, %vm1175
        %vm1196 = vmor %vm1132, %vm1176
        %vm1197 = vmor %vm1133, %vm1177
        %vm1198 = vmor %vm1134, %vm1178
        %vm1199 = vmor %vm1135, %vm1179
        %vm1200 = vmor %vm1136, %vm1180
        %vm1201 = vmor %vm1137, %vm1181
        %vm1202 = vmor %vm1138, %vm1182
        %vm1203 = vmor %vm1139, %vm1183
        %vm1204 = vmor %vm1140, %vm1184
        %vm1205 = vmor %vm1141, %vm1185
        %vm1206 = vmor %vm1142, %vm1186
        %vm1207 = vmor %vm1143, %vm1187
        %v1208 = vld [vmem:[#allocation22] sm:$0xf]
        %v1209 = vld [vmem:[#allocation22 + $0x4] sm:$0xf]
        %v1210 = vld [vmem:[#allocation23] sm:$0xf]
        %v1211 = vld [vmem:[#allocation23 + $0x4] sm:$0xf]
        %v1214 = vunpack.c.l.b16 %v1210
        %v1215 = vunpack.c.l.b16 %v1211
        %v1216 = vpack.c.b16 %v1215, %v1214
        %vm1218 = vcmask 130048
        %v1220 = vsel %vm1218, %v1066, 0
        %v1223 = vsel %vm1218, %v1067, 0
        %v1226 = vsel %vm1218, %v1068, 0
        %v1229 = vsel %vm1218, %v1069, 0
        %v1232 = vsel %vm1218, %v1070, 0
        %v1235 = vsel %vm1218, %v1071, 0
        %v1238 = vsel %vm1218, %v1072, 0
        %v1241 = vsel %vm1218, %v1073, 0
        %1243 = vmatprep.subr.bf16.mxu0 0
        %1244 = vmatpush1.bf16.msra.mxu0 %v1216
        %1245 = vmatprep.subr.bf16.mxu0 0
        %1246 = vmatpush1.bf16.msra.mxu0 0
        %1247 = vmatprep.subr.bf16.mxu0 0
        %1248 = vmatpush1.bf16.msra.mxu0 0
        %1249 = vmatprep.subr.bf16.mxu0 0
        %1250 = vmatpush1.bf16.msra.mxu0 0
        %1251 = vmatprep.subr.bf16.mxu0 0
        %1252 = vmatpush1.bf16.msra.mxu0 0
        %1253 = vmatprep.subr.bf16.mxu0 0
        %1254 = vmatpush1.bf16.msra.mxu0 0
        %1255 = vmatprep.subr.bf16.mxu0 0
        %1256 = vmatpush1.bf16.msra.mxu0 0
        %1257 = vmatprep.subr.bf16.mxu0 0
        %1258 = vmatpush1.bf16.msra.mxu0 0
        %1259 = vmatprep.subr.bf16.mxu0 0
        %1260 = vmatpush1.bf16.msra.mxu0 0
        %1261 = vmatprep.subr.bf16.mxu0 0
        %1262 = vmatpush1.bf16.msra.mxu0 0
        %1263 = vmatprep.subr.bf16.mxu0 0
        %1264 = vmatpush1.bf16.msra.mxu0 0
        %1265 = vmatprep.subr.bf16.mxu0 0
        %1266 = vmatpush1.bf16.msra.mxu0 0
        %1267 = vmatprep.subr.bf16.mxu0 0
        %1268 = vmatpush1.bf16.msra.mxu0 0
        %1269 = vmatprep.subr.bf16.mxu0 0
        %1270 = vmatpush1.bf16.msra.mxu0 0
        %1271 = vmatprep.subr.bf16.mxu0 0
        %1272 = vmatpush1.bf16.msra.mxu0 0
        %1273 = vmatprep.subr.bf16.mxu0 0
        %1274 = vmatpush1.bf16.msra.mxu0 0
        %1275 = vmatprep.mubr.bf16.mxu0 0
        %1276 = vmatmul.mubr.bf16.gmra.mrb[0].mxu0 %v1220
        %v1277 = vpop.f32.mrb[0].mxu0
        %v1278 = vadd.f32 0.0, %v1277
        %v1279 = vpop.f32.mrb[0].mxu0
        %v1280 = vpop.f32.mrb[0].mxu0
        %v1281 = vadd.f32 0.0, %v1280
        %v1282 = vpop.f32.mrb[0].mxu0
        %1283 = vmatprep.mubr.bf16.mxu0 0
        %1284 = vmatmul.mubr.bf16.gmra.mrb[0].mxu0 %v1223
        %v1285 = vpop.f32.mrb[0].mxu0
        %v1286 = vadd.f32 0.0, %v1285
        %v1287 = vpop.f32.mrb[0].mxu0
        %v1288 = vpop.f32.mrb[0].mxu0
        %v1289 = vadd.f32 0.0, %v1288
        %v1290 = vpop.f32.mrb[0].mxu0
        %1291 = vmatprep.mubr.bf16.mxu0 0
        %1292 = vmatmul.mubr.bf16.gmra.mrb[0].mxu0 %v1226
        %v1293 = vpop.f32.mrb[0].mxu0
        %v1294 = vadd.f32 0.0, %v1293
        %v1295 = vpop.f32.mrb[0].mxu0
        %v1296 = vpop.f32.mrb[0].mxu0
        %v1297 = vadd.f32 0.0, %v1296
        %v1298 = vpop.f32.mrb[0].mxu0
        %1299 = vmatprep.mubr.bf16.mxu0 0
        %1300 = vmatmul.mubr.bf16.gmra.mrb[0].mxu0 %v1229
        %v1301 = vpop.f32.mrb[0].mxu0
        %v1302 = vadd.f32 0.0, %v1301
        %v1303 = vpop.f32.mrb[0].mxu0
        %v1304 = vpop.f32.mrb[0].mxu0
        %v1305 = vadd.f32 0.0, %v1304
        %v1306 = vpop.f32.mrb[0].mxu0
        %1307 = vmatprep.mubr.bf16.mxu0 0
        %1308 = vmatmul.mubr.bf16.gmra.mrb[0].mxu0 %v1232
        %v1309 = vpop.f32.mrb[0].mxu0
        %v1310 = vadd.f32 0.0, %v1309
        %v1311 = vpop.f32.mrb[0].mxu0
        %v1312 = vpop.f32.mrb[0].mxu0
        %v1313 = vadd.f32 0.0, %v1312
        %v1314 = vpop.f32.mrb[0].mxu0
        %1315 = vmatprep.mubr.bf16.mxu0 0
        %1316 = vmatmul.mubr.bf16.gmra.mrb[0].mxu0 %v1235
        %v1317 = vpop.f32.mrb[0].mxu0
        %v1318 = vadd.f32 0.0, %v1317
        %v1319 = vpop.f32.mrb[0].mxu0
        %v1320 = vpop.f32.mrb[0].mxu0
        %v1321 = vadd.f32 0.0, %v1320
        %v1322 = vpop.f32.mrb[0].mxu0
        %1323 = vmatprep.mubr.bf16.mxu0 0
        %1324 = vmatmul.mubr.bf16.gmra.mrb[0].mxu0 %v1238
        %v1325 = vpop.f32.mrb[0].mxu0
        %v1326 = vadd.f32 0.0, %v1325
        %v1327 = vpop.f32.mrb[0].mxu0
        %v1328 = vpop.f32.mrb[0].mxu0
        %v1329 = vadd.f32 0.0, %v1328
        %v1330 = vpop.f32.mrb[0].mxu0
        %1331 = vmatprep.mubr.bf16.mxu0 0
        %1332 = vmatmul.mubr.bf16.gmra.mrb[0].mxu0 %v1241
        %v1333 = vpop.f32.mrb[0].mxu0
        %v1334 = vadd.f32 0.0, %v1333
        %v1335 = vpop.f32.mrb[0].mxu0
        %v1336 = vpop.f32.mrb[0].mxu0
        %v1337 = vadd.f32 0.0, %v1336
        %v1338 = vpop.f32.mrb[0].mxu0
        %1339 = vdwg.mxu0
        %v1342 = vunpack.c.l.b16 %v1208
        %v1343 = vunpack.c.l.b16 %v1209
        %v1344 = vpack.c.b16 %v1343, %v1342
        %v1347 = vsel %vm1218, %v1012, 0
        %v1350 = vsel %vm1218, %v1013, 0
        %v1353 = vsel %vm1218, %v1014, 0
        %v1356 = vsel %vm1218, %v1015, 0
        %v1359 = vsel %vm1218, %v1016, 0
        %v1362 = vsel %vm1218, %v1017, 0
        %v1365 = vsel %vm1218, %v1018, 0
        %v1368 = vsel %vm1218, %v1019, 0
        %1370 = vmatprep.subr.bf16.mxu0 0
        %1371 = vmatpush1.bf16.msra.mxu0 %v1344
        %1372 = vmatprep.subr.bf16.mxu0 0
        %1373 = vmatpush1.bf16.msra.mxu0 0
        %1374 = vmatprep.subr.bf16.mxu0 0
        %1375 = vmatpush1.bf16.msra.mxu0 0
        %1376 = vmatprep.subr.bf16.mxu0 0
        %1377 = vmatpush1.bf16.msra.mxu0 0
        %1378 = vmatprep.subr.bf16.mxu0 0
        %1379 = vmatpush1.bf16.msra.mxu0 0
        %1380 = vmatprep.subr.bf16.mxu0 0
        %1381 = vmatpush1.bf16.msra.mxu0 0
        %1382 = vmatprep.subr.bf16.mxu0 0
        %1383 = vmatpush1.bf16.msra.mxu0 0
        %1384 = vmatprep.subr.bf16.mxu0 0
        %1385 = vmatpush1.bf16.msra.mxu0 0
        %1386 = vmatprep.subr.bf16.mxu0 0
        %1387 = vmatpush1.bf16.msra.mxu0 0
        %1388 = vmatprep.subr.bf16.mxu0 0
        %1389 = vmatpush1.bf16.msra.mxu0 0
        %1390 = vmatprep.subr.bf16.mxu0 0
        %1391 = vmatpush1.bf16.msra.mxu0 0
        %1392 = vmatprep.subr.bf16.mxu0 0
        %1393 = vmatpush1.bf16.msra.mxu0 0
        %1394 = vmatprep.subr.bf16.mxu0 0
        %1395 = vmatpush1.bf16.msra.mxu0 0
        %1396 = vmatprep.subr.bf16.mxu0 0
        %1397 = vmatpush1.bf16.msra.mxu0 0
        %1398 = vmatprep.subr.bf16.mxu0 0
        %1399 = vmatpush1.bf16.msra.mxu0 0
        %1400 = vmatprep.subr.bf16.mxu0 0
        %1401 = vmatpush1.bf16.msra.mxu0 0
        %1402 = vmatprep.mubr.bf16.mxu0 0
        %1403 = vmatmul.mubr.bf16.gmra.mrb[0].mxu0 %v1347
        %v1404 = vpop.f32.mrb[0].mxu0
        %v1405 = vadd.f32 %v1278, %v1404
        %v1406 = vpop.f32.mrb[0].mxu0
        %v1407 = vpop.f32.mrb[0].mxu0
        %v1408 = vadd.f32 %v1281, %v1407
        %v1409 = vpop.f32.mrb[0].mxu0
        %1410 = vmatprep.mubr.bf16.mxu0 0
        %1411 = vmatmul.mubr.bf16.gmra.mrb[0].mxu0 %v1350
        %v1412 = vpop.f32.mrb[0].mxu0
        %v1413 = vadd.f32 %v1286, %v1412
        %v1414 = vpop.f32.mrb[0].mxu0
        %v1415 = vpop.f32.mrb[0].mxu0
        %v1416 = vadd.f32 %v1289, %v1415
        %v1417 = vpop.f32.mrb[0].mxu0
        %1418 = vmatprep.mubr.bf16.mxu0 0
        %1419 = vmatmul.mubr.bf16.gmra.mrb[0].mxu0 %v1353
        %v1420 = vpop.f32.mrb[0].mxu0
        %v1421 = vadd.f32 %v1294, %v1420
        %v1422 = vpop.f32.mrb[0].mxu0
        %v1423 = vpop.f32.mrb[0].mxu0
        %v1424 = vadd.f32 %v1297, %v1423
        %v1425 = vpop.f32.mrb[0].mxu0
        %1426 = vmatprep.mubr.bf16.mxu0 0
        %1427 = vmatmul.mubr.bf16.gmra.mrb[0].mxu0 %v1356
        %v1428 = vpop.f32.mrb[0].mxu0
        %v1429 = vadd.f32 %v1302, %v1428
        %v1430 = vpop.f32.mrb[0].mxu0
        %v1431 = vpop.f32.mrb[0].mxu0
        %v1432 = vadd.f32 %v1305, %v1431
        %v1433 = vpop.f32.mrb[0].mxu0
        %1434 = vmatprep.mubr.bf16.mxu0 0
        %1435 = vmatmul.mubr.bf16.gmra.mrb[0].mxu0 %v1359
        %v1436 = vpop.f32.mrb[0].mxu0
        %v1437 = vadd.f32 %v1310, %v1436
        %v1438 = vpop.f32.mrb[0].mxu0
        %v1439 = vpop.f32.mrb[0].mxu0
        %v1440 = vadd.f32 %v1313, %v1439
        %v1441 = vpop.f32.mrb[0].mxu0
        %1442 = vmatprep.mubr.bf16.mxu0 0
        %1443 = vmatmul.mubr.bf16.gmra.mrb[0].mxu0 %v1362
        %v1444 = vpop.f32.mrb[0].mxu0
        %v1445 = vadd.f32 %v1318, %v1444
        %v1446 = vpop.f32.mrb[0].mxu0
        %v1447 = vpop.f32.mrb[0].mxu0
        %v1448 = vadd.f32 %v1321, %v1447
        %v1449 = vpop.f32.mrb[0].mxu0
        %1450 = vmatprep.mubr.bf16.mxu0 0
        %1451 = vmatmul.mubr.bf16.gmra.mrb[0].mxu0 %v1365
        %v1452 = vpop.f32.mrb[0].mxu0
        %v1453 = vadd.f32 %v1326, %v1452
        %v1454 = vpop.f32.mrb[0].mxu0
        %v1455 = vpop.f32.mrb[0].mxu0
        %v1456 = vadd.f32 %v1329, %v1455
        %v1457 = vpop.f32.mrb[0].mxu0
        %1458 = vmatprep.mubr.bf16.mxu0 0
        %1459 = vmatmul.mubr.bf16.gmra.mrb[0].mxu0 %v1368
        %v1460 = vpop.f32.mrb[0].mxu0
        %v1461 = vadd.f32 %v1334, %v1460
        %v1462 = vpop.f32.mrb[0].mxu0
        %v1463 = vpop.f32.mrb[0].mxu0
        %v1464 = vadd.f32 %v1337, %v1463
        %v1465 = vpop.f32.mrb[0].mxu0
        %1466 = vdwg.mxu0
        %v1467 = vld [vmem:[#allocation25] sm:$0x1]
        %v1469 = vlaneseq
        %v1470 = vshrl.u32 %v1469, 7
        %v1471 = vsub.s32 0, %v1470
        %v1472 = vrot.slane %v1467, %v1471
        %v1474 = vadd.f32 %v1405, %v1472
        %v1475 = vadd.f32 %v1408, %v1472
        %v1476 = vadd.f32 %v1413, %v1472
        %v1477 = vadd.f32 %v1416, %v1472
        %v1478 = vadd.f32 %v1421, %v1472
        %v1479 = vadd.f32 %v1424, %v1472
        %v1480 = vadd.f32 %v1429, %v1472
        %v1481 = vadd.f32 %v1432, %v1472
        %v1482 = vadd.f32 %v1437, %v1472
        %v1483 = vadd.f32 %v1440, %v1472
        %v1484 = vadd.f32 %v1445, %v1472
        %v1485 = vadd.f32 %v1448, %v1472
        %v1486 = vadd.f32 %v1453, %v1472
        %v1487 = vadd.f32 %v1456, %v1472
        %v1488 = vadd.f32 %v1461, %v1472
        %v1489 = vadd.f32 %v1464, %v1472
        %v1490 = vld [vmem:[#allocation13] sm:$0xf]
        %v1491 = vld [vmem:[#allocation13 + $0x4] sm:$0xf]
        %v1492 = vld [vmem:[#allocation14] sm:$0xf]
        %v1493 = vld [vmem:[#allocation14 + $0x4] sm:$0xf]
        %v1496 = vunpack.c.l.b16 %v1492
        %v1497 = vunpack.c.l.b16 %v1493
        %v1498 = vpack.c.b16 %v1497, %v1496
        %v1501 = vsel %vm1218, %v1033, 0
        %v1504 = vsel %vm1218, %v1078, 0
        %1506 = vmatprep.subr.bf16.mxu0 0
        %1507 = vmatpush1.bf16.msra.mxu0 %v1498
        %1508 = vmatprep.subr.bf16.mxu0 0
        %1509 = vmatpush1.bf16.msra.mxu0 0
        %1510 = vmatprep.subr.bf16.mxu0 0
        %1511 = vmatpush1.bf16.msra.mxu0 0
        %1512 = vmatprep.subr.bf16.mxu0 0
        %1513 = vmatpush1.bf16.msra.mxu0 0
        %1514 = vmatprep.subr.bf16.mxu0 0
        %1515 = vmatpush1.bf16.msra.mxu0 0
        %1516 = vmatprep.subr.bf16.mxu0 0
        %1517 = vmatpush1.bf16.msra.mxu0 0
        %1518 = vmatprep.subr.bf16.mxu0 0
        %1519 = vmatpush1.bf16.msra.mxu0 0
        %1520 = vmatprep.subr.bf16.mxu0 0
        %1521 = vmatpush1.bf16.msra.mxu0 0
        %1522 = vmatprep.subr.bf16.mxu0 0
        %1523 = vmatpush1.bf16.msra.mxu0 0
        %1524 = vmatprep.subr.bf16.mxu0 0
        %1525 = vmatpush1.bf16.msra.mxu0 0
        %1526 = vmatprep.subr.bf16.mxu0 0
        %1527 = vmatpush1.bf16.msra.mxu0 0
        %1528 = vmatprep.subr.bf16.mxu0 0
        %1529 = vmatpush1.bf16.msra.mxu0 0
        %1530 = vmatprep.subr.bf16.mxu0 0
        %1531 = vmatpush1.bf16.msra.mxu0 0
        %1532 = vmatprep.subr.bf16.mxu0 0
        %1533 = vmatpush1.bf16.msra.mxu0 0
        %1534 = vmatprep.subr.bf16.mxu0 0
        %1535 = vmatpush1.bf16.msra.mxu0 0
        %1536 = vmatprep.subr.bf16.mxu0 0
        %1537 = vmatpush1.bf16.msra.mxu0 0
        %1538 = vmatprep.mubr.bf16.mxu0 0
        %1539 = vmatmul.mubr.bf16.gmra.mrb[0].mxu0 %v1501
        %v1540 = vpop.f32.mrb[0].mxu0
        %v1541 = vadd.f32 0.0, %v1540
        %v1542 = vpop.f32.mrb[0].mxu0
        %v1543 = vpop.f32.mrb[0].mxu0
        %v1544 = vadd.f32 0.0, %v1543
        %v1545 = vpop.f32.mrb[0].mxu0
        %1546 = vmatprep.mubr.bf16.mxu0 0
        %1547 = vmatmul.mubr.bf16.gmra.mrb[0].mxu0 %v1220
        %v1548 = vpop.f32.mrb[0].mxu0
        %v1549 = vadd.f32 0.0, %v1548
        %v1550 = vpop.f32.mrb[0].mxu0
        %v1551 = vpop.f32.mrb[0].mxu0
        %v1552 = vadd.f32 0.0, %v1551
        %v1553 = vpop.f32.mrb[0].mxu0
        %1554 = vmatprep.mubr.bf16.mxu0 0
        %1555 = vmatmul.mubr.bf16.gmra.mrb[0].mxu0 %v1223
        %v1556 = vpop.f32.mrb[0].mxu0
        %v1557 = vadd.f32 0.0, %v1556
        %v1558 = vpop.f32.mrb[0].mxu0
        %v1559 = vpop.f32.mrb[0].mxu0
        %v1560 = vadd.f32 0.0, %v1559
        %v1561 = vpop.f32.mrb[0].mxu0
        %1562 = vmatprep.mubr.bf16.mxu0 0
        %1563 = vmatmul.mubr.bf16.gmra.mrb[0].mxu0 %v1226
        %v1564 = vpop.f32.mrb[0].mxu0
        %v1565 = vadd.f32 0.0, %v1564
        %v1566 = vpop.f32.mrb[0].mxu0
        %v1567 = vpop.f32.mrb[0].mxu0
        %v1568 = vadd.f32 0.0, %v1567
        %v1569 = vpop.f32.mrb[0].mxu0
        %1570 = vmatprep.mubr.bf16.mxu0 0
        %1571 = vmatmul.mubr.bf16.gmra.mrb[0].mxu0 %v1229
        %v1572 = vpop.f32.mrb[0].mxu0
        %v1573 = vadd.f32 0.0, %v1572
        %v1574 = vpop.f32.mrb[0].mxu0
        %v1575 = vpop.f32.mrb[0].mxu0
        %v1576 = vadd.f32 0.0, %v1575
        %v1577 = vpop.f32.mrb[0].mxu0
        %1578 = vmatprep.mubr.bf16.mxu0 0
        %1579 = vmatmul.mubr.bf16.gmra.mrb[0].mxu0 %v1232
        %v1580 = vpop.f32.mrb[0].mxu0
        %v1581 = vadd.f32 0.0, %v1580
        %v1582 = vpop.f32.mrb[0].mxu0
        %v1583 = vpop.f32.mrb[0].mxu0
        %v1584 = vadd.f32 0.0, %v1583
        %v1585 = vpop.f32.mrb[0].mxu0
        %1586 = vmatprep.mubr.bf16.mxu0 0
        %1587 = vmatmul.mubr.bf16.gmra.mrb[0].mxu0 %v1235
        %v1588 = vpop.f32.mrb[0].mxu0
        %v1589 = vadd.f32 0.0, %v1588
        %v1590 = vpop.f32.mrb[0].mxu0
        %v1591 = vpop.f32.mrb[0].mxu0
        %v1592 = vadd.f32 0.0, %v1591
        %v1593 = vpop.f32.mrb[0].mxu0
        %1594 = vmatprep.mubr.bf16.mxu0 0
        %1595 = vmatmul.mubr.bf16.gmra.mrb[0].mxu0 %v1238
        %v1596 = vpop.f32.mrb[0].mxu0
        %v1597 = vadd.f32 0.0, %v1596
        %v1598 = vpop.f32.mrb[0].mxu0
        %v1599 = vpop.f32.mrb[0].mxu0
        %v1600 = vadd.f32 0.0, %v1599
        %v1601 = vpop.f32.mrb[0].mxu0
        %1602 = vmatprep.mubr.bf16.mxu0 0
        %1603 = vmatmul.mubr.bf16.gmra.mrb[0].mxu0 %v1241
        %v1604 = vpop.f32.mrb[0].mxu0
        %v1605 = vadd.f32 0.0, %v1604
        %v1606 = vpop.f32.mrb[0].mxu0
        %v1607 = vpop.f32.mrb[0].mxu0
        %v1608 = vadd.f32 0.0, %v1607
        %v1609 = vpop.f32.mrb[0].mxu0
        %1610 = vmatprep.mubr.bf16.mxu0 0
        %1611 = vmatmul.mubr.bf16.gmra.mrb[0].mxu0 %v1504
        %v1612 = vpop.f32.mrb[0].mxu0
        %v1613 = vadd.f32 0.0, %v1612
        %v1614 = vpop.f32.mrb[0].mxu0
        %v1615 = vpop.f32.mrb[0].mxu0
        %v1616 = vadd.f32 0.0, %v1615
        %v1617 = vpop.f32.mrb[0].mxu0
        %1618 = vdwg.mxu0
        %v1621 = vunpack.c.l.b16 %v1490
        %v1622 = vunpack.c.l.b16 %v1491
        %v1623 = vpack.c.b16 %v1622, %v1621
        %v1626 = vsel %vm1218, %v979, 0
        %v1629 = vsel %vm1218, %v1024, 0
        %1631 = vmatprep.subr.bf16.mxu0 0
        %1632 = vmatpush1.bf16.msra.mxu0 %v1623
        %1633 = vmatprep.subr.bf16.mxu0 0
        %1634 = vmatpush1.bf16.msra.mxu0 0
        %1635 = vmatprep.subr.bf16.mxu0 0
        %1636 = vmatpush1.bf16.msra.mxu0 0
        %1637 = vmatprep.subr.bf16.mxu0 0
        %1638 = vmatpush1.bf16.msra.mxu0 0
        %1639 = vmatprep.subr.bf16.mxu0 0
        %1640 = vmatpush1.bf16.msra.mxu0 0
        %1641 = vmatprep.subr.bf16.mxu0 0
        %1642 = vmatpush1.bf16.msra.mxu0 0
        %1643 = vmatprep.subr.bf16.mxu0 0
        %1644 = vmatpush1.bf16.msra.mxu0 0
        %1645 = vmatprep.subr.bf16.mxu0 0
        %1646 = vmatpush1.bf16.msra.mxu0 0
        %1647 = vmatprep.subr.bf16.mxu0 0
        %1648 = vmatpush1.bf16.msra.mxu0 0
        %1649 = vmatprep.subr.bf16.mxu0 0
        %1650 = vmatpush1.bf16.msra.mxu0 0
        %1651 = vmatprep.subr.bf16.mxu0 0
        %1652 = vmatpush1.bf16.msra.mxu0 0
        %1653 = vmatprep.subr.bf16.mxu0 0
        %1654 = vmatpush1.bf16.msra.mxu0 0
        %1655 = vmatprep.subr.bf16.mxu0 0
        %1656 = vmatpush1.bf16.msra.mxu0 0
        %1657 = vmatprep.subr.bf16.mxu0 0
        %1658 = vmatpush1.bf16.msra.mxu0 0
        %1659 = vmatprep.subr.bf16.mxu0 0
        %1660 = vmatpush1.bf16.msra.mxu0 0
        %1661 = vmatprep.subr.bf16.mxu0 0
        %1662 = vmatpush1.bf16.msra.mxu0 0
        %1663 = vmatprep.mubr.bf16.mxu0 0
        %1664 = vmatmul.mubr.bf16.gmra.mrb[0].mxu0 %v1626
        %v1665 = vpop.f32.mrb[0].mxu0
        %v1666 = vadd.f32 %v1541, %v1665
        %v1667 = vpop.f32.mrb[0].mxu0
        %v1668 = vpop.f32.mrb[0].mxu0
        %v1669 = vadd.f32 %v1544, %v1668
        %v1670 = vpop.f32.mrb[0].mxu0
        %1671 = vmatprep.mubr.bf16.mxu0 0
        %1672 = vmatmul.mubr.bf16.gmra.mrb[0].mxu0 %v1347
        %v1673 = vpop.f32.mrb[0].mxu0
        %v1674 = vadd.f32 %v1549, %v1673
        %v1675 = vpop.f32.mrb[0].mxu0
        %v1676 = vpop.f32.mrb[0].mxu0
        %v1677 = vadd.f32 %v1552, %v1676
        %v1678 = vpop.f32.mrb[0].mxu0
        %1679 = vmatprep.mubr.bf16.mxu0 0
        %1680 = vmatmul.mubr.bf16.gmra.mrb[0].mxu0 %v1350
        %v1681 = vpop.f32.mrb[0].mxu0
        %v1682 = vadd.f32 %v1557, %v1681
        %v1683 = vpop.f32.mrb[0].mxu0
        %v1684 = vpop.f32.mrb[0].mxu0
        %v1685 = vadd.f32 %v1560, %v1684
        %v1686 = vpop.f32.mrb[0].mxu0
        %1687 = vmatprep.mubr.bf16.mxu0 0
        %1688 = vmatmul.mubr.bf16.gmra.mrb[0].mxu0 %v1353
        %v1689 = vpop.f32.mrb[0].mxu0
        %v1690 = vadd.f32 %v1565, %v1689
        %v1691 = vpop.f32.mrb[0].mxu0
        %v1692 = vpop.f32.mrb[0].mxu0
        %v1693 = vadd.f32 %v1568, %v1692
        %v1694 = vpop.f32.mrb[0].mxu0
        %1695 = vmatprep.mubr.bf16.mxu0 0
        %1696 = vmatmul.mubr.bf16.gmra.mrb[0].mxu0 %v1356
        %v1697 = vpop.f32.mrb[0].mxu0
        %v1698 = vadd.f32 %v1573, %v1697
        %v1699 = vpop.f32.mrb[0].mxu0
        %v1700 = vpop.f32.mrb[0].mxu0
        %v1701 = vadd.f32 %v1576, %v1700
        %v1702 = vpop.f32.mrb[0].mxu0
        %1703 = vmatprep.mubr.bf16.mxu0 0
        %1704 = vmatmul.mubr.bf16.gmra.mrb[0].mxu0 %v1359
        %v1705 = vpop.f32.mrb[0].mxu0
        %v1706 = vadd.f32 %v1581, %v1705
        %v1707 = vpop.f32.mrb[0].mxu0
        %v1708 = vpop.f32.mrb[0].mxu0
        %v1709 = vadd.f32 %v1584, %v1708
        %v1710 = vpop.f32.mrb[0].mxu0
        %1711 = vmatprep.mubr.bf16.mxu0 0
        %1712 = vmatmul.mubr.bf16.gmra.mrb[0].mxu0 %v1362
        %v1713 = vpop.f32.mrb[0].mxu0
        %v1714 = vadd.f32 %v1589, %v1713
        %v1715 = vpop.f32.mrb[0].mxu0
        %v1716 = vpop.f32.mrb[0].mxu0
        %v1717 = vadd.f32 %v1592, %v1716
        %v1718 = vpop.f32.mrb[0].mxu0
        %1719 = vmatprep.mubr.bf16.mxu0 0
        %1720 = vmatmul.mubr.bf16.gmra.mrb[0].mxu0 %v1365
        %v1721 = vpop.f32.mrb[0].mxu0
        %v1722 = vadd.f32 %v1597, %v1721
        %v1723 = vpop.f32.mrb[0].mxu0
        %v1724 = vpop.f32.mrb[0].mxu0
        %v1725 = vadd.f32 %v1600, %v1724
        %v1726 = vpop.f32.mrb[0].mxu0
        %1727 = vmatprep.mubr.bf16.mxu0 0
        %1728 = vmatmul.mubr.bf16.gmra.mrb[0].mxu0 %v1368
        %v1729 = vpop.f32.mrb[0].mxu0
        %v1730 = vadd.f32 %v1605, %v1729
        %v1731 = vpop.f32.mrb[0].mxu0
        %v1732 = vpop.f32.mrb[0].mxu0
        %v1733 = vadd.f32 %v1608, %v1732
        %v1734 = vpop.f32.mrb[0].mxu0
        %1735 = vmatprep.mubr.bf16.mxu0 0
        %1736 = vmatmul.mubr.bf16.gmra.mrb[0].mxu0 %v1629
        %v1737 = vpop.f32.mrb[0].mxu0
        %v1738 = vadd.f32 %v1613, %v1737
        %v1739 = vpop.f32.mrb[0].mxu0
        %v1740 = vpop.f32.mrb[0].mxu0
        %v1741 = vadd.f32 %v1616, %v1740
        %v1742 = vpop.f32.mrb[0].mxu0
        %1743 = vdwg.mxu0
        %v1744 = vld [vmem:[#allocation16] sm:$0x1]
        %v1746 = vlaneseq
        %v1747 = vshrl.u32 %v1746, 7
        %v1748 = vsub.s32 0, %v1747
        %v1749 = vrot.slane %v1744, %v1748
        %v1751 = vadd.f32 %v1666, %v1749
        %v1752 = vadd.f32 %v1669, %v1749
        %v1753 = vadd.f32 %v1674, %v1749
        %v1754 = vadd.f32 %v1677, %v1749
        %v1755 = vadd.f32 %v1682, %v1749
        %v1756 = vadd.f32 %v1685, %v1749
        %v1757 = vadd.f32 %v1690, %v1749
        %v1758 = vadd.f32 %v1693, %v1749
        %v1759 = vadd.f32 %v1698, %v1749
        %v1760 = vadd.f32 %v1701, %v1749
        %v1761 = vadd.f32 %v1706, %v1749
        %v1762 = vadd.f32 %v1709, %v1749
        %v1763 = vadd.f32 %v1714, %v1749
        %v1764 = vadd.f32 %v1717, %v1749
        %v1765 = vadd.f32 %v1722, %v1749
        %v1766 = vadd.f32 %v1725, %v1749
        %v1767 = vadd.f32 %v1730, %v1749
        %v1768 = vadd.f32 %v1733, %v1749
        %v1769 = vadd.f32 %v1738, %v1749
        %v1770 = vadd.f32 %v1741, %v1749
        %v1771 = vmax.f32 %v1751, 0.0
        %v1772 = vmax.f32 %v1752, 0.0
        %v1773 = vmax.f32 %v1753, 0.0
        %v1774 = vmax.f32 %v1754, 0.0
        %v1775 = vmax.f32 %v1755, 0.0
        %v1776 = vmax.f32 %v1756, 0.0
        %v1777 = vmax.f32 %v1757, 0.0
        %v1778 = vmax.f32 %v1758, 0.0
        %v1779 = vmax.f32 %v1759, 0.0
        %v1780 = vmax.f32 %v1760, 0.0
        %v1781 = vmax.f32 %v1761, 0.0
        %v1782 = vmax.f32 %v1762, 0.0
        %v1783 = vmax.f32 %v1763, 0.0
        %v1784 = vmax.f32 %v1764, 0.0
        %v1785 = vmax.f32 %v1765, 0.0
        %v1786 = vmax.f32 %v1766, 0.0
        %v1787 = vmax.f32 %v1767, 0.0
        %v1788 = vmax.f32 %v1768, 0.0
        %v1789 = vmax.f32 %v1769, 0.0
        %v1790 = vmax.f32 %v1770, 0.0
        %v1791 = vsel %vm1188, 1, 0
        %v1792 = vsel %vm1189, 1, 0
        %v1793 = vsel %vm1190, 1, 0
        %v1794 = vsel %vm1191, 1, 0
        %v1795 = vsel %vm1192, 1, 0
        %v1796 = vsel %vm1193, 1, 0
        %v1797 = vsel %vm1194, 1, 0
        %v1798 = vsel %vm1195, 1, 0
        %v1799 = vsel %vm1196, 1, 0
        %v1800 = vsel %vm1197, 1, 0
        %v1801 = vsel %vm1198, 1, 0
        %v1802 = vsel %vm1199, 1, 0
        %v1803 = vsel %vm1200, 1, 0
        %v1804 = vsel %vm1201, 1, 0
        %v1805 = vsel %vm1202, 1, 0
        %v1806 = vsel %vm1203, 1, 0
        %v1807 = vsel %vm1204, 1, 0
        %v1808 = vsel %vm1205, 1, 0
        %v1809 = vsel %vm1206, 1, 0
        %v1810 = vsel %vm1207, 1, 0
        %vm1811 = vcmp.eq.s32.totalorder %v1791, 1
        %vm1812 = vcmp.eq.s32.totalorder %v1792, 1
        %vm1813 = vcmp.eq.s32.totalorder %v1793, 1
        %vm1814 = vcmp.eq.s32.totalorder %v1794, 1
        %vm1815 = vcmp.eq.s32.totalorder %v1795, 1
        %vm1816 = vcmp.eq.s32.totalorder %v1796, 1
        %vm1817 = vcmp.eq.s32.totalorder %v1797, 1
        %vm1818 = vcmp.eq.s32.totalorder %v1798, 1
        %vm1819 = vcmp.eq.s32.totalorder %v1799, 1
        %vm1820 = vcmp.eq.s32.totalorder %v1800, 1
        %vm1821 = vcmp.eq.s32.totalorder %v1801, 1
        %vm1822 = vcmp.eq.s32.totalorder %v1802, 1
        %vm1823 = vcmp.eq.s32.totalorder %v1803, 1
        %vm1824 = vcmp.eq.s32.totalorder %v1804, 1
        %vm1825 = vcmp.eq.s32.totalorder %v1805, 1
        %vm1826 = vcmp.eq.s32.totalorder %v1806, 1
        %vm1827 = vcmp.eq.s32.totalorder %v1807, 1
        %vm1828 = vcmp.eq.s32.totalorder %v1808, 1
        %vm1829 = vcmp.eq.s32.totalorder %v1809, 1
        %vm1830 = vcmp.eq.s32.totalorder %v1810, 1
        %v1831 = vsel %vm1811, 0.0, %v1771
        %v1832 = vsel %vm1812, 0.0, %v1772
        %v1833 = vsel %vm1813, 0.0, %v1773
        %v1834 = vsel %vm1814, 0.0, %v1774
        %v1835 = vsel %vm1815, 0.0, %v1775
        %v1836 = vsel %vm1816, 0.0, %v1776
        %v1837 = vsel %vm1817, 0.0, %v1777
        %v1838 = vsel %vm1818, 0.0, %v1778
        %v1839 = vsel %vm1819, 0.0, %v1779
        %v1840 = vsel %vm1820, 0.0, %v1780
        %v1841 = vsel %vm1821, 0.0, %v1781
        %v1842 = vsel %vm1822, 0.0, %v1782
        %v1843 = vsel %vm1823, 0.0, %v1783
        %v1844 = vsel %vm1824, 0.0, %v1784
        %v1845 = vsel %vm1825, 0.0, %v1785
        %v1846 = vsel %vm1826, 0.0, %v1786
        %v1847 = vsel %vm1827, 0.0, %v1787
        %v1848 = vsel %vm1828, 0.0, %v1788
        %v1849 = vsel %vm1829, 0.0, %v1789
        %v1850 = vsel %vm1830, 0.0, %v1790
        %v1851 = vrot.slane %v1831, 7
        %v1852 = vrot.slane %v1832, 7
        %v1853 = vrot.slane %v1833, 7
        %v1854 = vrot.slane %v1834, 7
        %v1855 = vrot.slane %v1835, 7
        %v1856 = vrot.slane %v1836, 7
        %v1857 = vrot.slane %v1837, 7
        %v1858 = vrot.slane %v1838, 7
        %v1859 = vrot.slane %v1839, 7
        %v1860 = vrot.slane %v1840, 7
        %v1861 = vrot.slane %v1841, 7
        %v1862 = vrot.slane %v1842, 7
        %v1863 = vrot.slane %v1843, 7
        %v1864 = vrot.slane %v1844, 7
        %v1865 = vrot.slane %v1845, 7
        %v1866 = vrot.slane %v1846, 7
        %v1867 = vrot.slane %v1847, 7
        %v1868 = vrot.slane %v1848, 7
        %v1869 = vrot.slane %v1849, 7
        %v1870 = vrot.slane %v1850, 7
        %vm1871 = vcmp.lt.s32.totalorder %v1080, 1
        %v1872 = vsel %vm1871, %v1869, %v1870
        %v1873 = vsel %vm1871, %v1868, %v1869
        %v1874 = vsel %vm1871, %v1867, %v1868
        %v1875 = vsel %vm1871, %v1866, %v1867
        %v1876 = vsel %vm1871, %v1865, %v1866
        %v1877 = vsel %vm1871, %v1864, %v1865
        %v1878 = vsel %vm1871, %v1863, %v1864
        %v1879 = vsel %vm1871, %v1862, %v1863
        %v1880 = vsel %vm1871, %v1861, %v1862
        %v1881 = vsel %vm1871, %v1860, %v1861
        %v1882 = vsel %vm1871, %v1859, %v1860
        %v1883 = vsel %vm1871, %v1858, %v1859
        %v1884 = vsel %vm1871, %v1857, %v1858
        %v1885 = vsel %vm1871, %v1856, %v1857
        %v1886 = vsel %vm1871, %v1855, %v1856
        %v1887 = vsel %vm1871, %v1854, %v1855
        %v1888 = vsel %vm1871, %v1853, %v1854
        %v1889 = vsel %vm1871, %v1852, %v1853
        %v1890 = vsel %vm1871, %v1851, %v1852
        %v1891 = vsel %vm1871, %v1870, %v1851
        %vm1892 = vcmp.ge.s32.totalorder %v1080, 1
        %vm1893 = vcmp.ge.s32.totalorder %v1081, 1
        %v1894 = vsel %vm1892, 1, 0
        %v1895 = vsel %vm1893, 1, 0
        %vm1896 = vcmp.eq.s32.totalorder %v1894, 1
        %vm1897 = vcmp.eq.s32.totalorder %v1895, 1
        %v1898 = vsel %vm1896, %v1873, 0.0
        %v1899 = vsel %vm1897, %v1872, 0.0
        %v1900 = vsel %vm1896, %v1891, 0.0
        %v1901 = vsel %vm1897, %v1890, 0.0
        %v1902 = vsel %vm1896, %v1889, 0.0
        %v1903 = vsel %vm1897, %v1888, 0.0
        %v1904 = vsel %vm1896, %v1887, 0.0
        %v1905 = vsel %vm1897, %v1886, 0.0
        %v1906 = vsel %vm1896, %v1885, 0.0
        %v1907 = vsel %vm1897, %v1884, 0.0
        %v1908 = vsel %vm1896, %v1883, 0.0
        %v1909 = vsel %vm1897, %v1882, 0.0
        %v1910 = vsel %vm1896, %v1881, 0.0
        %v1911 = vsel %vm1897, %v1880, 0.0
        %v1912 = vsel %vm1896, %v1879, 0.0
        %v1913 = vsel %vm1897, %v1878, 0.0
        %v1914 = vsel %vm1896, %v1877, 0.0
        %v1915 = vsel %vm1897, %v1876, 0.0
        %v1916 = vsel %vm1896, %v1875, 0.0
        %v1917 = vsel %vm1897, %v1874, 0.0
        %v1918 = vpack.c.bf16 %v1899, %v1898
        %v1919 = vpack.c.bf16 %v1901, %v1900
        %v1920 = vpack.c.bf16 %v1903, %v1902
        %v1921 = vpack.c.bf16 %v1905, %v1904
        %v1922 = vpack.c.bf16 %v1907, %v1906
        %v1923 = vpack.c.bf16 %v1909, %v1908
        %v1924 = vpack.c.bf16 %v1911, %v1910
        %v1925 = vpack.c.bf16 %v1913, %v1912
        %v1926 = vpack.c.bf16 %v1915, %v1914
        %v1927 = vpack.c.bf16 %v1917, %v1916
        %v1928 = vld [vmem:[#allocation17] sm:$0xf]
        %v1929 = vld [vmem:[#allocation17 + $0x4] sm:$0xf]
        %v1930 = vld [vmem:[#allocation17 + $0x8] sm:$0xf]
        %v1931 = vld [vmem:[#allocation17 + $0xc] sm:$0xf]
        %v1932 = vld [vmem:[#allocation17 + $0x10] sm:$0xf]
        %v1933 = vld [vmem:[#allocation17 + $0x14] sm:$0xf]
        %v1934 = vld [vmem:[#allocation17 + $0x18] sm:$0xf]
        %v1935 = vld [vmem:[#allocation17 + $0x1c] sm:$0xf]
        %v1936 = vpack.c.bf16 %v1850, %v1849
        %v1937 = vpack.c.bf16 %v1832, %v1831
        %v1938 = vpack.c.bf16 %v1834, %v1833
        %v1939 = vpack.c.bf16 %v1836, %v1835
        %v1940 = vpack.c.bf16 %v1838, %v1837
        %v1941 = vpack.c.bf16 %v1840, %v1839
        %v1942 = vpack.c.bf16 %v1842, %v1841
        %v1943 = vpack.c.bf16 %v1844, %v1843
        %v1944 = vpack.c.bf16 %v1846, %v1845
        %v1945 = vpack.c.bf16 %v1848, %v1847
        %s1946 = scalar_lea.vmem [#allocation17], 32
        %v1947 = vld [vmem:[%s1946] sm:$0xf]
        %v1948 = vld [vmem:[%s1946 + $0x4] sm:$0xf]
        %v1949 = vld [vmem:[%s1946 + $0x8] sm:$0xf]
        %v1950 = vld [vmem:[%s1946 + $0xc] sm:$0xf]
        %v1951 = vld [vmem:[%s1946 + $0x10] sm:$0xf]
        %v1952 = vld [vmem:[%s1946 + $0x14] sm:$0xf]
        %v1953 = vld [vmem:[%s1946 + $0x18] sm:$0xf]
        %v1954 = vld [vmem:[%s1946 + $0x1c] sm:$0xf]
        %v1963 = vunpack.c.l.b16 %v1947
        %v1964 = vunpack.c.l.b16 %v1948
        %v1965 = vunpack.c.l.b16 %v1949
        %v1966 = vunpack.c.l.b16 %v1950
        %v1967 = vunpack.c.l.b16 %v1951
        %v1968 = vunpack.c.l.b16 %v1952
        %v1969 = vunpack.c.l.b16 %v1953
        %v1970 = vunpack.c.l.b16 %v1954
        %v1971 = vpack.c.b16 %v1964, %v1963
        %v1972 = vpack.c.b16 %v1966, %v1965
        %v1973 = vpack.c.b16 %v1968, %v1967
        %v1974 = vpack.c.b16 %v1970, %v1969
        %vm1979 = vcmask 523264
        %v1981 = vsel %vm1979, %v1936, 0
        %v1984 = vsel %vm1979, %v1937, 0
        %v1987 = vsel %vm1979, %v1938, 0
        %v1990 = vsel %vm1979, %v1939, 0
        %v1993 = vsel %vm1979, %v1940, 0
        %v1996 = vsel %vm1979, %v1941, 0
        %v1999 = vsel %vm1979, %v1942, 0
        %v2002 = vsel %vm1979, %v1943, 0
        %v2005 = vsel %vm1979, %v1944, 0
        %v2008 = vsel %vm1979, %v1945, 0
        %2010 = vmatprep.subr.bf16.mxu0 0
        %2011 = vmatpush1.bf16.msra.mxu0 %v1971
        %2012 = vmatprep.subr.bf16.mxu0 0
        %2013 = vmatpush1.bf16.msra.mxu0 %v1972
        %2014 = vmatprep.subr.bf16.mxu0 0
        %2015 = vmatpush1.bf16.msra.mxu0 %v1973
        %2016 = vmatprep.subr.bf16.mxu0 0
        %2017 = vmatpush1.bf16.msra.mxu0 %v1974
        %2018 = vmatprep.subr.bf16.mxu0 0
        %2019 = vmatpush1.bf16.msra.mxu0 0
        %2020 = vmatprep.subr.bf16.mxu0 0
        %2021 = vmatpush1.bf16.msra.mxu0 0
        %2022 = vmatprep.subr.bf16.mxu0 0
        %2023 = vmatpush1.bf16.msra.mxu0 0
        %2024 = vmatprep.subr.bf16.mxu0 0
        %2025 = vmatpush1.bf16.msra.mxu0 0
        %2026 = vmatprep.subr.bf16.mxu0 0
        %2027 = vmatpush1.bf16.msra.mxu0 0
        %2028 = vmatprep.subr.bf16.mxu0 0
        %2029 = vmatpush1.bf16.msra.mxu0 0
        %2030 = vmatprep.subr.bf16.mxu0 0
        %2031 = vmatpush1.bf16.msra.mxu0 0
        %2032 = vmatprep.subr.bf16.mxu0 0
        %2033 = vmatpush1.bf16.msra.mxu0 0
        %2034 = vmatprep.subr.bf16.mxu0 0
        %2035 = vmatpush1.bf16.msra.mxu0 0
        %2036 = vmatprep.subr.bf16.mxu0 0
        %2037 = vmatpush1.bf16.msra.mxu0 0
        %2038 = vmatprep.subr.bf16.mxu0 0
        %2039 = vmatpush1.bf16.msra.mxu0 0
        %2040 = vmatprep.subr.bf16.mxu0 0
        %2041 = vmatpush1.bf16.msra.mxu0 0
        %2042 = vmatprep.mubr.bf16.mxu0 0
        %2043 = vmatmul.mubr.bf16.gmra.mrb[0].mxu0 %v1981
        %v2044 = vpop.f32.mrb[0].mxu0
        %v2045 = vpop.f32.mrb[0].mxu0
        %v2046 = vpop.f32.mrb[0].mxu0
        %v2047 = vpop.f32.mrb[0].mxu0
        %2048 = vmatprep.mubr.bf16.mxu0 0
        %2049 = vmatmul.mubr.bf16.gmra.mrb[0].mxu0 %v1984
        %v2050 = vpop.f32.mrb[0].mxu0
        %v2051 = vadd.f32 0.0, %v2050
        %v2052 = vpop.f32.mrb[0].mxu0
        %v2053 = vpop.f32.mrb[0].mxu0
        %v2054 = vadd.f32 0.0, %v2053
        %v2055 = vpop.f32.mrb[0].mxu0
        %2056 = vmatprep.mubr.bf16.mxu0 0
        %2057 = vmatmul.mubr.bf16.gmra.mrb[0].mxu0 %v1987
        %v2058 = vpop.f32.mrb[0].mxu0
        %v2059 = vadd.f32 0.0, %v2058
        %v2060 = vpop.f32.mrb[0].mxu0
        %v2061 = vpop.f32.mrb[0].mxu0
        %v2062 = vadd.f32 0.0, %v2061
        %v2063 = vpop.f32.mrb[0].mxu0
        %2064 = vmatprep.mubr.bf16.mxu0 0
        %2065 = vmatmul.mubr.bf16.gmra.mrb[0].mxu0 %v1990
        %v2066 = vpop.f32.mrb[0].mxu0
        %v2067 = vadd.f32 0.0, %v2066
        %v2068 = vpop.f32.mrb[0].mxu0
        %v2069 = vpop.f32.mrb[0].mxu0
        %v2070 = vadd.f32 0.0, %v2069
        %v2071 = vpop.f32.mrb[0].mxu0
        %2072 = vmatprep.mubr.bf16.mxu0 0
        %2073 = vmatmul.mubr.bf16.gmra.mrb[0].mxu0 %v1993
        %v2074 = vpop.f32.mrb[0].mxu0
        %v2075 = vadd.f32 0.0, %v2074
        %v2076 = vpop.f32.mrb[0].mxu0
        %v2077 = vpop.f32.mrb[0].mxu0
        %v2078 = vadd.f32 0.0, %v2077
        %v2079 = vpop.f32.mrb[0].mxu0
        %2080 = vmatprep.mubr.bf16.mxu0 0
        %2081 = vmatmul.mubr.bf16.gmra.mrb[0].mxu0 %v1996
        %v2082 = vpop.f32.mrb[0].mxu0
        %v2083 = vadd.f32 0.0, %v2082
        %v2084 = vpop.f32.mrb[0].mxu0
        %v2085 = vpop.f32.mrb[0].mxu0
        %v2086 = vadd.f32 0.0, %v2085
        %v2087 = vpop.f32.mrb[0].mxu0
        %2088 = vmatprep.mubr.bf16.mxu0 0
        %2089 = vmatmul.mubr.bf16.gmra.mrb[0].mxu0 %v1999
        %v2090 = vpop.f32.mrb[0].mxu0
        %v2091 = vadd.f32 0.0, %v2090
        %v2092 = vpop.f32.mrb[0].mxu0
        %v2093 = vpop.f32.mrb[0].mxu0
        %v2094 = vadd.f32 0.0, %v2093
        %v2095 = vpop.f32.mrb[0].mxu0
        %2096 = vmatprep.mubr.bf16.mxu0 0
        %2097 = vmatmul.mubr.bf16.gmra.mrb[0].mxu0 %v2002
        %v2098 = vpop.f32.mrb[0].mxu0
        %v2099 = vadd.f32 0.0, %v2098
        %v2100 = vpop.f32.mrb[0].mxu0
        %v2101 = vpop.f32.mrb[0].mxu0
        %v2102 = vadd.f32 0.0, %v2101
        %v2103 = vpop.f32.mrb[0].mxu0
        %2104 = vmatprep.mubr.bf16.mxu0 0
        %2105 = vmatmul.mubr.bf16.gmra.mrb[0].mxu0 %v2005
        %v2106 = vpop.f32.mrb[0].mxu0
        %v2107 = vadd.f32 0.0, %v2106
        %v2108 = vpop.f32.mrb[0].mxu0
        %v2109 = vpop.f32.mrb[0].mxu0
        %v2110 = vadd.f32 0.0, %v2109
        %v2111 = vpop.f32.mrb[0].mxu0
        %2112 = vmatprep.mubr.bf16.mxu0 0
        %2113 = vmatmul.mubr.bf16.gmra.mrb[0].mxu0 %v2008
        %v2114 = vpop.f32.mrb[0].mxu0
        %v2115 = vpop.f32.mrb[0].mxu0
        %v2116 = vpop.f32.mrb[0].mxu0
        %v2117 = vpop.f32.mrb[0].mxu0
        %2118 = vdwg.mxu0
        %v2127 = vunpack.c.l.b16 %v1928
        %v2128 = vunpack.c.l.b16 %v1929
        %v2129 = vunpack.c.l.b16 %v1930
        %v2130 = vunpack.c.l.b16 %v1931
        %v2131 = vunpack.c.l.b16 %v1932
        %v2132 = vunpack.c.l.b16 %v1933
        %v2133 = vunpack.c.l.b16 %v1934
        %v2134 = vunpack.c.l.b16 %v1935
        %v2135 = vpack.c.b16 %v2128, %v2127
        %v2136 = vpack.c.b16 %v2130, %v2129
        %v2137 = vpack.c.b16 %v2132, %v2131
        %v2138 = vpack.c.b16 %v2134, %v2133
        %v2144 = vsel %vm1979, %v1918, 0
        %v2147 = vsel %vm1979, %v1919, 0
        %v2150 = vsel %vm1979, %v1920, 0
        %v2153 = vsel %vm1979, %v1921, 0
        %v2156 = vsel %vm1979, %v1922, 0
        %v2159 = vsel %vm1979, %v1923, 0
        %v2162 = vsel %vm1979, %v1924, 0
        %v2165 = vsel %vm1979, %v1925, 0
        %v2168 = vsel %vm1979, %v1926, 0
        %v2171 = vsel %vm1979, %v1927, 0
        %2173 = vmatprep.subr.bf16.mxu0 0
        %2174 = vmatpush1.bf16.msra.mxu0 %v2135
        %2175 = vmatprep.subr.bf16.mxu0 0
        %2176 = vmatpush1.bf16.msra.mxu0 %v2136
        %2177 = vmatprep.subr.bf16.mxu0 0
        %2178 = vmatpush1.bf16.msra.mxu0 %v2137
        %2179 = vmatprep.subr.bf16.mxu0 0
        %2180 = vmatpush1.bf16.msra.mxu0 %v2138
        %2181 = vmatprep.subr.bf16.mxu0 0
        %2182 = vmatpush1.bf16.msra.mxu0 0
        %2183 = vmatprep.subr.bf16.mxu0 0
        %2184 = vmatpush1.bf16.msra.mxu0 0
        %2185 = vmatprep.subr.bf16.mxu0 0
        %2186 = vmatpush1.bf16.msra.mxu0 0
        %2187 = vmatprep.subr.bf16.mxu0 0
        %2188 = vmatpush1.bf16.msra.mxu0 0
        %2189 = vmatprep.subr.bf16.mxu0 0
        %2190 = vmatpush1.bf16.msra.mxu0 0
        %2191 = vmatprep.subr.bf16.mxu0 0
        %2192 = vmatpush1.bf16.msra.mxu0 0
        %2193 = vmatprep.subr.bf16.mxu0 0
        %2194 = vmatpush1.bf16.msra.mxu0 0
        %2195 = vmatprep.subr.bf16.mxu0 0
        %2196 = vmatpush1.bf16.msra.mxu0 0
        %2197 = vmatprep.subr.bf16.mxu0 0
        %2198 = vmatpush1.bf16.msra.mxu0 0
        %2199 = vmatprep.subr.bf16.mxu0 0
        %2200 = vmatpush1.bf16.msra.mxu0 0
        %2201 = vmatprep.subr.bf16.mxu0 0
        %2202 = vmatpush1.bf16.msra.mxu0 0
        %2203 = vmatprep.subr.bf16.mxu0 0
        %2204 = vmatpush1.bf16.msra.mxu0 0
        %2205 = vmatprep.mubr.bf16.mxu0 0
        %2206 = vmatmul.mubr.bf16.gmra.mrb[0].mxu0 %v2144
        %v2207 = vpop.f32.mrb[0].mxu0
        %v2208 = vpop.f32.mrb[0].mxu0
        %v2209 = vpop.f32.mrb[0].mxu0
        %v2210 = vpop.f32.mrb[0].mxu0
        %2211 = vmatprep.mubr.bf16.mxu0 0
        %2212 = vmatmul.mubr.bf16.gmra.mrb[0].mxu0 %v2147
        %v2213 = vpop.f32.mrb[0].mxu0
        %v2214 = vadd.f32 %v2051, %v2213
        %v2215 = vpop.f32.mrb[0].mxu0
        %v2216 = vpop.f32.mrb[0].mxu0
        %v2217 = vadd.f32 %v2054, %v2216
        %v2218 = vpop.f32.mrb[0].mxu0
        %2219 = vmatprep.mubr.bf16.mxu0 0
        %2220 = vmatmul.mubr.bf16.gmra.mrb[0].mxu0 %v2150
        %v2221 = vpop.f32.mrb[0].mxu0
        %v2222 = vadd.f32 %v2059, %v2221
        %v2223 = vpop.f32.mrb[0].mxu0
        %v2224 = vpop.f32.mrb[0].mxu0
        %v2225 = vadd.f32 %v2062, %v2224
        %v2226 = vpop.f32.mrb[0].mxu0
        %2227 = vmatprep.mubr.bf16.mxu0 0
        %2228 = vmatmul.mubr.bf16.gmra.mrb[0].mxu0 %v2153
        %v2229 = vpop.f32.mrb[0].mxu0
        %v2230 = vadd.f32 %v2067, %v2229
        %v2231 = vpop.f32.mrb[0].mxu0
        %v2232 = vpop.f32.mrb[0].mxu0
        %v2233 = vadd.f32 %v2070, %v2232
        %v2234 = vpop.f32.mrb[0].mxu0
        %2235 = vmatprep.mubr.bf16.mxu0 0
        %2236 = vmatmul.mubr.bf16.gmra.mrb[0].mxu0 %v2156
        %v2237 = vpop.f32.mrb[0].mxu0
        %v2238 = vadd.f32 %v2075, %v2237
        %v2239 = vpop.f32.mrb[0].mxu0
        %v2240 = vpop.f32.mrb[0].mxu0
        %v2241 = vadd.f32 %v2078, %v2240
        %v2242 = vpop.f32.mrb[0].mxu0
        %2243 = vmatprep.mubr.bf16.mxu0 0
        %2244 = vmatmul.mubr.bf16.gmra.mrb[0].mxu0 %v2159
        %v2245 = vpop.f32.mrb[0].mxu0
        %v2246 = vadd.f32 %v2083, %v2245
        %v2247 = vpop.f32.mrb[0].mxu0
        %v2248 = vpop.f32.mrb[0].mxu0
        %v2249 = vadd.f32 %v2086, %v2248
        %v2250 = vpop.f32.mrb[0].mxu0
        %2251 = vmatprep.mubr.bf16.mxu0 0
        %2252 = vmatmul.mubr.bf16.gmra.mrb[0].mxu0 %v2162
        %v2253 = vpop.f32.mrb[0].mxu0
        %v2254 = vadd.f32 %v2091, %v2253
        %v2255 = vpop.f32.mrb[0].mxu0
        %v2256 = vpop.f32.mrb[0].mxu0
        %v2257 = vadd.f32 %v2094, %v2256
        %v2258 = vpop.f32.mrb[0].mxu0
        %2259 = vmatprep.mubr.bf16.mxu0 0
        %2260 = vmatmul.mubr.bf16.gmra.mrb[0].mxu0 %v2165
        %v2261 = vpop.f32.mrb[0].mxu0
        %v2262 = vadd.f32 %v2099, %v2261
        %v2263 = vpop.f32.mrb[0].mxu0
        %v2264 = vpop.f32.mrb[0].mxu0
        %v2265 = vadd.f32 %v2102, %v2264
        %v2266 = vpop.f32.mrb[0].mxu0
        %2267 = vmatprep.mubr.bf16.mxu0 0
        %2268 = vmatmul.mubr.bf16.gmra.mrb[0].mxu0 %v2168
        %v2269 = vpop.f32.mrb[0].mxu0
        %v2270 = vadd.f32 %v2107, %v2269
        %v2271 = vpop.f32.mrb[0].mxu0
        %v2272 = vpop.f32.mrb[0].mxu0
        %v2273 = vadd.f32 %v2110, %v2272
        %v2274 = vpop.f32.mrb[0].mxu0
        %2275 = vmatprep.mubr.bf16.mxu0 0
        %2276 = vmatmul.mubr.bf16.gmra.mrb[0].mxu0 %v2171
        %v2277 = vpop.f32.mrb[0].mxu0
        %v2278 = vpop.f32.mrb[0].mxu0
        %v2279 = vpop.f32.mrb[0].mxu0
        %v2280 = vpop.f32.mrb[0].mxu0
        %2281 = vdwg.mxu0
        %v2282 = vrot.slane %v1831, 1
        %v2283 = vrot.slane %v1832, 1
        %v2284 = vrot.slane %v1833, 1
        %v2285 = vrot.slane %v1834, 1
        %v2286 = vrot.slane %v1835, 1
        %v2287 = vrot.slane %v1836, 1
        %v2288 = vrot.slane %v1837, 1
        %v2289 = vrot.slane %v1838, 1
        %v2290 = vrot.slane %v1839, 1
        %v2291 = vrot.slane %v1840, 1
        %v2292 = vrot.slane %v1841, 1
        %v2293 = vrot.slane %v1842, 1
        %v2294 = vrot.slane %v1843, 1
        %v2295 = vrot.slane %v1844, 1
        %v2296 = vrot.slane %v1845, 1
        %v2297 = vrot.slane %v1846, 1
        %v2298 = vrot.slane %v1847, 1
        %v2299 = vrot.slane %v1848, 1
        %v2300 = vrot.slane %v1849, 1
        %v2301 = vrot.slane %v1850, 1
        %vm2302 = vcmp.lt.s32.totalorder %v1080, 7
        %v2303 = vsel %vm2302, %v2300, %v2301
        %v2304 = vsel %vm2302, %v2299, %v2300
        %v2305 = vsel %vm2302, %v2298, %v2299
        %v2306 = vsel %vm2302, %v2297, %v2298
        %v2307 = vsel %vm2302, %v2296, %v2297
        %v2308 = vsel %vm2302, %v2295, %v2296
        %v2309 = vsel %vm2302, %v2294, %v2295
        %v2310 = vsel %vm2302, %v2293, %v2294
        %v2311 = vsel %vm2302, %v2292, %v2293
        %v2312 = vsel %vm2302, %v2291, %v2292
        %v2313 = vsel %vm2302, %v2290, %v2291
        %v2314 = vsel %vm2302, %v2289, %v2290
        %v2315 = vsel %vm2302, %v2288, %v2289
        %v2316 = vsel %vm2302, %v2287, %v2288
        %v2317 = vsel %vm2302, %v2286, %v2287
        %v2318 = vsel %vm2302, %v2285, %v2286
        %v2319 = vsel %vm2302, %v2284, %v2285
        %v2320 = vsel %vm2302, %v2283, %v2284
        %v2321 = vsel %vm2302, %v2282, %v2283
        %v2322 = vsel %vm2302, %v2301, %v2282
        %vm2323 = vcmp.lt.s32.totalorder %v1080, 15
        %vm2324 = vcmp.lt.s32.totalorder %v1081, 15
        %v2325 = vsel %vm2323, 1, 0
        %v2326 = vsel %vm2324, 1, 0
        %vm2327 = vcmp.eq.s32.totalorder %v2325, 1
        %vm2328 = vcmp.eq.s32.totalorder %v2326, 1
        %v2329 = vsel %vm2327, %v2303, 0.0
        %v2330 = vsel %vm2328, %v2322, 0.0
        %v2331 = vsel %vm2327, %v2321, 0.0
        %v2332 = vsel %vm2328, %v2320, 0.0
        %v2333 = vsel %vm2327, %v2319, 0.0
        %v2334 = vsel %vm2328, %v2318, 0.0
        %v2335 = vsel %vm2327, %v2317, 0.0
        %v2336 = vsel %vm2328, %v2316, 0.0
        %v2337 = vsel %vm2327, %v2315, 0.0
        %v2338 = vsel %vm2328, %v2314, 0.0
        %v2339 = vsel %vm2327, %v2313, 0.0
        %v2340 = vsel %vm2328, %v2312, 0.0
        %v2341 = vsel %vm2327, %v2311, 0.0
        %v2342 = vsel %vm2328, %v2310, 0.0
        %v2343 = vsel %vm2327, %v2309, 0.0
        %v2344 = vsel %vm2328, %v2308, 0.0
        %v2345 = vsel %vm2327, %v2307, 0.0
        %v2346 = vsel %vm2328, %v2306, 0.0
        %v2347 = vsel %vm2327, %v2305, 0.0
        %v2348 = vsel %vm2328, %v2304, 0.0
        %v2349 = vpack.c.bf16 %v2330, %v2329
        %v2350 = vpack.c.bf16 %v2332, %v2331
        %v2351 = vpack.c.bf16 %v2334, %v2333
        %v2352 = vpack.c.bf16 %v2336, %v2335
        %v2353 = vpack.c.bf16 %v2338, %v2337
        %v2354 = vpack.c.bf16 %v2340, %v2339
        %v2355 = vpack.c.bf16 %v2342, %v2341
        %v2356 = vpack.c.bf16 %v2344, %v2343
        %v2357 = vpack.c.bf16 %v2346, %v2345
        %v2358 = vpack.c.bf16 %v2348, %v2347
        %s2359 = scalar_lea.vmem [#allocation17], 64
        %v2360 = vld [vmem:[%s2359] sm:$0xf]
        %v2361 = vld [vmem:[%s2359 + $0x4] sm:$0xf]
        %v2362 = vld [vmem:[%s2359 + $0x8] sm:$0xf]
        %v2363 = vld [vmem:[%s2359 + $0xc] sm:$0xf]
        %v2364 = vld [vmem:[%s2359 + $0x10] sm:$0xf]
        %v2365 = vld [vmem:[%s2359 + $0x14] sm:$0xf]
        %v2366 = vld [vmem:[%s2359 + $0x18] sm:$0xf]
        %v2367 = vld [vmem:[%s2359 + $0x1c] sm:$0xf]
        %v2376 = vunpack.c.l.b16 %v2360
        %v2377 = vunpack.c.l.b16 %v2361
        %v2378 = vunpack.c.l.b16 %v2362
        %v2379 = vunpack.c.l.b16 %v2363
        %v2380 = vunpack.c.l.b16 %v2364
        %v2381 = vunpack.c.l.b16 %v2365
        %v2382 = vunpack.c.l.b16 %v2366
        %v2383 = vunpack.c.l.b16 %v2367
        %v2384 = vpack.c.b16 %v2377, %v2376
        %v2385 = vpack.c.b16 %v2379, %v2378
        %v2386 = vpack.c.b16 %v2381, %v2380
        %v2387 = vpack.c.b16 %v2383, %v2382
        %v2393 = vsel %vm1979, %v2349, 0
        %v2396 = vsel %vm1979, %v2350, 0
        %v2399 = vsel %vm1979, %v2351, 0
        %v2402 = vsel %vm1979, %v2352, 0
        %v2405 = vsel %vm1979, %v2353, 0
        %v2408 = vsel %vm1979, %v2354, 0
        %v2411 = vsel %vm1979, %v2355, 0
        %v2414 = vsel %vm1979, %v2356, 0
        %v2417 = vsel %vm1979, %v2357, 0
        %v2420 = vsel %vm1979, %v2358, 0
        %2422 = vmatprep.subr.bf16.mxu0 0
        %2423 = vmatpush1.bf16.msra.mxu0 %v2384
        %2424 = vmatprep.subr.bf16.mxu0 0
        %2425 = vmatpush1.bf16.msra.mxu0 %v2385
        %2426 = vmatprep.subr.bf16.mxu0 0
        %2427 = vmatpush1.bf16.msra.mxu0 %v2386
        %2428 = vmatprep.subr.bf16.mxu0 0
        %2429 = vmatpush1.bf16.msra.mxu0 %v2387
        %2430 = vmatprep.subr.bf16.mxu0 0
        %2431 = vmatpush1.bf16.msra.mxu0 0
        %2432 = vmatprep.subr.bf16.mxu0 0
        %2433 = vmatpush1.bf16.msra.mxu0 0
        %2434 = vmatprep.subr.bf16.mxu0 0
        %2435 = vmatpush1.bf16.msra.mxu0 0
        %2436 = vmatprep.subr.bf16.mxu0 0
        %2437 = vmatpush1.bf16.msra.mxu0 0
        %2438 = vmatprep.subr.bf16.mxu0 0
        %2439 = vmatpush1.bf16.msra.mxu0 0
        %2440 = vmatprep.subr.bf16.mxu0 0
        %2441 = vmatpush1.bf16.msra.mxu0 0
        %2442 = vmatprep.subr.bf16.mxu0 0
        %2443 = vmatpush1.bf16.msra.mxu0 0
        %2444 = vmatprep.subr.bf16.mxu0 0
        %2445 = vmatpush1.bf16.msra.mxu0 0
        %2446 = vmatprep.subr.bf16.mxu0 0
        %2447 = vmatpush1.bf16.msra.mxu0 0
        %2448 = vmatprep.subr.bf16.mxu0 0
        %2449 = vmatpush1.bf16.msra.mxu0 0
        %2450 = vmatprep.subr.bf16.mxu0 0
        %2451 = vmatpush1.bf16.msra.mxu0 0
        %2452 = vmatprep.subr.bf16.mxu0 0
        %2453 = vmatpush1.bf16.msra.mxu0 0
        %2454 = vmatprep.mubr.bf16.mxu0 0
        %2455 = vmatmul.mubr.bf16.gmra.mrb[0].mxu0 %v2393
        %v2456 = vpop.f32.mrb[0].mxu0
        %v2457 = vpop.f32.mrb[0].mxu0
        %v2458 = vpop.f32.mrb[0].mxu0
        %v2459 = vpop.f32.mrb[0].mxu0
        %2460 = vmatprep.mubr.bf16.mxu0 0
        %2461 = vmatmul.mubr.bf16.gmra.mrb[0].mxu0 %v2396
        %v2462 = vpop.f32.mrb[0].mxu0
        %v2463 = vadd.f32 0.0, %v2462
        %v2464 = vpop.f32.mrb[0].mxu0
        %v2465 = vpop.f32.mrb[0].mxu0
        %v2466 = vadd.f32 0.0, %v2465
        %v2467 = vpop.f32.mrb[0].mxu0
        %2468 = vmatprep.mubr.bf16.mxu0 0
        %2469 = vmatmul.mubr.bf16.gmra.mrb[0].mxu0 %v2399
        %v2470 = vpop.f32.mrb[0].mxu0
        %v2471 = vadd.f32 0.0, %v2470
        %v2472 = vpop.f32.mrb[0].mxu0
        %v2473 = vpop.f32.mrb[0].mxu0
        %v2474 = vadd.f32 0.0, %v2473
        %v2475 = vpop.f32.mrb[0].mxu0
        %2476 = vmatprep.mubr.bf16.mxu0 0
        %2477 = vmatmul.mubr.bf16.gmra.mrb[0].mxu0 %v2402
        %v2478 = vpop.f32.mrb[0].mxu0
        %v2479 = vadd.f32 0.0, %v2478
        %v2480 = vpop.f32.mrb[0].mxu0
        %v2481 = vpop.f32.mrb[0].mxu0
        %v2482 = vadd.f32 0.0, %v2481
        %v2483 = vpop.f32.mrb[0].mxu0
        %2484 = vmatprep.mubr.bf16.mxu0 0
        %2485 = vmatmul.mubr.bf16.gmra.mrb[0].mxu0 %v2405
        %v2486 = vpop.f32.mrb[0].mxu0
        %v2487 = vadd.f32 0.0, %v2486
        %v2488 = vpop.f32.mrb[0].mxu0
        %v2489 = vpop.f32.mrb[0].mxu0
        %v2490 = vadd.f32 0.0, %v2489
        %v2491 = vpop.f32.mrb[0].mxu0
        %2492 = vmatprep.mubr.bf16.mxu0 0
        %2493 = vmatmul.mubr.bf16.gmra.mrb[0].mxu0 %v2408
        %v2494 = vpop.f32.mrb[0].mxu0
        %v2495 = vadd.f32 0.0, %v2494
        %v2496 = vpop.f32.mrb[0].mxu0
        %v2497 = vpop.f32.mrb[0].mxu0
        %v2498 = vadd.f32 0.0, %v2497
        %v2499 = vpop.f32.mrb[0].mxu0
        %2500 = vmatprep.mubr.bf16.mxu0 0
        %2501 = vmatmul.mubr.bf16.gmra.mrb[0].mxu0 %v2411
        %v2502 = vpop.f32.mrb[0].mxu0
        %v2503 = vadd.f32 0.0, %v2502
        %v2504 = vpop.f32.mrb[0].mxu0
        %v2505 = vpop.f32.mrb[0].mxu0
        %v2506 = vadd.f32 0.0, %v2505
        %v2507 = vpop.f32.mrb[0].mxu0
        %2508 = vmatprep.mubr.bf16.mxu0 0
        %2509 = vmatmul.mubr.bf16.gmra.mrb[0].mxu0 %v2414
        %v2510 = vpop.f32.mrb[0].mxu0
        %v2511 = vadd.f32 0.0, %v2510
        %v2512 = vpop.f32.mrb[0].mxu0
        %v2513 = vpop.f32.mrb[0].mxu0
        %v2514 = vadd.f32 0.0, %v2513
        %v2515 = vpop.f32.mrb[0].mxu0
        %2516 = vmatprep.mubr.bf16.mxu0 0
        %2517 = vmatmul.mubr.bf16.gmra.mrb[0].mxu0 %v2417
        %v2518 = vpop.f32.mrb[0].mxu0
        %v2519 = vadd.f32 0.0, %v2518
        %v2520 = vpop.f32.mrb[0].mxu0
        %v2521 = vpop.f32.mrb[0].mxu0
        %v2522 = vadd.f32 0.0, %v2521
        %v2523 = vpop.f32.mrb[0].mxu0
        %2524 = vmatprep.mubr.bf16.mxu0 0
        %2525 = vmatmul.mubr.bf16.gmra.mrb[0].mxu0 %v2420
        %v2526 = vpop.f32.mrb[0].mxu0
        %v2527 = vpop.f32.mrb[0].mxu0
        %v2528 = vpop.f32.mrb[0].mxu0
        %v2529 = vpop.f32.mrb[0].mxu0
        %2530 = vdwg.mxu0
        %v2531 = vadd.f32 %v2214, %v2463
        %v2532 = vadd.f32 %v2217, %v2466
        %v2533 = vadd.f32 %v2222, %v2471
        %v2534 = vadd.f32 %v2225, %v2474
        %v2535 = vadd.f32 %v2230, %v2479
        %v2536 = vadd.f32 %v2233, %v2482
        %v2537 = vadd.f32 %v2238, %v2487
        %v2538 = vadd.f32 %v2241, %v2490
        %v2539 = vadd.f32 %v2246, %v2495
        %v2540 = vadd.f32 %v2249, %v2498
        %v2541 = vadd.f32 %v2254, %v2503
        %v2542 = vadd.f32 %v2257, %v2506
        %v2543 = vadd.f32 %v2262, %v2511
        %v2544 = vadd.f32 %v2265, %v2514
        %v2545 = vadd.f32 %v2270, %v2519
        %v2546 = vadd.f32 %v2273, %v2522
        %s2547 = scalar_lea.vmem [#allocation17], 96
        %v2548 = vld [vmem:[%s2547] sm:$0xf]
        %v2549 = vld [vmem:[%s2547 + $0x4] sm:$0xf]
        %v2550 = vld [vmem:[%s2547 + $0x8] sm:$0xf]
        %v2551 = vld [vmem:[%s2547 + $0xc] sm:$0xf]
        %v2552 = vld [vmem:[%s2547 + $0x10] sm:$0xf]
        %v2553 = vld [vmem:[%s2547 + $0x14] sm:$0xf]
        %v2554 = vld [vmem:[%s2547 + $0x18] sm:$0xf]
        %v2555 = vld [vmem:[%s2547 + $0x1c] sm:$0xf]
        %v2564 = vunpack.c.l.b16 %v2548
        %v2565 = vunpack.c.l.b16 %v2549
        %v2566 = vunpack.c.l.b16 %v2550
        %v2567 = vunpack.c.l.b16 %v2551
        %v2568 = vunpack.c.l.b16 %v2552
        %v2569 = vunpack.c.l.b16 %v2553
        %v2570 = vunpack.c.l.b16 %v2554
        %v2571 = vunpack.c.l.b16 %v2555
        %v2572 = vpack.c.b16 %v2565, %v2564
        %v2573 = vpack.c.b16 %v2567, %v2566
        %v2574 = vpack.c.b16 %v2569, %v2568
        %v2575 = vpack.c.b16 %v2571, %v2570
        %2580 = vmatprep.subr.bf16.mxu0 0
        %2581 = vmatpush1.bf16.msra.mxu0 %v2572
        %2582 = vmatprep.subr.bf16.mxu0 0
        %2583 = vmatpush1.bf16.msra.mxu0 %v2573
        %2584 = vmatprep.subr.bf16.mxu0 0
        %2585 = vmatpush1.bf16.msra.mxu0 %v2574
        %2586 = vmatprep.subr.bf16.mxu0 0
        %2587 = vmatpush1.bf16.msra.mxu0 %v2575
        %2588 = vmatprep.subr.bf16.mxu0 0
        %2589 = vmatpush1.bf16.msra.mxu0 0
        %2590 = vmatprep.subr.bf16.mxu0 0
        %2591 = vmatpush1.bf16.msra.mxu0 0
        %2592 = vmatprep.subr.bf16.mxu0 0
        %2593 = vmatpush1.bf16.msra.mxu0 0
        %2594 = vmatprep.subr.bf16.mxu0 0
        %2595 = vmatpush1.bf16.msra.mxu0 0
        %2596 = vmatprep.subr.bf16.mxu0 0
        %2597 = vmatpush1.bf16.msra.mxu0 0
        %2598 = vmatprep.subr.bf16.mxu0 0
        %2599 = vmatpush1.bf16.msra.mxu0 0
        %2600 = vmatprep.subr.bf16.mxu0 0
        %2601 = vmatpush1.bf16.msra.mxu0 0
        %2602 = vmatprep.subr.bf16.mxu0 0
        %2603 = vmatpush1.bf16.msra.mxu0 0
        %2604 = vmatprep.subr.bf16.mxu0 0
        %2605 = vmatpush1.bf16.msra.mxu0 0
        %2606 = vmatprep.subr.bf16.mxu0 0
        %2607 = vmatpush1.bf16.msra.mxu0 0
        %2608 = vmatprep.subr.bf16.mxu0 0
        %2609 = vmatpush1.bf16.msra.mxu0 0
        %2610 = vmatprep.subr.bf16.mxu0 0
        %2611 = vmatpush1.bf16.msra.mxu0 0
        %2612 = vmatprep.mubr.bf16.mxu0 0
        %2613 = vmatmul.mubr.bf16.gmra.mrb[0].mxu0 %v2147
        %v2614 = vpop.f32.mrb[0].mxu0
        %v2615 = vpop.f32.mrb[0].mxu0
        %v2616 = vpop.f32.mrb[0].mxu0
        %v2617 = vpop.f32.mrb[0].mxu0
        %2618 = vmatprep.mubr.bf16.mxu0 0
        %2619 = vmatmul.mubr.bf16.gmra.mrb[0].mxu0 %v2150
        %v2620 = vpop.f32.mrb[0].mxu0
        %v2621 = vadd.f32 0.0, %v2620
        %v2622 = vpop.f32.mrb[0].mxu0
        %v2623 = vpop.f32.mrb[0].mxu0
        %v2624 = vadd.f32 0.0, %v2623
        %v2625 = vpop.f32.mrb[0].mxu0
        %2626 = vmatprep.mubr.bf16.mxu0 0
        %2627 = vmatmul.mubr.bf16.gmra.mrb[0].mxu0 %v2153
        %v2628 = vpop.f32.mrb[0].mxu0
        %v2629 = vadd.f32 0.0, %v2628
        %v2630 = vpop.f32.mrb[0].mxu0
        %v2631 = vpop.f32.mrb[0].mxu0
        %v2632 = vadd.f32 0.0, %v2631
        %v2633 = vpop.f32.mrb[0].mxu0
        %2634 = vmatprep.mubr.bf16.mxu0 0
        %2635 = vmatmul.mubr.bf16.gmra.mrb[0].mxu0 %v2156
        %v2636 = vpop.f32.mrb[0].mxu0
        %v2637 = vadd.f32 0.0, %v2636
        %v2638 = vpop.f32.mrb[0].mxu0
        %v2639 = vpop.f32.mrb[0].mxu0
        %v2640 = vadd.f32 0.0, %v2639
        %v2641 = vpop.f32.mrb[0].mxu0
        %2642 = vmatprep.mubr.bf16.mxu0 0
        %2643 = vmatmul.mubr.bf16.gmra.mrb[0].mxu0 %v2159
        %v2644 = vpop.f32.mrb[0].mxu0
        %v2645 = vadd.f32 0.0, %v2644
        %v2646 = vpop.f32.mrb[0].mxu0
        %v2647 = vpop.f32.mrb[0].mxu0
        %v2648 = vadd.f32 0.0, %v2647
        %v2649 = vpop.f32.mrb[0].mxu0
        %2650 = vmatprep.mubr.bf16.mxu0 0
        %2651 = vmatmul.mubr.bf16.gmra.mrb[0].mxu0 %v2162
        %v2652 = vpop.f32.mrb[0].mxu0
        %v2653 = vadd.f32 0.0, %v2652
        %v2654 = vpop.f32.mrb[0].mxu0
        %v2655 = vpop.f32.mrb[0].mxu0
        %v2656 = vadd.f32 0.0, %v2655
        %v2657 = vpop.f32.mrb[0].mxu0
        %2658 = vmatprep.mubr.bf16.mxu0 0
        %2659 = vmatmul.mubr.bf16.gmra.mrb[0].mxu0 %v2165
        %v2660 = vpop.f32.mrb[0].mxu0
        %v2661 = vadd.f32 0.0, %v2660
        %v2662 = vpop.f32.mrb[0].mxu0
        %v2663 = vpop.f32.mrb[0].mxu0
        %v2664 = vadd.f32 0.0, %v2663
        %v2665 = vpop.f32.mrb[0].mxu0
        %2666 = vmatprep.mubr.bf16.mxu0 0
        %2667 = vmatmul.mubr.bf16.gmra.mrb[0].mxu0 %v2168
        %v2668 = vpop.f32.mrb[0].mxu0
        %v2669 = vadd.f32 0.0, %v2668
        %v2670 = vpop.f32.mrb[0].mxu0
        %v2671 = vpop.f32.mrb[0].mxu0
        %v2672 = vadd.f32 0.0, %v2671
        %v2673 = vpop.f32.mrb[0].mxu0
        %2674 = vmatprep.mubr.bf16.mxu0 0
        %2675 = vmatmul.mubr.bf16.gmra.mrb[0].mxu0 %v2171
        %v2676 = vpop.f32.mrb[0].mxu0
        %v2677 = vadd.f32 0.0, %v2676
        %v2678 = vpop.f32.mrb[0].mxu0
        %v2679 = vpop.f32.mrb[0].mxu0
        %v2680 = vadd.f32 0.0, %v2679
        %v2681 = vpop.f32.mrb[0].mxu0
        %2682 = vmatprep.mubr.bf16.mxu0 0
        %2683 = vmatmul.mubr.bf16.gmra.mrb[0].mxu0 %v2144
        %v2684 = vpop.f32.mrb[0].mxu0
        %v2685 = vpop.f32.mrb[0].mxu0
        %v2686 = vpop.f32.mrb[0].mxu0
        %v2687 = vpop.f32.mrb[0].mxu0
        %2688 = vdwg.mxu0
        %v2689 = vadd.f32 %v2531, %v2621
        %v2690 = vadd.f32 %v2532, %v2624
        %v2691 = vadd.f32 %v2533, %v2629
        %v2692 = vadd.f32 %v2534, %v2632
        %v2693 = vadd.f32 %v2535, %v2637
        %v2694 = vadd.f32 %v2536, %v2640
        %v2695 = vadd.f32 %v2537, %v2645
        %v2696 = vadd.f32 %v2538, %v2648
        %v2697 = vadd.f32 %v2539, %v2653
        %v2698 = vadd.f32 %v2540, %v2656
        %v2699 = vadd.f32 %v2541, %v2661
        %v2700 = vadd.f32 %v2542, %v2664
        %v2701 = vadd.f32 %v2543, %v2669
        %v2702 = vadd.f32 %v2544, %v2672
        %v2703 = vadd.f32 %v2545, %v2677
        %v2704 = vadd.f32 %v2546, %v2680
        %s2705 = scalar_lea.vmem [#allocation17], 128
        %v2706 = vld [vmem:[%s2705] sm:$0xf]
        %v2707 = vld [vmem:[%s2705 + $0x4] sm:$0xf]
        %v2708 = vld [vmem:[%s2705 + $0x8] sm:$0xf]
        %v2709 = vld [vmem:[%s2705 + $0xc] sm:$0xf]
        %v2710 = vld [vmem:[%s2705 + $0x10] sm:$0xf]
        %v2711 = vld [vmem:[%s2705 + $0x14] sm:$0xf]
        %v2712 = vld [vmem:[%s2705 + $0x18] sm:$0xf]
        %v2713 = vld [vmem:[%s2705 + $0x1c] sm:$0xf]
        %v2722 = vunpack.c.l.b16 %v2706
        %v2723 = vunpack.c.l.b16 %v2707
        %v2724 = vunpack.c.l.b16 %v2708
        %v2725 = vunpack.c.l.b16 %v2709
        %v2726 = vunpack.c.l.b16 %v2710
        %v2727 = vunpack.c.l.b16 %v2711
        %v2728 = vunpack.c.l.b16 %v2712
        %v2729 = vunpack.c.l.b16 %v2713
        %v2730 = vpack.c.b16 %v2723, %v2722
        %v2731 = vpack.c.b16 %v2725, %v2724
        %v2732 = vpack.c.b16 %v2727, %v2726
        %v2733 = vpack.c.b16 %v2729, %v2728
        %2738 = vmatprep.subr.bf16.mxu0 0
        %2739 = vmatpush1.bf16.msra.mxu0 %v2730
        %2740 = vmatprep.subr.bf16.mxu0 0
        %2741 = vmatpush1.bf16.msra.mxu0 %v2731
        %2742 = vmatprep.subr.bf16.mxu0 0
        %2743 = vmatpush1.bf16.msra.mxu0 %v2732
        %2744 = vmatprep.subr.bf16.mxu0 0
        %2745 = vmatpush1.bf16.msra.mxu0 %v2733
        %2746 = vmatprep.subr.bf16.mxu0 0
        %2747 = vmatpush1.bf16.msra.mxu0 0
        %2748 = vmatprep.subr.bf16.mxu0 0
        %2749 = vmatpush1.bf16.msra.mxu0 0
        %2750 = vmatprep.subr.bf16.mxu0 0
        %2751 = vmatpush1.bf16.msra.mxu0 0
        %2752 = vmatprep.subr.bf16.mxu0 0
        %2753 = vmatpush1.bf16.msra.mxu0 0
        %2754 = vmatprep.subr.bf16.mxu0 0
        %2755 = vmatpush1.bf16.msra.mxu0 0
        %2756 = vmatprep.subr.bf16.mxu0 0
        %2757 = vmatpush1.bf16.msra.mxu0 0
        %2758 = vmatprep.subr.bf16.mxu0 0
        %2759 = vmatpush1.bf16.msra.mxu0 0
        %2760 = vmatprep.subr.bf16.mxu0 0
        %2761 = vmatpush1.bf16.msra.mxu0 0
        %2762 = vmatprep.subr.bf16.mxu0 0
        %2763 = vmatpush1.bf16.msra.mxu0 0
        %2764 = vmatprep.subr.bf16.mxu0 0
        %2765 = vmatpush1.bf16.msra.mxu0 0
        %2766 = vmatprep.subr.bf16.mxu0 0
        %2767 = vmatpush1.bf16.msra.mxu0 0
        %2768 = vmatprep.subr.bf16.mxu0 0
        %2769 = vmatpush1.bf16.msra.mxu0 0
        %2770 = vmatprep.mubr.bf16.mxu0 0
        %2771 = vmatmul.mubr.bf16.gmra.mrb[0].mxu0 %v1984
        %v2772 = vpop.f32.mrb[0].mxu0
        %v2773 = vpop.f32.mrb[0].mxu0
        %v2774 = vpop.f32.mrb[0].mxu0
        %v2775 = vpop.f32.mrb[0].mxu0
        %2776 = vmatprep.mubr.bf16.mxu0 0
        %2777 = vmatmul.mubr.bf16.gmra.mrb[0].mxu0 %v1987
        %v2778 = vpop.f32.mrb[0].mxu0
        %v2779 = vadd.f32 0.0, %v2778
        %v2780 = vpop.f32.mrb[0].mxu0
        %v2781 = vpop.f32.mrb[0].mxu0
        %v2782 = vadd.f32 0.0, %v2781
        %v2783 = vpop.f32.mrb[0].mxu0
        %2784 = vmatprep.mubr.bf16.mxu0 0
        %2785 = vmatmul.mubr.bf16.gmra.mrb[0].mxu0 %v1990
        %v2786 = vpop.f32.mrb[0].mxu0
        %v2787 = vadd.f32 0.0, %v2786
        %v2788 = vpop.f32.mrb[0].mxu0
        %v2789 = vpop.f32.mrb[0].mxu0
        %v2790 = vadd.f32 0.0, %v2789
        %v2791 = vpop.f32.mrb[0].mxu0
        %2792 = vmatprep.mubr.bf16.mxu0 0
        %2793 = vmatmul.mubr.bf16.gmra.mrb[0].mxu0 %v1993
        %v2794 = vpop.f32.mrb[0].mxu0
        %v2795 = vadd.f32 0.0, %v2794
        %v2796 = vpop.f32.mrb[0].mxu0
        %v2797 = vpop.f32.mrb[0].mxu0
        %v2798 = vadd.f32 0.0, %v2797
        %v2799 = vpop.f32.mrb[0].mxu0
        %2800 = vmatprep.mubr.bf16.mxu0 0
        %2801 = vmatmul.mubr.bf16.gmra.mrb[0].mxu0 %v1996
        %v2802 = vpop.f32.mrb[0].mxu0
        %v2803 = vadd.f32 0.0, %v2802
        %v2804 = vpop.f32.mrb[0].mxu0
        %v2805 = vpop.f32.mrb[0].mxu0
        %v2806 = vadd.f32 0.0, %v2805
        %v2807 = vpop.f32.mrb[0].mxu0
        %2808 = vmatprep.mubr.bf16.mxu0 0
        %2809 = vmatmul.mubr.bf16.gmra.mrb[0].mxu0 %v1999
        %v2810 = vpop.f32.mrb[0].mxu0
        %v2811 = vadd.f32 0.0, %v2810
        %v2812 = vpop.f32.mrb[0].mxu0
        %v2813 = vpop.f32.mrb[0].mxu0
        %v2814 = vadd.f32 0.0, %v2813
        %v2815 = vpop.f32.mrb[0].mxu0
        %2816 = vmatprep.mubr.bf16.mxu0 0
        %2817 = vmatmul.mubr.bf16.gmra.mrb[0].mxu0 %v2002
        %v2818 = vpop.f32.mrb[0].mxu0
        %v2819 = vadd.f32 0.0, %v2818
        %v2820 = vpop.f32.mrb[0].mxu0
        %v2821 = vpop.f32.mrb[0].mxu0
        %v2822 = vadd.f32 0.0, %v2821
        %v2823 = vpop.f32.mrb[0].mxu0
        %2824 = vmatprep.mubr.bf16.mxu0 0
        %2825 = vmatmul.mubr.bf16.gmra.mrb[0].mxu0 %v2005
        %v2826 = vpop.f32.mrb[0].mxu0
        %v2827 = vadd.f32 0.0, %v2826
        %v2828 = vpop.f32.mrb[0].mxu0
        %v2829 = vpop.f32.mrb[0].mxu0
        %v2830 = vadd.f32 0.0, %v2829
        %v2831 = vpop.f32.mrb[0].mxu0
        %2832 = vmatprep.mubr.bf16.mxu0 0
        %2833 = vmatmul.mubr.bf16.gmra.mrb[0].mxu0 %v2008
        %v2834 = vpop.f32.mrb[0].mxu0
        %v2835 = vadd.f32 0.0, %v2834
        %v2836 = vpop.f32.mrb[0].mxu0
        %v2837 = vpop.f32.mrb[0].mxu0
        %v2838 = vadd.f32 0.0, %v2837
        %v2839 = vpop.f32.mrb[0].mxu0
        %2840 = vmatprep.mubr.bf16.mxu0 0
        %2841 = vmatmul.mubr.bf16.gmra.mrb[0].mxu0 %v1981
        %v2842 = vpop.f32.mrb[0].mxu0
        %v2843 = vpop.f32.mrb[0].mxu0
        %v2844 = vpop.f32.mrb[0].mxu0
        %v2845 = vpop.f32.mrb[0].mxu0
        %2846 = vdwg.mxu0
        %v2847 = vadd.f32 %v2689, %v2779
        %v2848 = vadd.f32 %v2690, %v2782
        %v2849 = vadd.f32 %v2691, %v2787
        %v2850 = vadd.f32 %v2692, %v2790
        %v2851 = vadd.f32 %v2693, %v2795
        %v2852 = vadd.f32 %v2694, %v2798
        %v2853 = vadd.f32 %v2695, %v2803
        %v2854 = vadd.f32 %v2696, %v2806
        %v2855 = vadd.f32 %v2697, %v2811
        %v2856 = vadd.f32 %v2698, %v2814
        %v2857 = vadd.f32 %v2699, %v2819
        %v2858 = vadd.f32 %v2700, %v2822
        %v2859 = vadd.f32 %v2701, %v2827
        %v2860 = vadd.f32 %v2702, %v2830
        %v2861 = vadd.f32 %v2703, %v2835
        %v2862 = vadd.f32 %v2704, %v2838
        %s2863 = scalar_lea.vmem [#allocation17], 160
        %v2864 = vld [vmem:[%s2863] sm:$0xf]
        %v2865 = vld [vmem:[%s2863 + $0x4] sm:$0xf]
        %v2866 = vld [vmem:[%s2863 + $0x8] sm:$0xf]
        %v2867 = vld [vmem:[%s2863 + $0xc] sm:$0xf]
        %v2868 = vld [vmem:[%s2863 + $0x10] sm:$0xf]
        %v2869 = vld [vmem:[%s2863 + $0x14] sm:$0xf]
        %v2870 = vld [vmem:[%s2863 + $0x18] sm:$0xf]
        %v2871 = vld [vmem:[%s2863 + $0x1c] sm:$0xf]
        %v2880 = vunpack.c.l.b16 %v2864
        %v2881 = vunpack.c.l.b16 %v2865
        %v2882 = vunpack.c.l.b16 %v2866
        %v2883 = vunpack.c.l.b16 %v2867
        %v2884 = vunpack.c.l.b16 %v2868
        %v2885 = vunpack.c.l.b16 %v2869
        %v2886 = vunpack.c.l.b16 %v2870
        %v2887 = vunpack.c.l.b16 %v2871
        %v2888 = vpack.c.b16 %v2881, %v2880
        %v2889 = vpack.c.b16 %v2883, %v2882
        %v2890 = vpack.c.b16 %v2885, %v2884
        %v2891 = vpack.c.b16 %v2887, %v2886
        %2896 = vmatprep.subr.bf16.mxu0 0
        %2897 = vmatpush1.bf16.msra.mxu0 %v2888
        %2898 = vmatprep.subr.bf16.mxu0 0
        %2899 = vmatpush1.bf16.msra.mxu0 %v2889
        %2900 = vmatprep.subr.bf16.mxu0 0
        %2901 = vmatpush1.bf16.msra.mxu0 %v2890
        %2902 = vmatprep.subr.bf16.mxu0 0
        %2903 = vmatpush1.bf16.msra.mxu0 %v2891
        %2904 = vmatprep.subr.bf16.mxu0 0
        %2905 = vmatpush1.bf16.msra.mxu0 0
        %2906 = vmatprep.subr.bf16.mxu0 0
        %2907 = vmatpush1.bf16.msra.mxu0 0
        %2908 = vmatprep.subr.bf16.mxu0 0
        %2909 = vmatpush1.bf16.msra.mxu0 0
        %2910 = vmatprep.subr.bf16.mxu0 0
        %2911 = vmatpush1.bf16.msra.mxu0 0
        %2912 = vmatprep.subr.bf16.mxu0 0
        %2913 = vmatpush1.bf16.msra.mxu0 0
        %2914 = vmatprep.subr.bf16.mxu0 0
        %2915 = vmatpush1.bf16.msra.mxu0 0
        %2916 = vmatprep.subr.bf16.mxu0 0
        %2917 = vmatpush1.bf16.msra.mxu0 0
        %2918 = vmatprep.subr.bf16.mxu0 0
        %2919 = vmatpush1.bf16.msra.mxu0 0
        %2920 = vmatprep.subr.bf16.mxu0 0
        %2921 = vmatpush1.bf16.msra.mxu0 0
        %2922 = vmatprep.subr.bf16.mxu0 0
        %2923 = vmatpush1.bf16.msra.mxu0 0
        %2924 = vmatprep.subr.bf16.mxu0 0
        %2925 = vmatpush1.bf16.msra.mxu0 0
        %2926 = vmatprep.subr.bf16.mxu0 0
        %2927 = vmatpush1.bf16.msra.mxu0 0
        %2928 = vmatprep.mubr.bf16.mxu0 0
        %2929 = vmatmul.mubr.bf16.gmra.mrb[0].mxu0 %v2396
        %v2930 = vpop.f32.mrb[0].mxu0
        %v2931 = vpop.f32.mrb[0].mxu0
        %v2932 = vpop.f32.mrb[0].mxu0
        %v2933 = vpop.f32.mrb[0].mxu0
        %2934 = vmatprep.mubr.bf16.mxu0 0
        %2935 = vmatmul.mubr.bf16.gmra.mrb[0].mxu0 %v2399
        %v2936 = vpop.f32.mrb[0].mxu0
        %v2937 = vadd.f32 0.0, %v2936
        %v2938 = vpop.f32.mrb[0].mxu0
        %v2939 = vpop.f32.mrb[0].mxu0
        %v2940 = vadd.f32 0.0, %v2939
        %v2941 = vpop.f32.mrb[0].mxu0
        %2942 = vmatprep.mubr.bf16.mxu0 0
        %2943 = vmatmul.mubr.bf16.gmra.mrb[0].mxu0 %v2402
        %v2944 = vpop.f32.mrb[0].mxu0
        %v2945 = vadd.f32 0.0, %v2944
        %v2946 = vpop.f32.mrb[0].mxu0
        %v2947 = vpop.f32.mrb[0].mxu0
        %v2948 = vadd.f32 0.0, %v2947
        %v2949 = vpop.f32.mrb[0].mxu0
        %2950 = vmatprep.mubr.bf16.mxu0 0
        %2951 = vmatmul.mubr.bf16.gmra.mrb[0].mxu0 %v2405
        %v2952 = vpop.f32.mrb[0].mxu0
        %v2953 = vadd.f32 0.0, %v2952
        %v2954 = vpop.f32.mrb[0].mxu0
        %v2955 = vpop.f32.mrb[0].mxu0
        %v2956 = vadd.f32 0.0, %v2955
        %v2957 = vpop.f32.mrb[0].mxu0
        %2958 = vmatprep.mubr.bf16.mxu0 0
        %2959 = vmatmul.mubr.bf16.gmra.mrb[0].mxu0 %v2408
        %v2960 = vpop.f32.mrb[0].mxu0
        %v2961 = vadd.f32 0.0, %v2960
        %v2962 = vpop.f32.mrb[0].mxu0
        %v2963 = vpop.f32.mrb[0].mxu0
        %v2964 = vadd.f32 0.0, %v2963
        %v2965 = vpop.f32.mrb[0].mxu0
        %2966 = vmatprep.mubr.bf16.mxu0 0
        %2967 = vmatmul.mubr.bf16.gmra.mrb[0].mxu0 %v2411
        %v2968 = vpop.f32.mrb[0].mxu0
        %v2969 = vadd.f32 0.0, %v2968
        %v2970 = vpop.f32.mrb[0].mxu0
        %v2971 = vpop.f32.mrb[0].mxu0
        %v2972 = vadd.f32 0.0, %v2971
        %v2973 = vpop.f32.mrb[0].mxu0
        %2974 = vmatprep.mubr.bf16.mxu0 0
        %2975 = vmatmul.mubr.bf16.gmra.mrb[0].mxu0 %v2414
        %v2976 = vpop.f32.mrb[0].mxu0
        %v2977 = vadd.f32 0.0, %v2976
        %v2978 = vpop.f32.mrb[0].mxu0
        %v2979 = vpop.f32.mrb[0].mxu0
        %v2980 = vadd.f32 0.0, %v2979
        %v2981 = vpop.f32.mrb[0].mxu0
        %2982 = vmatprep.mubr.bf16.mxu0 0
        %2983 = vmatmul.mubr.bf16.gmra.mrb[0].mxu0 %v2417
        %v2984 = vpop.f32.mrb[0].mxu0
        %v2985 = vadd.f32 0.0, %v2984
        %v2986 = vpop.f32.mrb[0].mxu0
        %v2987 = vpop.f32.mrb[0].mxu0
        %v2988 = vadd.f32 0.0, %v2987
        %v2989 = vpop.f32.mrb[0].mxu0
        %2990 = vmatprep.mubr.bf16.mxu0 0
        %2991 = vmatmul.mubr.bf16.gmra.mrb[0].mxu0 %v2420
        %v2992 = vpop.f32.mrb[0].mxu0
        %v2993 = vadd.f32 0.0, %v2992
        %v2994 = vpop.f32.mrb[0].mxu0
        %v2995 = vpop.f32.mrb[0].mxu0
        %v2996 = vadd.f32 0.0, %v2995
        %v2997 = vpop.f32.mrb[0].mxu0
        %2998 = vmatprep.mubr.bf16.mxu0 0
        %2999 = vmatmul.mubr.bf16.gmra.mrb[0].mxu0 %v2393
        %v3000 = vpop.f32.mrb[0].mxu0
        %v3001 = vpop.f32.mrb[0].mxu0
        %v3002 = vpop.f32.mrb[0].mxu0
        %v3003 = vpop.f32.mrb[0].mxu0
        %3004 = vdwg.mxu0
        %v3005 = vadd.f32 %v2847, %v2937
        %v3006 = vadd.f32 %v2848, %v2940
        %v3007 = vadd.f32 %v2849, %v2945
        %v3008 = vadd.f32 %v2850, %v2948
        %v3009 = vadd.f32 %v2851, %v2953
        %v3010 = vadd.f32 %v2852, %v2956
        %v3011 = vadd.f32 %v2853, %v2961
        %v3012 = vadd.f32 %v2854, %v2964
        %v3013 = vadd.f32 %v2855, %v2969
        %v3014 = vadd.f32 %v2856, %v2972
        %v3015 = vadd.f32 %v2857, %v2977
        %v3016 = vadd.f32 %v2858, %v2980
        %v3017 = vadd.f32 %v2859, %v2985
        %v3018 = vadd.f32 %v2860, %v2988
        %v3019 = vadd.f32 %v2861, %v2993
        %v3020 = vadd.f32 %v2862, %v2996
        %s3021 = scalar_lea.vmem [#allocation17], 192
        %v3022 = vld [vmem:[%s3021] sm:$0xf]
        %v3023 = vld [vmem:[%s3021 + $0x4] sm:$0xf]
        %v3024 = vld [vmem:[%s3021 + $0x8] sm:$0xf]
        %v3025 = vld [vmem:[%s3021 + $0xc] sm:$0xf]
        %v3026 = vld [vmem:[%s3021 + $0x10] sm:$0xf]
        %v3027 = vld [vmem:[%s3021 + $0x14] sm:$0xf]
        %v3028 = vld [vmem:[%s3021 + $0x18] sm:$0xf]
        %v3029 = vld [vmem:[%s3021 + $0x1c] sm:$0xf]
        %v3038 = vunpack.c.l.b16 %v3022
        %v3039 = vunpack.c.l.b16 %v3023
        %v3040 = vunpack.c.l.b16 %v3024
        %v3041 = vunpack.c.l.b16 %v3025
        %v3042 = vunpack.c.l.b16 %v3026
        %v3043 = vunpack.c.l.b16 %v3027
        %v3044 = vunpack.c.l.b16 %v3028
        %v3045 = vunpack.c.l.b16 %v3029
        %v3046 = vpack.c.b16 %v3039, %v3038
        %v3047 = vpack.c.b16 %v3041, %v3040
        %v3048 = vpack.c.b16 %v3043, %v3042
        %v3049 = vpack.c.b16 %v3045, %v3044
        %3054 = vmatprep.subr.bf16.mxu0 0
        %3055 = vmatpush1.bf16.msra.mxu0 %v3046
        %3056 = vmatprep.subr.bf16.mxu0 0
        %3057 = vmatpush1.bf16.msra.mxu0 %v3047
        %3058 = vmatprep.subr.bf16.mxu0 0
        %3059 = vmatpush1.bf16.msra.mxu0 %v3048
        %3060 = vmatprep.subr.bf16.mxu0 0
        %3061 = vmatpush1.bf16.msra.mxu0 %v3049
        %3062 = vmatprep.subr.bf16.mxu0 0
        %3063 = vmatpush1.bf16.msra.mxu0 0
        %3064 = vmatprep.subr.bf16.mxu0 0
        %3065 = vmatpush1.bf16.msra.mxu0 0
        %3066 = vmatprep.subr.bf16.mxu0 0
        %3067 = vmatpush1.bf16.msra.mxu0 0
        %3068 = vmatprep.subr.bf16.mxu0 0
        %3069 = vmatpush1.bf16.msra.mxu0 0
        %3070 = vmatprep.subr.bf16.mxu0 0
        %3071 = vmatpush1.bf16.msra.mxu0 0
        %3072 = vmatprep.subr.bf16.mxu0 0
        %3073 = vmatpush1.bf16.msra.mxu0 0
        %3074 = vmatprep.subr.bf16.mxu0 0
        %3075 = vmatpush1.bf16.msra.mxu0 0
        %3076 = vmatprep.subr.bf16.mxu0 0
        %3077 = vmatpush1.bf16.msra.mxu0 0
        %3078 = vmatprep.subr.bf16.mxu0 0
        %3079 = vmatpush1.bf16.msra.mxu0 0
        %3080 = vmatprep.subr.bf16.mxu0 0
        %3081 = vmatpush1.bf16.msra.mxu0 0
        %3082 = vmatprep.subr.bf16.mxu0 0
        %3083 = vmatpush1.bf16.msra.mxu0 0
        %3084 = vmatprep.subr.bf16.mxu0 0
        %3085 = vmatpush1.bf16.msra.mxu0 0
        %3086 = vmatprep.mubr.bf16.mxu0 0
        %3087 = vmatmul.mubr.bf16.gmra.mrb[0].mxu0 %v2150
        %v3088 = vpop.f32.mrb[0].mxu0
        %v3089 = vpop.f32.mrb[0].mxu0
        %v3090 = vpop.f32.mrb[0].mxu0
        %v3091 = vpop.f32.mrb[0].mxu0
        %3092 = vmatprep.mubr.bf16.mxu0 0
        %3093 = vmatmul.mubr.bf16.gmra.mrb[0].mxu0 %v2153
        %v3094 = vpop.f32.mrb[0].mxu0
        %v3095 = vadd.f32 0.0, %v3094
        %v3096 = vpop.f32.mrb[0].mxu0
        %v3097 = vpop.f32.mrb[0].mxu0
        %v3098 = vadd.f32 0.0, %v3097
        %v3099 = vpop.f32.mrb[0].mxu0
        %3100 = vmatprep.mubr.bf16.mxu0 0
        %3101 = vmatmul.mubr.bf16.gmra.mrb[0].mxu0 %v2156
        %v3102 = vpop.f32.mrb[0].mxu0
        %v3103 = vadd.f32 0.0, %v3102
        %v3104 = vpop.f32.mrb[0].mxu0
        %v3105 = vpop.f32.mrb[0].mxu0
        %v3106 = vadd.f32 0.0, %v3105
        %v3107 = vpop.f32.mrb[0].mxu0
        %3108 = vmatprep.mubr.bf16.mxu0 0
        %3109 = vmatmul.mubr.bf16.gmra.mrb[0].mxu0 %v2159
        %v3110 = vpop.f32.mrb[0].mxu0
        %v3111 = vadd.f32 0.0, %v3110
        %v3112 = vpop.f32.mrb[0].mxu0
        %v3113 = vpop.f32.mrb[0].mxu0
        %v3114 = vadd.f32 0.0, %v3113
        %v3115 = vpop.f32.mrb[0].mxu0
        %3116 = vmatprep.mubr.bf16.mxu0 0
        %3117 = vmatmul.mubr.bf16.gmra.mrb[0].mxu0 %v2162
        %v3118 = vpop.f32.mrb[0].mxu0
        %v3119 = vadd.f32 0.0, %v3118
        %v3120 = vpop.f32.mrb[0].mxu0
        %v3121 = vpop.f32.mrb[0].mxu0
        %v3122 = vadd.f32 0.0, %v3121
        %v3123 = vpop.f32.mrb[0].mxu0
        %3124 = vmatprep.mubr.bf16.mxu0 0
        %3125 = vmatmul.mubr.bf16.gmra.mrb[0].mxu0 %v2165
        %v3126 = vpop.f32.mrb[0].mxu0
        %v3127 = vadd.f32 0.0, %v3126
        %v3128 = vpop.f32.mrb[0].mxu0
        %v3129 = vpop.f32.mrb[0].mxu0
        %v3130 = vadd.f32 0.0, %v3129
        %v3131 = vpop.f32.mrb[0].mxu0
        %3132 = vmatprep.mubr.bf16.mxu0 0
        %3133 = vmatmul.mubr.bf16.gmra.mrb[0].mxu0 %v2168
        %v3134 = vpop.f32.mrb[0].mxu0
        %v3135 = vadd.f32 0.0, %v3134
        %v3136 = vpop.f32.mrb[0].mxu0
        %v3137 = vpop.f32.mrb[0].mxu0
        %v3138 = vadd.f32 0.0, %v3137
        %v3139 = vpop.f32.mrb[0].mxu0
        %3140 = vmatprep.mubr.bf16.mxu0 0
        %3141 = vmatmul.mubr.bf16.gmra.mrb[0].mxu0 %v2171
        %v3142 = vpop.f32.mrb[0].mxu0
        %v3143 = vadd.f32 0.0, %v3142
        %v3144 = vpop.f32.mrb[0].mxu0
        %v3145 = vpop.f32.mrb[0].mxu0
        %v3146 = vadd.f32 0.0, %v3145
        %v3147 = vpop.f32.mrb[0].mxu0
        %3148 = vmatprep.mubr.bf16.mxu0 0
        %3149 = vmatmul.mubr.bf16.gmra.mrb[0].mxu0 %v2144
        %v3150 = vpop.f32.mrb[0].mxu0
        %v3151 = vadd.f32 0.0, %v3150
        %v3152 = vpop.f32.mrb[0].mxu0
        %v3153 = vpop.f32.mrb[0].mxu0
        %v3154 = vadd.f32 0.0, %v3153
        %v3155 = vpop.f32.mrb[0].mxu0
        %3156 = vmatprep.mubr.bf16.mxu0 0
        %3157 = vmatmul.mubr.bf16.gmra.mrb[0].mxu0 %v2147
        %v3158 = vpop.f32.mrb[0].mxu0
        %v3159 = vpop.f32.mrb[0].mxu0
        %v3160 = vpop.f32.mrb[0].mxu0
        %v3161 = vpop.f32.mrb[0].mxu0
        %3162 = vdwg.mxu0
        %v3163 = vadd.f32 %v3005, %v3095
        %v3164 = vadd.f32 %v3006, %v3098
        %v3165 = vadd.f32 %v3007, %v3103
        %v3166 = vadd.f32 %v3008, %v3106
        %v3167 = vadd.f32 %v3009, %v3111
        %v3168 = vadd.f32 %v3010, %v3114
        %v3169 = vadd.f32 %v3011, %v3119
        %v3170 = vadd.f32 %v3012, %v3122
        %v3171 = vadd.f32 %v3013, %v3127
        %v3172 = vadd.f32 %v3014, %v3130
        %v3173 = vadd.f32 %v3015, %v3135
        %v3174 = vadd.f32 %v3016, %v3138
        %v3175 = vadd.f32 %v3017, %v3143
        %v3176 = vadd.f32 %v3018, %v3146
        %v3177 = vadd.f32 %v3019, %v3151
        %v3178 = vadd.f32 %v3020, %v3154
        %s3179 = scalar_lea.vmem [#allocation17], 224
        %v3180 = vld [vmem:[%s3179] sm:$0xf]
        %v3181 = vld [vmem:[%s3179 + $0x4] sm:$0xf]
        %v3182 = vld [vmem:[%s3179 + $0x8] sm:$0xf]
        %v3183 = vld [vmem:[%s3179 + $0xc] sm:$0xf]
        %v3184 = vld [vmem:[%s3179 + $0x10] sm:$0xf]
        %v3185 = vld [vmem:[%s3179 + $0x14] sm:$0xf]
        %v3186 = vld [vmem:[%s3179 + $0x18] sm:$0xf]
        %v3187 = vld [vmem:[%s3179 + $0x1c] sm:$0xf]
        %v3196 = vunpack.c.l.b16 %v3180
        %v3197 = vunpack.c.l.b16 %v3181
        %v3198 = vunpack.c.l.b16 %v3182
        %v3199 = vunpack.c.l.b16 %v3183
        %v3200 = vunpack.c.l.b16 %v3184
        %v3201 = vunpack.c.l.b16 %v3185
        %v3202 = vunpack.c.l.b16 %v3186
        %v3203 = vunpack.c.l.b16 %v3187
        %v3204 = vpack.c.b16 %v3197, %v3196
        %v3205 = vpack.c.b16 %v3199, %v3198
        %v3206 = vpack.c.b16 %v3201, %v3200
        %v3207 = vpack.c.b16 %v3203, %v3202
        %3212 = vmatprep.subr.bf16.mxu0 0
        %3213 = vmatpush1.bf16.msra.mxu0 %v3204
        %3214 = vmatprep.subr.bf16.mxu0 0
        %3215 = vmatpush1.bf16.msra.mxu0 %v3205
        %3216 = vmatprep.subr.bf16.mxu0 0
        %3217 = vmatpush1.bf16.msra.mxu0 %v3206
        %3218 = vmatprep.subr.bf16.mxu0 0
        %3219 = vmatpush1.bf16.msra.mxu0 %v3207
        %3220 = vmatprep.subr.bf16.mxu0 0
        %3221 = vmatpush1.bf16.msra.mxu0 0
        %3222 = vmatprep.subr.bf16.mxu0 0
        %3223 = vmatpush1.bf16.msra.mxu0 0
        %3224 = vmatprep.subr.bf16.mxu0 0
        %3225 = vmatpush1.bf16.msra.mxu0 0
        %3226 = vmatprep.subr.bf16.mxu0 0
        %3227 = vmatpush1.bf16.msra.mxu0 0
        %3228 = vmatprep.subr.bf16.mxu0 0
        %3229 = vmatpush1.bf16.msra.mxu0 0
        %3230 = vmatprep.subr.bf16.mxu0 0
        %3231 = vmatpush1.bf16.msra.mxu0 0
        %3232 = vmatprep.subr.bf16.mxu0 0
        %3233 = vmatpush1.bf16.msra.mxu0 0
        %3234 = vmatprep.subr.bf16.mxu0 0
        %3235 = vmatpush1.bf16.msra.mxu0 0
        %3236 = vmatprep.subr.bf16.mxu0 0
        %3237 = vmatpush1.bf16.msra.mxu0 0
        %3238 = vmatprep.subr.bf16.mxu0 0
        %3239 = vmatpush1.bf16.msra.mxu0 0
        %3240 = vmatprep.subr.bf16.mxu0 0
        %3241 = vmatpush1.bf16.msra.mxu0 0
        %3242 = vmatprep.subr.bf16.mxu0 0
        %3243 = vmatpush1.bf16.msra.mxu0 0
        %3244 = vmatprep.mubr.bf16.mxu0 0
        %3245 = vmatmul.mubr.bf16.gmra.mrb[0].mxu0 %v1987
        %v3246 = vpop.f32.mrb[0].mxu0
        %v3247 = vpop.f32.mrb[0].mxu0
        %v3248 = vpop.f32.mrb[0].mxu0
        %v3249 = vpop.f32.mrb[0].mxu0
        %3250 = vmatprep.mubr.bf16.mxu0 0
        %3251 = vmatmul.mubr.bf16.gmra.mrb[0].mxu0 %v1990
        %v3252 = vpop.f32.mrb[0].mxu0
        %v3253 = vadd.f32 0.0, %v3252
        %v3254 = vpop.f32.mrb[0].mxu0
        %v3255 = vpop.f32.mrb[0].mxu0
        %v3256 = vadd.f32 0.0, %v3255
        %v3257 = vpop.f32.mrb[0].mxu0
        %3258 = vmatprep.mubr.bf16.mxu0 0
        %3259 = vmatmul.mubr.bf16.gmra.mrb[0].mxu0 %v1993
        %v3260 = vpop.f32.mrb[0].mxu0
        %v3261 = vadd.f32 0.0, %v3260
        %v3262 = vpop.f32.mrb[0].mxu0
        %v3263 = vpop.f32.mrb[0].mxu0
        %v3264 = vadd.f32 0.0, %v3263
        %v3265 = vpop.f32.mrb[0].mxu0
        %3266 = vmatprep.mubr.bf16.mxu0 0
        %3267 = vmatmul.mubr.bf16.gmra.mrb[0].mxu0 %v1996
        %v3268 = vpop.f32.mrb[0].mxu0
        %v3269 = vadd.f32 0.0, %v3268
        %v3270 = vpop.f32.mrb[0].mxu0
        %v3271 = vpop.f32.mrb[0].mxu0
        %v3272 = vadd.f32 0.0, %v3271
        %v3273 = vpop.f32.mrb[0].mxu0
        %3274 = vmatprep.mubr.bf16.mxu0 0
        %3275 = vmatmul.mubr.bf16.gmra.mrb[0].mxu0 %v1999
        %v3276 = vpop.f32.mrb[0].mxu0
        %v3277 = vadd.f32 0.0, %v3276
        %v3278 = vpop.f32.mrb[0].mxu0
        %v3279 = vpop.f32.mrb[0].mxu0
        %v3280 = vadd.f32 0.0, %v3279
        %v3281 = vpop.f32.mrb[0].mxu0
        %3282 = vmatprep.mubr.bf16.mxu0 0
        %3283 = vmatmul.mubr.bf16.gmra.mrb[0].mxu0 %v2002
        %v3284 = vpop.f32.mrb[0].mxu0
        %v3285 = vadd.f32 0.0, %v3284
        %v3286 = vpop.f32.mrb[0].mxu0
        %v3287 = vpop.f32.mrb[0].mxu0
        %v3288 = vadd.f32 0.0, %v3287
        %v3289 = vpop.f32.mrb[0].mxu0
        %3290 = vmatprep.mubr.bf16.mxu0 0
        %3291 = vmatmul.mubr.bf16.gmra.mrb[0].mxu0 %v2005
        %v3292 = vpop.f32.mrb[0].mxu0
        %v3293 = vadd.f32 0.0, %v3292
        %v3294 = vpop.f32.mrb[0].mxu0
        %v3295 = vpop.f32.mrb[0].mxu0
        %v3296 = vadd.f32 0.0, %v3295
        %v3297 = vpop.f32.mrb[0].mxu0
        %3298 = vmatprep.mubr.bf16.mxu0 0
        %3299 = vmatmul.mubr.bf16.gmra.mrb[0].mxu0 %v2008
        %v3300 = vpop.f32.mrb[0].mxu0
        %v3301 = vadd.f32 0.0, %v3300
        %v3302 = vpop.f32.mrb[0].mxu0
        %v3303 = vpop.f32.mrb[0].mxu0
        %v3304 = vadd.f32 0.0, %v3303
        %v3305 = vpop.f32.mrb[0].mxu0
        %3306 = vmatprep.mubr.bf16.mxu0 0
        %3307 = vmatmul.mubr.bf16.gmra.mrb[0].mxu0 %v1981
        %v3308 = vpop.f32.mrb[0].mxu0
        %v3309 = vadd.f32 0.0, %v3308
        %v3310 = vpop.f32.mrb[0].mxu0
        %v3311 = vpop.f32.mrb[0].mxu0
        %v3312 = vadd.f32 0.0, %v3311
        %v3313 = vpop.f32.mrb[0].mxu0
        %3314 = vmatprep.mubr.bf16.mxu0 0
        %3315 = vmatmul.mubr.bf16.gmra.mrb[0].mxu0 %v1984
        %v3316 = vpop.f32.mrb[0].mxu0
        %v3317 = vpop.f32.mrb[0].mxu0
        %v3318 = vpop.f32.mrb[0].mxu0
        %v3319 = vpop.f32.mrb[0].mxu0
        %3320 = vdwg.mxu0
        %v3321 = vadd.f32 %v3163, %v3253
        %v3322 = vadd.f32 %v3164, %v3256
        %v3323 = vadd.f32 %v3165, %v3261
        %v3324 = vadd.f32 %v3166, %v3264
        %v3325 = vadd.f32 %v3167, %v3269
        %v3326 = vadd.f32 %v3168, %v3272
        %v3327 = vadd.f32 %v3169, %v3277
        %v3328 = vadd.f32 %v3170, %v3280
        %v3329 = vadd.f32 %v3171, %v3285
        %v3330 = vadd.f32 %v3172, %v3288
        %v3331 = vadd.f32 %v3173, %v3293
        %v3332 = vadd.f32 %v3174, %v3296
        %v3333 = vadd.f32 %v3175, %v3301
        %v3334 = vadd.f32 %v3176, %v3304
        %v3335 = vadd.f32 %v3177, %v3309
        %v3336 = vadd.f32 %v3178, %v3312
        %s3337 = scalar_lea.vmem [#allocation17], 256
        %v3338 = vld [vmem:[%s3337] sm:$0xf]
        %v3339 = vld [vmem:[%s3337 + $0x4] sm:$0xf]
        %v3340 = vld [vmem:[%s3337 + $0x8] sm:$0xf]
        %v3341 = vld [vmem:[%s3337 + $0xc] sm:$0xf]
        %v3342 = vld [vmem:[%s3337 + $0x10] sm:$0xf]
        %v3343 = vld [vmem:[%s3337 + $0x14] sm:$0xf]
        %v3344 = vld [vmem:[%s3337 + $0x18] sm:$0xf]
        %v3345 = vld [vmem:[%s3337 + $0x1c] sm:$0xf]
        %v3354 = vunpack.c.l.b16 %v3338
        %v3355 = vunpack.c.l.b16 %v3339
        %v3356 = vunpack.c.l.b16 %v3340
        %v3357 = vunpack.c.l.b16 %v3341
        %v3358 = vunpack.c.l.b16 %v3342
        %v3359 = vunpack.c.l.b16 %v3343
        %v3360 = vunpack.c.l.b16 %v3344
        %v3361 = vunpack.c.l.b16 %v3345
        %v3362 = vpack.c.b16 %v3355, %v3354
        %v3363 = vpack.c.b16 %v3357, %v3356
        %v3364 = vpack.c.b16 %v3359, %v3358
        %v3365 = vpack.c.b16 %v3361, %v3360
        %3370 = vmatprep.subr.bf16.mxu0 0
        %3371 = vmatpush1.bf16.msra.mxu0 %v3362
        %3372 = vmatprep.subr.bf16.mxu0 0
        %3373 = vmatpush1.bf16.msra.mxu0 %v3363
        %3374 = vmatprep.subr.bf16.mxu0 0
        %3375 = vmatpush1.bf16.msra.mxu0 %v3364
        %3376 = vmatprep.subr.bf16.mxu0 0
        %3377 = vmatpush1.bf16.msra.mxu0 %v3365
        %3378 = vmatprep.subr.bf16.mxu0 0
        %3379 = vmatpush1.bf16.msra.mxu0 0
        %3380 = vmatprep.subr.bf16.mxu0 0
        %3381 = vmatpush1.bf16.msra.mxu0 0
        %3382 = vmatprep.subr.bf16.mxu0 0
        %3383 = vmatpush1.bf16.msra.mxu0 0
        %3384 = vmatprep.subr.bf16.mxu0 0
        %3385 = vmatpush1.bf16.msra.mxu0 0
        %3386 = vmatprep.subr.bf16.mxu0 0
        %3387 = vmatpush1.bf16.msra.mxu0 0
        %3388 = vmatprep.subr.bf16.mxu0 0
        %3389 = vmatpush1.bf16.msra.mxu0 0
        %3390 = vmatprep.subr.bf16.mxu0 0
        %3391 = vmatpush1.bf16.msra.mxu0 0
        %3392 = vmatprep.subr.bf16.mxu0 0
        %3393 = vmatpush1.bf16.msra.mxu0 0
        %3394 = vmatprep.subr.bf16.mxu0 0
        %3395 = vmatpush1.bf16.msra.mxu0 0
        %3396 = vmatprep.subr.bf16.mxu0 0
        %3397 = vmatpush1.bf16.msra.mxu0 0
        %3398 = vmatprep.subr.bf16.mxu0 0
        %3399 = vmatpush1.bf16.msra.mxu0 0
        %3400 = vmatprep.subr.bf16.mxu0 0
        %3401 = vmatpush1.bf16.msra.mxu0 0
        %3402 = vmatprep.mubr.bf16.mxu0 0
        %3403 = vmatmul.mubr.bf16.gmra.mrb[0].mxu0 %v2399
        %v3404 = vpop.f32.mrb[0].mxu0
        %v3405 = vpop.f32.mrb[0].mxu0
        %v3406 = vpop.f32.mrb[0].mxu0
        %v3407 = vpop.f32.mrb[0].mxu0
        %3408 = vmatprep.mubr.bf16.mxu0 0
        %3409 = vmatmul.mubr.bf16.gmra.mrb[0].mxu0 %v2402
        %v3410 = vpop.f32.mrb[0].mxu0
        %v3411 = vadd.f32 0.0, %v3410
        %v3412 = vpop.f32.mrb[0].mxu0
        %v3413 = vpop.f32.mrb[0].mxu0
        %v3414 = vadd.f32 0.0, %v3413
        %v3415 = vpop.f32.mrb[0].mxu0
        %3416 = vmatprep.mubr.bf16.mxu0 0
        %3417 = vmatmul.mubr.bf16.gmra.mrb[0].mxu0 %v2405
        %v3418 = vpop.f32.mrb[0].mxu0
        %v3419 = vadd.f32 0.0, %v3418
        %v3420 = vpop.f32.mrb[0].mxu0
        %v3421 = vpop.f32.mrb[0].mxu0
        %v3422 = vadd.f32 0.0, %v3421
        %v3423 = vpop.f32.mrb[0].mxu0
        %3424 = vmatprep.mubr.bf16.mxu0 0
        %3425 = vmatmul.mubr.bf16.gmra.mrb[0].mxu0 %v2408
        %v3426 = vpop.f32.mrb[0].mxu0
        %v3427 = vadd.f32 0.0, %v3426
        %v3428 = vpop.f32.mrb[0].mxu0
        %v3429 = vpop.f32.mrb[0].mxu0
        %v3430 = vadd.f32 0.0, %v3429
        %v3431 = vpop.f32.mrb[0].mxu0
        %3432 = vmatprep.mubr.bf16.mxu0 0
        %3433 = vmatmul.mubr.bf16.gmra.mrb[0].mxu0 %v2411
        %v3434 = vpop.f32.mrb[0].mxu0
        %v3435 = vadd.f32 0.0, %v3434
        %v3436 = vpop.f32.mrb[0].mxu0
        %v3437 = vpop.f32.mrb[0].mxu0
        %v3438 = vadd.f32 0.0, %v3437
        %v3439 = vpop.f32.mrb[0].mxu0
        %3440 = vmatprep.mubr.bf16.mxu0 0
        %3441 = vmatmul.mubr.bf16.gmra.mrb[0].mxu0 %v2414
        %v3442 = vpop.f32.mrb[0].mxu0
        %v3443 = vadd.f32 0.0, %v3442
        %v3444 = vpop.f32.mrb[0].mxu0
        %v3445 = vpop.f32.mrb[0].mxu0
        %v3446 = vadd.f32 0.0, %v3445
        %v3447 = vpop.f32.mrb[0].mxu0
        %3448 = vmatprep.mubr.bf16.mxu0 0
        %3449 = vmatmul.mubr.bf16.gmra.mrb[0].mxu0 %v2417
        %v3450 = vpop.f32.mrb[0].mxu0
        %v3451 = vadd.f32 0.0, %v3450
        %v3452 = vpop.f32.mrb[0].mxu0
        %v3453 = vpop.f32.mrb[0].mxu0
        %v3454 = vadd.f32 0.0, %v3453
        %v3455 = vpop.f32.mrb[0].mxu0
        %3456 = vmatprep.mubr.bf16.mxu0 0
        %3457 = vmatmul.mubr.bf16.gmra.mrb[0].mxu0 %v2420
        %v3458 = vpop.f32.mrb[0].mxu0
        %v3459 = vadd.f32 0.0, %v3458
        %v3460 = vpop.f32.mrb[0].mxu0
        %v3461 = vpop.f32.mrb[0].mxu0
        %v3462 = vadd.f32 0.0, %v3461
        %v3463 = vpop.f32.mrb[0].mxu0
        %3464 = vmatprep.mubr.bf16.mxu0 0
        %3465 = vmatmul.mubr.bf16.gmra.mrb[0].mxu0 %v2393
        %v3466 = vpop.f32.mrb[0].mxu0
        %v3467 = vadd.f32 0.0, %v3466
        %v3468 = vpop.f32.mrb[0].mxu0
        %v3469 = vpop.f32.mrb[0].mxu0
        %v3470 = vadd.f32 0.0, %v3469
        %v3471 = vpop.f32.mrb[0].mxu0
        %3472 = vmatprep.mubr.bf16.mxu0 0
        %3473 = vmatmul.mubr.bf16.gmra.mrb[0].mxu0 %v2396
        %v3474 = vpop.f32.mrb[0].mxu0
        %v3475 = vpop.f32.mrb[0].mxu0
        %v3476 = vpop.f32.mrb[0].mxu0
        %v3477 = vpop.f32.mrb[0].mxu0
        %3478 = vdwg.mxu0
        %v3479 = vadd.f32 %v3321, %v3411
        %v3480 = vadd.f32 %v3322, %v3414
        %v3481 = vadd.f32 %v3323, %v3419
        %v3482 = vadd.f32 %v3324, %v3422
        %v3483 = vadd.f32 %v3325, %v3427
        %v3484 = vadd.f32 %v3326, %v3430
        %v3485 = vadd.f32 %v3327, %v3435
        %v3486 = vadd.f32 %v3328, %v3438
        %v3487 = vadd.f32 %v3329, %v3443
        %v3488 = vadd.f32 %v3330, %v3446
        %v3489 = vadd.f32 %v3331, %v3451
        %v3490 = vadd.f32 %v3332, %v3454
        %v3491 = vadd.f32 %v3333, %v3459
        %v3492 = vadd.f32 %v3334, %v3462
        %v3493 = vadd.f32 %v3335, %v3467
        %v3494 = vadd.f32 %v3336, %v3470
        %v3495 = vld [vmem:[#allocation19] sm:$0x1]
        %v3497 = vlaneseq
        %v3498 = vshrl.u32 %v3497, 7
        %v3499 = vsub.s32 0, %v3498
        %v3500 = vrot.slane %v3495, %v3499
        %v3502 = vadd.f32 %v3479, %v3500
        %v3503 = vadd.f32 %v3480, %v3500
        %v3504 = vadd.f32 %v3481, %v3500
        %v3505 = vadd.f32 %v3482, %v3500
        %v3506 = vadd.f32 %v3483, %v3500
        %v3507 = vadd.f32 %v3484, %v3500
        %v3508 = vadd.f32 %v3485, %v3500
        %v3509 = vadd.f32 %v3486, %v3500
        %v3510 = vadd.f32 %v3487, %v3500
        %v3511 = vadd.f32 %v3488, %v3500
        %v3512 = vadd.f32 %v3489, %v3500
        %v3513 = vadd.f32 %v3490, %v3500
        %v3514 = vadd.f32 %v3491, %v3500
        %v3515 = vadd.f32 %v3492, %v3500
        %v3516 = vadd.f32 %v3493, %v3500
        %v3517 = vadd.f32 %v3494, %v3500
        %v3518 = vmax.f32 %v3502, 0.0
        %v3519 = vmax.f32 %v3503, 0.0
        %v3520 = vmax.f32 %v3504, 0.0
        %v3521 = vmax.f32 %v3505, 0.0
        %v3522 = vmax.f32 %v3506, 0.0
        %v3523 = vmax.f32 %v3507, 0.0
        %v3524 = vmax.f32 %v3508, 0.0
        %v3525 = vmax.f32 %v3509, 0.0
        %v3526 = vmax.f32 %v3510, 0.0
        %v3527 = vmax.f32 %v3511, 0.0
        %v3528 = vmax.f32 %v3512, 0.0
        %v3529 = vmax.f32 %v3513, 0.0
        %v3530 = vmax.f32 %v3514, 0.0
        %v3531 = vmax.f32 %v3515, 0.0
        %v3532 = vmax.f32 %v3516, 0.0
        %v3533 = vmax.f32 %v3517, 0.0
        %v3534 = vpack.c.bf16 %v3519, %v3518
        %v3535 = vpack.c.bf16 %v3521, %v3520
        %v3536 = vpack.c.bf16 %v3523, %v3522
        %v3537 = vpack.c.bf16 %v3525, %v3524
        %v3538 = vpack.c.bf16 %v3527, %v3526
        %v3539 = vpack.c.bf16 %v3529, %v3528
        %v3540 = vpack.c.bf16 %v3531, %v3530
        %v3541 = vpack.c.bf16 %v3533, %v3532
        %v3542 = vld [vmem:[#allocation20] sm:$0xf]
        %v3543 = vld [vmem:[#allocation20 + $0x4] sm:$0xf]
        %v3544 = vld [vmem:[#allocation20 + $0x8] sm:$0xf]
        %v3545 = vld [vmem:[#allocation20 + $0xc] sm:$0xf]
        %v3546 = vld [vmem:[#allocation20 + $0x10] sm:$0xf]
        %v3547 = vld [vmem:[#allocation20 + $0x14] sm:$0xf]
        %v3548 = vld [vmem:[#allocation20 + $0x18] sm:$0xf]
        %v3549 = vld [vmem:[#allocation20 + $0x1c] sm:$0xf]
        %v3558 = vunpack.c.l.b16 %v3542
        %v3559 = vunpack.c.l.b16 %v3543
        %v3560 = vunpack.c.l.b16 %v3544
        %v3561 = vunpack.c.l.b16 %v3545
        %v3562 = vunpack.c.l.b16 %v3546
        %v3563 = vunpack.c.l.b16 %v3547
        %v3564 = vunpack.c.l.b16 %v3548
        %v3565 = vunpack.c.l.b16 %v3549
        %v3566 = vpack.c.b16 %v3559, %v3558
        %v3567 = vpack.c.b16 %v3561, %v3560
        %v3568 = vpack.c.b16 %v3563, %v3562
        %v3569 = vpack.c.b16 %v3565, %v3564
        %v3575 = vsel %vm1979, %v3534, 0
        %v3578 = vsel %vm1979, %v3535, 0
        %v3581 = vsel %vm1979, %v3536, 0
        %v3584 = vsel %vm1979, %v3537, 0
        %v3587 = vsel %vm1979, %v3538, 0
        %v3590 = vsel %vm1979, %v3539, 0
        %v3593 = vsel %vm1979, %v3540, 0
        %v3596 = vsel %vm1979, %v3541, 0
        %3598 = vmatprep.subr.bf16.mxu0 0
        %3599 = vmatpush1.bf16.msra.mxu0 %v3566
        %3600 = vmatprep.subr.bf16.mxu0 0
        %3601 = vmatpush1.bf16.msra.mxu0 %v3567
        %3602 = vmatprep.subr.bf16.mxu0 0
        %3603 = vmatpush1.bf16.msra.mxu0 %v3568
        %3604 = vmatprep.subr.bf16.mxu0 0
        %3605 = vmatpush1.bf16.msra.mxu0 %v3569
        %3606 = vmatprep.subr.bf16.mxu0 0
        %3607 = vmatpush1.bf16.msra.mxu0 0
        %3608 = vmatprep.subr.bf16.mxu0 0
        %3609 = vmatpush1.bf16.msra.mxu0 0
        %3610 = vmatprep.subr.bf16.mxu0 0
        %3611 = vmatpush1.bf16.msra.mxu0 0
        %3612 = vmatprep.subr.bf16.mxu0 0
        %3613 = vmatpush1.bf16.msra.mxu0 0
        %3614 = vmatprep.subr.bf16.mxu0 0
        %3615 = vmatpush1.bf16.msra.mxu0 0
        %3616 = vmatprep.subr.bf16.mxu0 0
        %3617 = vmatpush1.bf16.msra.mxu0 0
        %3618 = vmatprep.subr.bf16.mxu0 0
        %3619 = vmatpush1.bf16.msra.mxu0 0
        %3620 = vmatprep.subr.bf16.mxu0 0
        %3621 = vmatpush1.bf16.msra.mxu0 0
        %3622 = vmatprep.subr.bf16.mxu0 0
        %3623 = vmatpush1.bf16.msra.mxu0 0
        %3624 = vmatprep.subr.bf16.mxu0 0
        %3625 = vmatpush1.bf16.msra.mxu0 0
        %3626 = vmatprep.subr.bf16.mxu0 0
        %3627 = vmatpush1.bf16.msra.mxu0 0
        %3628 = vmatprep.subr.bf16.mxu0 0
        %3629 = vmatpush1.bf16.msra.mxu0 0
        %3630 = vmatprep.mubr.bf16.mxu0 0
        %3631 = vmatmul.mubr.bf16.gmra.mrb[0].mxu0 %v3575
        %v3632 = vpop.f32.mrb[0].mxu0
        %v3633 = vadd.f32 0.0, %v3632
        %v3634 = vpop.f32.mrb[0].mxu0
        %v3635 = vpop.f32.mrb[0].mxu0
        %v3636 = vadd.f32 0.0, %v3635
        %v3637 = vpop.f32.mrb[0].mxu0
        %3638 = vmatprep.mubr.bf16.mxu0 0
        %3639 = vmatmul.mubr.bf16.gmra.mrb[0].mxu0 %v3578
        %v3640 = vpop.f32.mrb[0].mxu0
        %v3641 = vadd.f32 0.0, %v3640
        %v3642 = vpop.f32.mrb[0].mxu0
        %v3643 = vpop.f32.mrb[0].mxu0
        %v3644 = vadd.f32 0.0, %v3643
        %v3645 = vpop.f32.mrb[0].mxu0
        %3646 = vmatprep.mubr.bf16.mxu0 0
        %3647 = vmatmul.mubr.bf16.gmra.mrb[0].mxu0 %v3581
        %v3648 = vpop.f32.mrb[0].mxu0
        %v3649 = vadd.f32 0.0, %v3648
        %v3650 = vpop.f32.mrb[0].mxu0
        %v3651 = vpop.f32.mrb[0].mxu0
        %v3652 = vadd.f32 0.0, %v3651
        %v3653 = vpop.f32.mrb[0].mxu0
        %3654 = vmatprep.mubr.bf16.mxu0 0
        %3655 = vmatmul.mubr.bf16.gmra.mrb[0].mxu0 %v3584
        %v3656 = vpop.f32.mrb[0].mxu0
        %v3657 = vadd.f32 0.0, %v3656
        %v3658 = vpop.f32.mrb[0].mxu0
        %v3659 = vpop.f32.mrb[0].mxu0
        %v3660 = vadd.f32 0.0, %v3659
        %v3661 = vpop.f32.mrb[0].mxu0
        %3662 = vmatprep.mubr.bf16.mxu0 0
        %3663 = vmatmul.mubr.bf16.gmra.mrb[0].mxu0 %v3587
        %v3664 = vpop.f32.mrb[0].mxu0
        %v3665 = vadd.f32 0.0, %v3664
        %v3666 = vpop.f32.mrb[0].mxu0
        %v3667 = vpop.f32.mrb[0].mxu0
        %v3668 = vadd.f32 0.0, %v3667
        %v3669 = vpop.f32.mrb[0].mxu0
        %3670 = vmatprep.mubr.bf16.mxu0 0
        %3671 = vmatmul.mubr.bf16.gmra.mrb[0].mxu0 %v3590
        %v3672 = vpop.f32.mrb[0].mxu0
        %v3673 = vadd.f32 0.0, %v3672
        %v3674 = vpop.f32.mrb[0].mxu0
        %v3675 = vpop.f32.mrb[0].mxu0
        %v3676 = vadd.f32 0.0, %v3675
        %v3677 = vpop.f32.mrb[0].mxu0
        %3678 = vmatprep.mubr.bf16.mxu0 0
        %3679 = vmatmul.mubr.bf16.gmra.mrb[0].mxu0 %v3593
        %v3680 = vpop.f32.mrb[0].mxu0
        %v3681 = vadd.f32 0.0, %v3680
        %v3682 = vpop.f32.mrb[0].mxu0
        %v3683 = vpop.f32.mrb[0].mxu0
        %v3684 = vadd.f32 0.0, %v3683
        %v3685 = vpop.f32.mrb[0].mxu0
        %3686 = vmatprep.mubr.bf16.mxu0 0
        %3687 = vmatmul.mubr.bf16.gmra.mrb[0].mxu0 %v3596
        %v3688 = vpop.f32.mrb[0].mxu0
        %v3689 = vadd.f32 0.0, %v3688
        %v3690 = vpop.f32.mrb[0].mxu0
        %v3691 = vpop.f32.mrb[0].mxu0
        %v3692 = vadd.f32 0.0, %v3691
        %v3693 = vpop.f32.mrb[0].mxu0
        %3694 = vdwg.mxu0
        %v3695 = vadd.f32 %v1474, %v3633
        %v3696 = vadd.f32 %v1475, %v3636
        %v3697 = vadd.f32 %v1476, %v3641
        %v3698 = vadd.f32 %v1477, %v3644
        %v3699 = vadd.f32 %v1478, %v3649
        %v3700 = vadd.f32 %v1479, %v3652
        %v3701 = vadd.f32 %v1480, %v3657
        %v3702 = vadd.f32 %v1481, %v3660
        %v3703 = vadd.f32 %v1482, %v3665
        %v3704 = vadd.f32 %v1483, %v3668
        %v3705 = vadd.f32 %v1484, %v3673
        %v3706 = vadd.f32 %v1485, %v3676
        %v3707 = vadd.f32 %v1486, %v3681
        %v3708 = vadd.f32 %v1487, %v3684
        %v3709 = vadd.f32 %v1488, %v3689
        %v3710 = vadd.f32 %v1489, %v3692
        %v3711 = vmax.f32 %v3695, 0.0
        %v3712 = vmax.f32 %v3696, 0.0
        %v3713 = vmax.f32 %v3697, 0.0
        %v3714 = vmax.f32 %v3698, 0.0
        %v3715 = vmax.f32 %v3699, 0.0
        %v3716 = vmax.f32 %v3700, 0.0
        %v3717 = vmax.f32 %v3701, 0.0
        %v3718 = vmax.f32 %v3702, 0.0
        %v3719 = vmax.f32 %v3703, 0.0
        %v3720 = vmax.f32 %v3704, 0.0
        %v3721 = vmax.f32 %v3705, 0.0
        %v3722 = vmax.f32 %v3706, 0.0
        %v3723 = vmax.f32 %v3707, 0.0
        %v3724 = vmax.f32 %v3708, 0.0
        %v3725 = vmax.f32 %v3709, 0.0
        %v3726 = vmax.f32 %v3710, 0.0
        %3727 = vst.msk [vmem:[%s918] sm:$0xff] %vm1979, %v3711
        %3728 = vst.msk [vmem:[%s918 + $0x8] sm:$0xff] %vm1979, %v3712
        %3729 = vst.msk [vmem:[%s918 + $0x10] sm:$0xff] %vm1979, %v3713
        %3730 = vst.msk [vmem:[%s918 + $0x18] sm:$0xff] %vm1979, %v3714
        %3731 = vst.msk [vmem:[%s918 + $0x20] sm:$0xff] %vm1979, %v3715
        %3732 = vst.msk [vmem:[%s918 + $0x28] sm:$0xff] %vm1979, %v3716
        %3733 = vst.msk [vmem:[%s918 + $0x30] sm:$0xff] %vm1979, %v3717
        %3734 = vst.msk [vmem:[%s918 + $0x38] sm:$0xff] %vm1979, %v3718
        %3735 = vst.msk [vmem:[%s918 + $0x40] sm:$0xff] %vm1979, %v3719
        %3736 = vst.msk [vmem:[%s918 + $0x48] sm:$0xff] %vm1979, %v3720
        %3737 = vst.msk [vmem:[%s918 + $0x50] sm:$0xff] %vm1979, %v3721
        %3738 = vst.msk [vmem:[%s918 + $0x58] sm:$0xff] %vm1979, %v3722
        %3739 = vst.msk [vmem:[%s918 + $0x60] sm:$0xff] %vm1979, %v3723
        %3740 = vst.msk [vmem:[%s918 + $0x68] sm:$0xff] %vm1979, %v3724
        %3741 = vst.msk [vmem:[%s918 + $0x70] sm:$0xff] %vm1979, %v3725
        %3742 = vst.msk [vmem:[%s918 + $0x78] sm:$0xff] %vm1979, %v3726
        %s3743 = sand.u32 %s456, 1
        %s3744 = scalar_lea.sflag [#allocation4], %s3743
        %s3745 = sand.u32 %s456, 1
        %s3746 = smul.addr %s3745, 128
        %s3747 = scalar_lea.vmem [#allocation26], %s3746
        // Predicated region
        $region141: #{resnext_up_forward.3} parent=79 // pred_check
          %p3748 = pneg %p466
        $region142: #{resnext_up_forward.3} parent=79 // pred_check_branch
          %3750 = sbr.rel (%p3748) target = $region144
        $region143: #{resnext_up_forward.3} parent=79 // pred_region
          %s3751 = smul.u32 8, %s50
          %s3753 = ssub.s32 2048, 2048
          %3754 = vsyncadd %s3744, %s3753
          %s3755 = smul.addr %s3751, 2
          %s3756 = smul.addr %s49, 32
          %s3757 = sadd.s32 %s3755, %s3756
          %s3758 = smul.addr %s3757, 128
          %s3759 = scalar_lea.hbm %s15, %s3758
          %s3760 = sshll.u32 %s3747, 4
          %s3761 = int_to_ptr.vmem [resolvable:$true] %s3760
          %3766 = dma.vmem_to_hbm [thread:$0]  %s3761, 2048, %s3759, %s3744, 128, 128, 8
        $region144: #{resnext_up_forward.3} parent=79 // pred_fallthru
          _
      $region80: #{resnext_up_forward.3} parent=5 // pred_fallthru
        _
      %p3767 = scmp.le.s32.totalorder 2, %s40
      // Predicated region
      $region145: #{resnext_up_forward.3} parent=5 // pred_check
        %p3768 = pneg %p3767
      $region146: #{resnext_up_forward.3} parent=5 // pred_check_branch
        %3770 = sbr.rel (%p3768) target = $region148
      $region147: #{resnext_up_forward.3} parent=5 // pred_region
        %s3771 = ssub.s32 %s40, 2
        // Predicated region
        $region149: #{resnext_up_forward.3} parent=147 // pred_check
          %p3772 = pneg %p472
        $region150: #{resnext_up_forward.3} parent=147 // pred_check_branch
          %3774 = sbr.rel (%p3772) target = $region152
        $region151: #{resnext_up_forward.3} parent=147 // pred_region
          %s3775 = sand.u32 %s457, 1
          %s3776 = scalar_lea.sflag [#allocation4], %s3775
          %s3777 = sand.u32 %s457, 1
          %s3778 = smul.addr %s3777, 128
          %s3779 = scalar_lea.vmem [#allocation26], %s3778
          %3780 = dma.done %s3776, 2048
        $region152: #{resnext_up_forward.3} parent=147 // pred_fallthru
          _
      $region148: #{resnext_up_forward.3} parent=5 // pred_fallthru
        _
    $region6: #{resnext_up_forward.3} parent=1 // loop_footer
      %s44 = sadd.s32 1, %s40
    $region7: #{resnext_up_forward.3} parent=1 // loop_footer_branch
      %39 = sbr.rel target = $region3
    $region8: #{resnext_up_forward.3} parent=1 // loop_exit
      _
    %3781 = vsyncpa [#allocation3], 1
    %s3782 = scalar_lea.sflag [#allocation3], 1
    %3783 = vsyncpa %s3782, 1
    %3784 = vsyncpa [#allocation6], 1
    %s3785 = scalar_lea.sflag [#allocation6], 1
    %3786 = vsyncpa %s3785, 1
    %3787 = vsyncpa [#allocation9], 1
    %s3788 = scalar_lea.sflag [#allocation9], 1
    %3789 = vsyncpa %s3788, 1
    %3790 = vsyncpa [#allocation12], 1
    %s3791 = scalar_lea.sflag [#allocation12], 1
    %3792 = vsyncpa %s3791, 1
    %3793 = vsyncpa [#allocation15], 1
    %3794 = vsyncpa [#allocation18], 1
    %3795 = vsyncpa [#allocation21], 1
    %3796 = vsyncpa [#allocation24], 1
    %3797 = vsyncpa [#allocation4], 1
    %s3798 = scalar_lea.sflag [#allocation4], 1
    %3799 = vsyncpa %s3798, 1

</llo_original>
